<compile_context>
chip_gen: v5e
topology: v5e:2x2
jax: 0.10.0
libtpu: 0.0.40
codegen_flags: <defaults>
</compile_context>

<pallas_src>
import jax
import jax.numpy as jnp
from jax.experimental import pallas as pl
from jax.experimental.pallas import tpu as pltpu

WORDVEC_DIM = 32          # in_channel
CNN_SIZE = 128            # cnn_size
CNN_FILTERS = (3, 3, 3)   # cnn_filters
CNN_POOLSIZE = 2          # cnn_poolsize
HIDDEN_LAYER_SIZE = 64    # hidden_layer_size
NUM_CLASSES = 8           # num_classes
SEQ_LEN = 90              # sequence length so that final conv length == 19
FINAL_LEN = 19            # conv-stack output length
BATCH = 2
OUT_PAD = 128             # lane-dense padded logits width (kernel store width)

# bf16 weight storage halves weight DMA; all accumulation stays f32.
# Set to jnp.float32 for exact f32-weight parity with the original module.
WEIGHT_DTYPE = jnp.bfloat16


# ----------------------------------------------------------------------------
# Fused Pallas kernel: whole forward pass for a block of `nb` batch elements.
# ----------------------------------------------------------------------------
def _fused_cnn_kernel(x_ref, w1_ref, b1_ref, w2_ref, b2_ref, w3_ref, b3_ref,
                      fw1_ref, fb1_ref, fw2_ref, fb2_ref, o_ref):
    """x_ref: (nb, C_in, L) in the module's native layout.

    Conv weights are pre-packed to im2col layout (k*C_in, C_out); fw1 has the
    PyTorch channel-major flatten folded in (rows ordered l*128 + c); fw2/fb2
    are zero-padded to 128 output lanes for a lane-dense store.
    """
    nb = x_ref.shape[0]
    f32 = jnp.float32

    # Upcast bf16-stored weights once (VPU); every dot below accumulates in f32.
    w1 = w1_ref[...].astype(f32)      # (3*32,  128)
    w2 = w2_ref[...].astype(f32)      # (3*128, 128)
    w3 = w3_ref[...].astype(f32)      # (3*128, 128)
    fw1 = fw1_ref[...].astype(f32)    # (19*128, 64)
    fw2 = fw2_ref[...].astype(f32)    # (64, 128)

    def conv_relu_pool(hs, w, b, k, pool):
        # hs: list of nb (L, C_in) activations.  One im2col matmul for the whole
        # batch: K = k*C_in, batch stacked along M so the MXU sees M = nb*L_use.
        l_use = ((hs[0].shape[0] - k + 1) // pool) * pool   # MaxPool1d floors
        patches = jnp.concatenate(
            [jnp.concatenate([h[j:j + l_use, :] for j in range(k)], axis=1)
             for h in hs], axis=0)                          # (nb*l_use, k*C_in)
        acc = jnp.dot(patches, w, preferred_element_type=f32)
        acc = jnp.maximum(acc + b, 0.0)                     # bias + ReLU
        if pool > 1:                                        # MaxPool1d(k=stride=pool)
            m, c = acc.shape
            acc = jnp.max(acc.reshape(m // pool, pool, c), axis=1)
        lp = l_use // pool
        return [acc[i * lp:(i + 1) * lp, :] for i in range(nb)]

    # conv1 input: transpose the tiny (nb, 32, 90) slab in-kernel (XLU) so the
    # host never runs a separate transpose op on the critical path.
    xt = jnp.transpose(x_ref[...], (0, 2, 1))               # (nb, L, C_in)
    hs = [xt[i] for i in range(nb)]

    hs = conv_relu_pool(hs, w1, b1_ref[...], CNN_FILTERS[0], CNN_POOLSIZE)  # (44,128)
    hs = conv_relu_pool(hs, w2, b2_ref[...], CNN_FILTERS[1], CNN_POOLSIZE)  # (21,128)
    hs = conv_relu_pool(hs, w3, b3_ref[...], CNN_FILTERS[2], 1)             # (19,128)
    # Dropout layers are identity in eval/inference mode; not applied.
    # TODO(synk): training-mode dropout (stochastic masking) is not implemented.

    # fc1: the channel-major flatten is folded into the pre-permuted fw1, so each
    # batch row is the 19 conv3 rows laid out along lanes; a single K=2432 matmul
    # (M = nb) replaces a 19x M=1 dot loop.
    hf = jnp.concatenate(
        [jnp.concatenate([h[l:l + 1, :] for l in range(h.shape[0])], axis=1)
         for h in hs], axis=0)                              # (nb, 2432)
    hid = jnp.maximum(
        jnp.dot(hf, fw1, preferred_element_type=f32) + fb1_ref[...], 0.0)   # (nb, 64)

    out = jnp.dot(hid, fw2, preferred_element_type=f32) + fb2_ref[...]      # (nb, 128)
    for i in range(nb):                                     # lane-dense store
        o_ref[i] = out[i:i + 1, :]


# ----------------------------------------------------------------------------
# One-time host-side parameter packing (hoisted off the per-call path)
# ----------------------------------------------------------------------------
def prepare_params(params, weight_dtype=WEIGHT_DTYPE):
    """Pack weights once:
      * conv weights (k, C_in, C_out) -> im2col layout (k*C_in, C_out)
      * fc1 weight: fold PyTorch's channel-major .view(N,-1) (rows reordered from
        c*19+l to l*128+c) and keep it 2D (2432, 64)
      * fc2 weight/bias zero-padded to 128 output lanes (lane-dense kernel store)
      * weights cast to `weight_dtype` (bf16 by default); biases stay f32.
    """
    wd = weight_dtype
    fw1f = params["fw1"].reshape(CNN_SIZE, FINAL_LEN, HIDDEN_LAYER_SIZE)
    fw1f = jnp.transpose(fw1f, (1, 0, 2)).reshape(FINAL_LEN * CNN_SIZE,
                                                  HIDDEN_LAYER_SIZE)
    fw2p = jnp.zeros((HIDDEN_LAYER_SIZE, OUT_PAD), jnp.float32)
    fw2p = fw2p.at[:, :NUM_CLASSES].set(params["fw2"])
    fb2p = jnp.zeros((1, OUT_PAD), jnp.float32)
    fb2p = fb2p.at[:, :NUM_CLASSES].set(params["fb2"])
    return {
        "w1": params["w1"].reshape(-1, CNN_SIZE).astype(wd),
        "b1": params["b1"],
        "w2": params["w2"].reshape(-1, CNN_SIZE).astype(wd),
        "b2": params["b2"],
        "w3": params["w3"].reshape(-1, CNN_SIZE).astype(wd),
        "b3": params["b3"],
        "fw1": fw1f.astype(wd),
        "fb1": params["fb1"],
        "fw2": fw2p.astype(wd),
        "fb2": fb2p,
    }


def pick_batch_block(n):
    """One batch element per TensorCore on multi-TC chips (v7x / megacore);
    a single fused grid step (whole batch stacked along M) on single-TC v5e/v6e."""
    try:
        kind = jax.devices()[0].device_kind.lower()
    except Exception:
        kind = ""
    multi_tc = any(tag in kind for tag in ("v7", "v4", "v5p"))
    if multi_tc and n % 2 == 0:
        return n // 2
    return n


# ----------------------------------------------------------------------------
# Wrapper
# ----------------------------------------------------------------------------
def cnn_forward(x_ncl, prep, *, batch_block=None):
    """x_ncl: (N, wordvec_dim, L) — same layout as the PyTorch forward input.
    `prep` is the output of prepare_params (computed once, outside this call)."""
    n, c_in, l_in = x_ncl.shape
    nb = n if batch_block is None else batch_block
    assert n % nb == 0

    names = ("w1", "b1", "w2", "b2", "w3", "b3", "fw1", "fb1", "fw2", "fb2")
    w_specs = [pl.BlockSpec(prep[k].shape, lambda i: (0, 0)) for k in names]

    # Advisory cost hint for XLA scheduling around this overhead-dominated call.
    k1, k2, k3 = CNN_FILTERS
    l1 = l_in - k1 + 1
    l2 = l1 // CNN_POOLSIZE - k2 + 1
    l3 = l2 // CNN_POOLSIZE - k3 + 1
    macs = (l1 * k1 * c_in * CNN_SIZE
            + l2 * k2 * CNN_SIZE * CNN_SIZE
            + l3 * k3 * CNN_SIZE * CNN_SIZE
            + l3 * CNN_SIZE * HIDDEN_LAYER_SIZE
            + HIDDEN_LAYER_SIZE * OUT_PAD)
    bytes_accessed = (x_ncl.size * x_ncl.dtype.itemsize
                      + sum(v.size * v.dtype.itemsize for v in prep.values())
                      + n * OUT_PAD * 4)

    out = pl.pallas_call(
        _fused_cnn_kernel,
        out_shape=jax.ShapeDtypeStruct((n, 1, OUT_PAD), jnp.float32),
        grid_spec=pltpu.PrefetchScalarGridSpec(
            num_scalar_prefetch=0,
            grid=(n // nb,),
            in_specs=[pl.BlockSpec((nb, c_in, l_in), lambda i: (i, 0, 0))] + w_specs,
            out_specs=pl.BlockSpec((nb, 1, OUT_PAD), lambda i: (i, 0, 0)),
        ),
        compiler_params=pltpu.CompilerParams(
            dimension_semantics=("parallel",)),
        cost_estimate=pl.CostEstimate(flops=2 * n * macs, transcendentals=0,
                                      bytes_accessed=int(bytes_accessed)),
    )(x_ncl, *(prep[k] for k in names))

    return out[:, 0, :NUM_CLASSES]


# ----------------------------------------------------------------------------
# Pure-JAX reference (mirrors the kernel's bf16 weight storage, f32 math)
# ----------------------------------------------------------------------------
def ref_forward(x_ncl, params, weight_dtype=None):
    wd = WEIGHT_DTYPE if weight_dtype is None else weight_dtype
    q = lambda w: w.astype(wd).astype(jnp.float32)   # same rounding as the kernel

    x = jnp.transpose(x_ncl, (0, 2, 1))

    def conv(x, w, b, pool):
        k = w.shape[0]
        l_out = x.shape[1] - k + 1
        acc = sum(jnp.einsum("nlc,cd->nld", x[:, j:j + l_out, :], q(w[j]))
                  for j in range(k))
        acc = jnp.maximum(acc + b[0], 0.0)
        if pool > 1:
            lp = l_out // pool
            acc = jnp.max(acc[:, :lp * pool].reshape(acc.shape[0], lp, pool, -1),
                          axis=2)
        return acc

    x = conv(x, params["w1"], params["b1"], CNN_POOLSIZE)
    x = conv(x, params["w2"], params["b2"], CNN_POOLSIZE)
    x = conv(x, params["w3"], params["b3"], 1)
    flat = jnp.transpose(x, (0, 2, 1)).reshape(x.shape[0], -1)   # channel-major .view
    h = jnp.maximum(flat @ q(params["fw1"]) + params["fb1"][0], 0.0)
    return h @ q(params["fw2"]) + params["fb2"][0]


# ----------------------------------------------------------------------------
# Deterministic synthetic parameters + driver
# ----------------------------------------------------------------------------
def make_params(key):
    ks = jax.random.split(key, 10)
    scale = 0.05

    def w_conv(k, c_in, c_out, kk):
        # stored as (k, C_in, C_out); PyTorch stores (C_out, C_in, k) — same math.
        return scale * jax.random.normal(kk, (k, c_in, c_out), jnp.float32)

    return {
        "w1": w_conv(CNN_FILTERS[0], WORDVEC_DIM, CNN_SIZE, ks[0]),
        "b1": scale * jax.random.normal(ks[1], (1, CNN_SIZE), jnp.float32),
        "w2": w_conv(CNN_FILTERS[1], CNN_SIZE, CNN_SIZE, ks[2]),
        "b2": scale * jax.random.normal(ks[3], (1, CNN_SIZE), jnp.float32),
        "w3": w_conv(CNN_FILTERS[2], CNN_SIZE, CNN_SIZE, ks[4]),
        "b3": scale * jax.random.normal(ks[5], (1, CNN_SIZE), jnp.float32),
        "fw1": scale * jax.random.normal(ks[6], (CNN_SIZE * FINAL_LEN,
                                                 HIDDEN_LAYER_SIZE), jnp.float32),
        "fb1": scale * jax.random.normal(ks[7], (1, HIDDEN_LAYER_SIZE), jnp.float32),
        "fw2": scale * jax.random.normal(ks[8], (HIDDEN_LAYER_SIZE, NUM_CLASSES),
                                         jnp.float32),
        "fb2": scale * jax.random.normal(ks[9], (1, NUM_CLASSES), jnp.float32),
    }


if __name__ == "__main__":
    root = jax.random.PRNGKey(0)
    k_params, k_x = jax.random.split(root)
    params = make_params(k_params)
    prep = prepare_params(params)            # one-time host-side weight packing

    # Same layout as the PyTorch module's forward input: (N, wordvec_dim, L)
    x = jax.random.normal(k_x, (BATCH, WORDVEC_DIM, SEQ_LEN), jnp.float32)

    nb = pick_batch_block(BATCH)
    fwd = jax.jit(lambda inp: cnn_forward(inp, prep, batch_block=nb))

    out = jax.block_until_ready(fwd(x))
    ref = jax.block_until_ready(ref_forward(x, params))

    assert out.shape == (BATCH, NUM_CLASSES), out.shape
    assert jnp.allclose(out, ref, atol=1e-3, rtol=1e-3), "mismatch vs JAX reference"

    print("KERNEL_OK")
</pallas_src>

<mosaic_0001>
module attributes {stable_mosaic.version = 11 : i64} {
  func.func @_fused_cnn_kernel(%arg0: i32, %arg1: memref<2x32x90xf32, #tpu.memory_space<vmem>>, %arg2: memref<96x128xbf16, #tpu.memory_space<vmem>>, %arg3: memref<1x128xf32, #tpu.memory_space<vmem>>, %arg4: memref<384x128xbf16, #tpu.memory_space<vmem>>, %arg5: memref<1x128xf32, #tpu.memory_space<vmem>>, %arg6: memref<384x128xbf16, #tpu.memory_space<vmem>>, %arg7: memref<1x128xf32, #tpu.memory_space<vmem>>, %arg8: memref<2432x64xbf16, #tpu.memory_space<vmem>>, %arg9: memref<1x64xf32, #tpu.memory_space<vmem>>, %arg10: memref<64x128xbf16, #tpu.memory_space<vmem>>, %arg11: memref<1x128xf32, #tpu.memory_space<vmem>>, %arg12: memref<2x1x128xf32, #tpu.memory_space<vmem>>) attributes {dimension_semantics = [#tpu.dimension_semantics<parallel>], iteration_bounds = array<i64: 1>, scalar_prefetch = 0 : i64, scratch_operands = 0 : i64, tpu.core_type = #tpu.core_type<tc>, window_params = [{transform_indices = @transform_0, window_bounds = array<i64: 2, 32, 90>}, {pipeline_mode = #tpu.pipeline_mode<synchronous>, transform_indices = @transform_1, window_bounds = array<i64: 96, 128>}, {pipeline_mode = #tpu.pipeline_mode<synchronous>, transform_indices = @transform_2, window_bounds = array<i64: 1, 128>}, {pipeline_mode = #tpu.pipeline_mode<synchronous>, transform_indices = @transform_3, window_bounds = array<i64: 384, 128>}, {pipeline_mode = #tpu.pipeline_mode<synchronous>, transform_indices = @transform_4, window_bounds = array<i64: 1, 128>}, {pipeline_mode = #tpu.pipeline_mode<synchronous>, transform_indices = @transform_5, window_bounds = array<i64: 384, 128>}, {pipeline_mode = #tpu.pipeline_mode<synchronous>, transform_indices = @transform_6, window_bounds = array<i64: 1, 128>}, {pipeline_mode = #tpu.pipeline_mode<synchronous>, transform_indices = @transform_7, window_bounds = array<i64: 2432, 64>}, {pipeline_mode = #tpu.pipeline_mode<synchronous>, transform_indices = @transform_8, window_bounds = array<i64: 1, 64>}, {pipeline_mode = #tpu.pipeline_mode<synchronous>, transform_indices = @transform_9, window_bounds = array<i64: 64, 128>}, {pipeline_mode = #tpu.pipeline_mode<synchronous>, transform_indices = @transform_10, window_bounds = array<i64: 1, 128>}, {transform_indices = @transform_11, window_bounds = array<i64: 2, 1, 128>}]} {
    %c0 = arith.constant 0 : index
    %c0_0 = arith.constant 0 : index
    %0 = vector.load %arg2[%c0, %c0_0] : memref<96x128xbf16, #tpu.memory_space<vmem>>, vector<96x128xbf16>
    %1 = arith.extf %0 : vector<96x128xbf16> to vector<96x128xf32>
    %c0_1 = arith.constant 0 : index
    %c0_2 = arith.constant 0 : index
    %2 = vector.load %arg4[%c0_1, %c0_2] : memref<384x128xbf16, #tpu.memory_space<vmem>>, vector<384x128xbf16>
    %3 = arith.extf %2 : vector<384x128xbf16> to vector<384x128xf32>
    %c0_3 = arith.constant 0 : index
    %c0_4 = arith.constant 0 : index
    %4 = vector.load %arg6[%c0_3, %c0_4] : memref<384x128xbf16, #tpu.memory_space<vmem>>, vector<384x128xbf16>
    %5 = arith.extf %4 : vector<384x128xbf16> to vector<384x128xf32>
    %c0_5 = arith.constant 0 : index
    %c0_6 = arith.constant 0 : index
    %6 = vector.load %arg8[%c0_5, %c0_6] : memref<2432x64xbf16, #tpu.memory_space<vmem>>, vector<2432x64xbf16>
    %7 = arith.extf %6 : vector<2432x64xbf16> to vector<2432x64xf32>
    %c0_7 = arith.constant 0 : index
    %c0_8 = arith.constant 0 : index
    %8 = vector.load %arg10[%c0_7, %c0_8] : memref<64x128xbf16, #tpu.memory_space<vmem>>, vector<64x128xbf16>
    %9 = arith.extf %8 : vector<64x128xbf16> to vector<64x128xf32>
    %c0_9 = arith.constant 0 : index
    %c0_10 = arith.constant 0 : index
    %c0_11 = arith.constant 0 : index
    %10 = vector.load %arg1[%c0_9, %c0_10, %c0_11] : memref<2x32x90xf32, #tpu.memory_space<vmem>>, vector<2x32x90xf32>
    %11 = tpu.transpose %10, [0, 2, 1] : vector<2x32x90xf32> -> vector<2x90x32xf32>
    %12 = vector.extract_strided_slice %11 {offsets = [0, 0, 0], sizes = [1, 90, 32], strides = [1, 1, 1]} : vector<2x90x32xf32> to vector<1x90x32xf32>
    %13 = vector.shape_cast %12 : vector<1x90x32xf32> to vector<90x32xf32>
    %14 = vector.extract_strided_slice %11 {offsets = [1, 0, 0], sizes = [1, 90, 32], strides = [1, 1, 1]} : vector<2x90x32xf32> to vector<1x90x32xf32>
    %15 = vector.shape_cast %14 : vector<1x90x32xf32> to vector<90x32xf32>
    %c0_12 = arith.constant 0 : index
    %c0_13 = arith.constant 0 : index
    %16 = vector.load %arg3[%c0_12, %c0_13] : memref<1x128xf32, #tpu.memory_space<vmem>>, vector<1x128xf32>
    %17 = vector.extract_strided_slice %13 {offsets = [0, 0], sizes = [88, 32], strides = [1, 1]} : vector<90x32xf32> to vector<88x32xf32>
    %18 = vector.extract_strided_slice %13 {offsets = [1, 0], sizes = [88, 32], strides = [1, 1]} : vector<90x32xf32> to vector<88x32xf32>
    %19 = vector.extract_strided_slice %13 {offsets = [2, 0], sizes = [88, 32], strides = [1, 1]} : vector<90x32xf32> to vector<88x32xf32>
    %20 = tpu.concatenate %17, %18, %19 in 1 : vector<88x32xf32>, vector<88x32xf32>, vector<88x32xf32> -> vector<88x96xf32>
    %21 = vector.extract_strided_slice %15 {offsets = [0, 0], sizes = [88, 32], strides = [1, 1]} : vector<90x32xf32> to vector<88x32xf32>
    %22 = vector.extract_strided_slice %15 {offsets = [1, 0], sizes = [88, 32], strides = [1, 1]} : vector<90x32xf32> to vector<88x32xf32>
    %23 = vector.extract_strided_slice %15 {offsets = [2, 0], sizes = [88, 32], strides = [1, 1]} : vector<90x32xf32> to vector<88x32xf32>
    %24 = tpu.concatenate %21, %22, %23 in 1 : vector<88x32xf32>, vector<88x32xf32>, vector<88x32xf32> -> vector<88x96xf32>
    %25 = tpu.concatenate %20, %24 in 0 : vector<88x96xf32>, vector<88x96xf32> -> vector<176x96xf32>
    %cst = arith.constant dense<0.000000e+00> : vector<176x128xf32>
    %26 = tpu.matmul %25, %1, %cst {dimension_numbers = #tpu.dot_dimension_numbers<[1], [0], [0], [1], [0, 0, 1, 1], [], []>} : vector<176x96xf32>, vector<96x128xf32>, vector<176x128xf32> -> vector<176x128xf32>
    %27 = vector.broadcast %16 : vector<1x128xf32> to vector<176x128xf32>
    %28 = arith.addf %26, %27 : vector<176x128xf32>
    %cst_14 = arith.constant 0.000000e+00 : f32
    %29 = vector.broadcast %cst_14 : f32 to vector<176x128xf32>
    %30 = arith.maximumf %28, %29 : vector<176x128xf32>
    %31 = vector.shape_cast %30 : vector<176x128xf32> to vector<88x2x128xf32>
    %cst_15 = arith.constant dense<0xFF800000> : vector<88x128xf32>
    %32 = vector.multi_reduction <maximumf>, %31, %cst_15 [1] : vector<88x2x128xf32> to vector<88x128xf32>
    %33 = vector.extract_strided_slice %32 {offsets = [0, 0], sizes = [44, 128], strides = [1, 1]} : vector<88x128xf32> to vector<44x128xf32>
    %34 = vector.extract_strided_slice %32 {offsets = [44, 0], sizes = [44, 128], strides = [1, 1]} : vector<88x128xf32> to vector<44x128xf32>
    %c0_16 = arith.constant 0 : index
    %c0_17 = arith.constant 0 : index
    %35 = vector.load %arg5[%c0_16, %c0_17] : memref<1x128xf32, #tpu.memory_space<vmem>>, vector<1x128xf32>
    %36 = vector.extract_strided_slice %33 {offsets = [0, 0], sizes = [42, 128], strides = [1, 1]} : vector<44x128xf32> to vector<42x128xf32>
    %37 = vector.extract_strided_slice %33 {offsets = [1, 0], sizes = [42, 128], strides = [1, 1]} : vector<44x128xf32> to vector<42x128xf32>
    %38 = vector.extract_strided_slice %33 {offsets = [2, 0], sizes = [42, 128], strides = [1, 1]} : vector<44x128xf32> to vector<42x128xf32>
    %39 = tpu.concatenate %36, %37, %38 in 1 : vector<42x128xf32>, vector<42x128xf32>, vector<42x128xf32> -> vector<42x384xf32>
    %40 = vector.extract_strided_slice %34 {offsets = [0, 0], sizes = [42, 128], strides = [1, 1]} : vector<44x128xf32> to vector<42x128xf32>
    %41 = vector.extract_strided_slice %34 {offsets = [1, 0], sizes = [42, 128], strides = [1, 1]} : vector<44x128xf32> to vector<42x128xf32>
    %42 = vector.extract_strided_slice %34 {offsets = [2, 0], sizes = [42, 128], strides = [1, 1]} : vector<44x128xf32> to vector<42x128xf32>
    %43 = tpu.concatenate %40, %41, %42 in 1 : vector<42x128xf32>, vector<42x128xf32>, vector<42x128xf32> -> vector<42x384xf32>
    %44 = tpu.concatenate %39, %43 in 0 : vector<42x384xf32>, vector<42x384xf32> -> vector<84x384xf32>
    %cst_18 = arith.constant dense<0.000000e+00> : vector<84x128xf32>
    %45 = tpu.matmul %44, %3, %cst_18 {dimension_numbers = #tpu.dot_dimension_numbers<[1], [0], [0], [1], [0, 0, 1, 1], [], []>} : vector<84x384xf32>, vector<384x128xf32>, vector<84x128xf32> -> vector<84x128xf32>
    %46 = vector.broadcast %35 : vector<1x128xf32> to vector<84x128xf32>
    %47 = arith.addf %45, %46 : vector<84x128xf32>
    %cst_19 = arith.constant 0.000000e+00 : f32
    %48 = vector.broadcast %cst_19 : f32 to vector<84x128xf32>
    %49 = arith.maximumf %47, %48 : vector<84x128xf32>
    %50 = vector.shape_cast %49 : vector<84x128xf32> to vector<42x2x128xf32>
    %cst_20 = arith.constant dense<0xFF800000> : vector<42x128xf32>
    %51 = vector.multi_reduction <maximumf>, %50, %cst_20 [1] : vector<42x2x128xf32> to vector<42x128xf32>
    %52 = vector.extract_strided_slice %51 {offsets = [0, 0], sizes = [21, 128], strides = [1, 1]} : vector<42x128xf32> to vector<21x128xf32>
    %53 = vector.extract_strided_slice %51 {offsets = [21, 0], sizes = [21, 128], strides = [1, 1]} : vector<42x128xf32> to vector<21x128xf32>
    %c0_21 = arith.constant 0 : index
    %c0_22 = arith.constant 0 : index
    %54 = vector.load %arg7[%c0_21, %c0_22] : memref<1x128xf32, #tpu.memory_space<vmem>>, vector<1x128xf32>
    %55 = vector.extract_strided_slice %52 {offsets = [0, 0], sizes = [19, 128], strides = [1, 1]} : vector<21x128xf32> to vector<19x128xf32>
    %56 = vector.extract_strided_slice %52 {offsets = [1, 0], sizes = [19, 128], strides = [1, 1]} : vector<21x128xf32> to vector<19x128xf32>
    %57 = vector.extract_strided_slice %52 {offsets = [2, 0], sizes = [19, 128], strides = [1, 1]} : vector<21x128xf32> to vector<19x128xf32>
    %58 = tpu.concatenate %55, %56, %57 in 1 : vector<19x128xf32>, vector<19x128xf32>, vector<19x128xf32> -> vector<19x384xf32>
    %59 = vector.extract_strided_slice %53 {offsets = [0, 0], sizes = [19, 128], strides = [1, 1]} : vector<21x128xf32> to vector<19x128xf32>
    %60 = vector.extract_strided_slice %53 {offsets = [1, 0], sizes = [19, 128], strides = [1, 1]} : vector<21x128xf32> to vector<19x128xf32>
    %61 = vector.extract_strided_slice %53 {offsets = [2, 0], sizes = [19, 128], strides = [1, 1]} : vector<21x128xf32> to vector<19x128xf32>
    %62 = tpu.concatenate %59, %60, %61 in 1 : vector<19x128xf32>, vector<19x128xf32>, vector<19x128xf32> -> vector<19x384xf32>
    %63 = tpu.concatenate %58, %62 in 0 : vector<19x384xf32>, vector<19x384xf32> -> vector<38x384xf32>
    %cst_23 = arith.constant dense<0.000000e+00> : vector<38x128xf32>
    %64 = tpu.matmul %63, %5, %cst_23 {dimension_numbers = #tpu.dot_dimension_numbers<[1], [0], [0], [1], [0, 0, 1, 1], [], []>} : vector<38x384xf32>, vector<384x128xf32>, vector<38x128xf32> -> vector<38x128xf32>
    %65 = vector.broadcast %54 : vector<1x128xf32> to vector<38x128xf32>
    %66 = arith.addf %64, %65 : vector<38x128xf32>
    %cst_24 = arith.constant 0.000000e+00 : f32
    %67 = vector.broadcast %cst_24 : f32 to vector<38x128xf32>
    %68 = arith.maximumf %66, %67 : vector<38x128xf32>
    %69 = vector.extract_strided_slice %68 {offsets = [0, 0], sizes = [19, 128], strides = [1, 1]} : vector<38x128xf32> to vector<19x128xf32>
    %70 = vector.extract_strided_slice %68 {offsets = [19, 0], sizes = [19, 128], strides = [1, 1]} : vector<38x128xf32> to vector<19x128xf32>
    %71 = vector.extract_strided_slice %69 {offsets = [0, 0], sizes = [1, 128], strides = [1, 1]} : vector<19x128xf32> to vector<1x128xf32>
    %72 = vector.extract_strided_slice %69 {offsets = [1, 0], sizes = [1, 128], strides = [1, 1]} : vector<19x128xf32> to vector<1x128xf32>
    %73 = vector.extract_strided_slice %69 {offsets = [2, 0], sizes = [1, 128], strides = [1, 1]} : vector<19x128xf32> to vector<1x128xf32>
    %74 = vector.extract_strided_slice %69 {offsets = [3, 0], sizes = [1, 128], strides = [1, 1]} : vector<19x128xf32> to vector<1x128xf32>
    %75 = vector.extract_strided_slice %69 {offsets = [4, 0], sizes = [1, 128], strides = [1, 1]} : vector<19x128xf32> to vector<1x128xf32>
    %76 = vector.extract_strided_slice %69 {offsets = [5, 0], sizes = [1, 128], strides = [1, 1]} : vector<19x128xf32> to vector<1x128xf32>
    %77 = vector.extract_strided_slice %69 {offsets = [6, 0], sizes = [1, 128], strides = [1, 1]} : vector<19x128xf32> to vector<1x128xf32>
    %78 = vector.extract_strided_slice %69 {offsets = [7, 0], sizes = [1, 128], strides = [1, 1]} : vector<19x128xf32> to vector<1x128xf32>
    %79 = vector.extract_strided_slice %69 {offsets = [8, 0], sizes = [1, 128], strides = [1, 1]} : vector<19x128xf32> to vector<1x128xf32>
    %80 = vector.extract_strided_slice %69 {offsets = [9, 0], sizes = [1, 128], strides = [1, 1]} : vector<19x128xf32> to vector<1x128xf32>
    %81 = vector.extract_strided_slice %69 {offsets = [10, 0], sizes = [1, 128], strides = [1, 1]} : vector<19x128xf32> to vector<1x128xf32>
    %82 = vector.extract_strided_slice %69 {offsets = [11, 0], sizes = [1, 128], strides = [1, 1]} : vector<19x128xf32> to vector<1x128xf32>
    %83 = vector.extract_strided_slice %69 {offsets = [12, 0], sizes = [1, 128], strides = [1, 1]} : vector<19x128xf32> to vector<1x128xf32>
    %84 = vector.extract_strided_slice %69 {offsets = [13, 0], sizes = [1, 128], strides = [1, 1]} : vector<19x128xf32> to vector<1x128xf32>
    %85 = vector.extract_strided_slice %69 {offsets = [14, 0], sizes = [1, 128], strides = [1, 1]} : vector<19x128xf32> to vector<1x128xf32>
    %86 = vector.extract_strided_slice %69 {offsets = [15, 0], sizes = [1, 128], strides = [1, 1]} : vector<19x128xf32> to vector<1x128xf32>
    %87 = vector.extract_strided_slice %69 {offsets = [16, 0], sizes = [1, 128], strides = [1, 1]} : vector<19x128xf32> to vector<1x128xf32>
    %88 = vector.extract_strided_slice %69 {offsets = [17, 0], sizes = [1, 128], strides = [1, 1]} : vector<19x128xf32> to vector<1x128xf32>
    %89 = vector.extract_strided_slice %69 {offsets = [18, 0], sizes = [1, 128], strides = [1, 1]} : vector<19x128xf32> to vector<1x128xf32>
    %90 = tpu.concatenate %71, %72, %73, %74, %75, %76, %77, %78, %79, %80, %81, %82, %83, %84, %85, %86 in 1 : vector<1x128xf32>, vector<1x128xf32>, vector<1x128xf32>, vector<1x128xf32>, vector<1x128xf32>, vector<1x128xf32>, vector<1x128xf32>, vector<1x128xf32>, vector<1x128xf32>, vector<1x128xf32>, vector<1x128xf32>, vector<1x128xf32>, vector<1x128xf32>, vector<1x128xf32>, vector<1x128xf32>, vector<1x128xf32> -> vector<1x2048xf32>
    %91 = tpu.concatenate %87, %88, %89 in 1 : vector<1x128xf32>, vector<1x128xf32>, vector<1x128xf32> -> vector<1x384xf32>
    %92 = tpu.concatenate %90, %91 in 1 : vector<1x2048xf32>, vector<1x384xf32> -> vector<1x2432xf32>
    %93 = vector.extract_strided_slice %70 {offsets = [0, 0], sizes = [1, 128], strides = [1, 1]} : vector<19x128xf32> to vector<1x128xf32>
    %94 = vector.extract_strided_slice %70 {offsets = [1, 0], sizes = [1, 128], strides = [1, 1]} : vector<19x128xf32> to vector<1x128xf32>
    %95 = vector.extract_strided_slice %70 {offsets = [2, 0], sizes = [1, 128], strides = [1, 1]} : vector<19x128xf32> to vector<1x128xf32>
    %96 = vector.extract_strided_slice %70 {offsets = [3, 0], sizes = [1, 128], strides = [1, 1]} : vector<19x128xf32> to vector<1x128xf32>
    %97 = vector.extract_strided_slice %70 {offsets = [4, 0], sizes = [1, 128], strides = [1, 1]} : vector<19x128xf32> to vector<1x128xf32>
    %98 = vector.extract_strided_slice %70 {offsets = [5, 0], sizes = [1, 128], strides = [1, 1]} : vector<19x128xf32> to vector<1x128xf32>
    %99 = vector.extract_strided_slice %70 {offsets = [6, 0], sizes = [1, 128], strides = [1, 1]} : vector<19x128xf32> to vector<1x128xf32>
    %100 = vector.extract_strided_slice %70 {offsets = [7, 0], sizes = [1, 128], strides = [1, 1]} : vector<19x128xf32> to vector<1x128xf32>
    %101 = vector.extract_strided_slice %70 {offsets = [8, 0], sizes = [1, 128], strides = [1, 1]} : vector<19x128xf32> to vector<1x128xf32>
    %102 = vector.extract_strided_slice %70 {offsets = [9, 0], sizes = [1, 128], strides = [1, 1]} : vector<19x128xf32> to vector<1x128xf32>
    %103 = vector.extract_strided_slice %70 {offsets = [10, 0], sizes = [1, 128], strides = [1, 1]} : vector<19x128xf32> to vector<1x128xf32>
    %104 = vector.extract_strided_slice %70 {offsets = [11, 0], sizes = [1, 128], strides = [1, 1]} : vector<19x128xf32> to vector<1x128xf32>
    %105 = vector.extract_strided_slice %70 {offsets = [12, 0], sizes = [1, 128], strides = [1, 1]} : vector<19x128xf32> to vector<1x128xf32>
    %106 = vector.extract_strided_slice %70 {offsets = [13, 0], sizes = [1, 128], strides = [1, 1]} : vector<19x128xf32> to vector<1x128xf32>
    %107 = vector.extract_strided_slice %70 {offsets = [14, 0], sizes = [1, 128], strides = [1, 1]} : vector<19x128xf32> to vector<1x128xf32>
    %108 = vector.extract_strided_slice %70 {offsets = [15, 0], sizes = [1, 128], strides = [1, 1]} : vector<19x128xf32> to vector<1x128xf32>
    %109 = vector.extract_strided_slice %70 {offsets = [16, 0], sizes = [1, 128], strides = [1, 1]} : vector<19x128xf32> to vector<1x128xf32>
    %110 = vector.extract_strided_slice %70 {offsets = [17, 0], sizes = [1, 128], strides = [1, 1]} : vector<19x128xf32> to vector<1x128xf32>
    %111 = vector.extract_strided_slice %70 {offsets = [18, 0], sizes = [1, 128], strides = [1, 1]} : vector<19x128xf32> to vector<1x128xf32>
    %112 = tpu.concatenate %93, %94, %95, %96, %97, %98, %99, %100, %101, %102, %103, %104, %105, %106, %107, %108 in 1 : vector<1x128xf32>, vector<1x128xf32>, vector<1x128xf32>, vector<1x128xf32>, vector<1x128xf32>, vector<1x128xf32>, vector<1x128xf32>, vector<1x128xf32>, vector<1x128xf32>, vector<1x128xf32>, vector<1x128xf32>, vector<1x128xf32>, vector<1x128xf32>, vector<1x128xf32>, vector<1x128xf32>, vector<1x128xf32> -> vector<1x2048xf32>
    %113 = tpu.concatenate %109, %110, %111 in 1 : vector<1x128xf32>, vector<1x128xf32>, vector<1x128xf32> -> vector<1x384xf32>
    %114 = tpu.concatenate %112, %113 in 1 : vector<1x2048xf32>, vector<1x384xf32> -> vector<1x2432xf32>
    %115 = tpu.concatenate %92, %114 in 0 : vector<1x2432xf32>, vector<1x2432xf32> -> vector<2x2432xf32>
    %cst_25 = arith.constant dense<0.000000e+00> : vector<2x64xf32>
    %116 = tpu.matmul %115, %7, %cst_25 {dimension_numbers = #tpu.dot_dimension_numbers<[1], [0], [0], [1], [0, 0, 1, 1], [], []>} : vector<2x2432xf32>, vector<2432x64xf32>, vector<2x64xf32> -> vector<2x64xf32>
    %c0_26 = arith.constant 0 : index
    %c0_27 = arith.constant 0 : index
    %117 = vector.load %arg9[%c0_26, %c0_27] : memref<1x64xf32, #tpu.memory_space<vmem>>, vector<1x64xf32>
    %118 = vector.broadcast %117 : vector<1x64xf32> to vector<2x64xf32>
    %119 = arith.addf %116, %118 : vector<2x64xf32>
    %cst_28 = arith.constant 0.000000e+00 : f32
    %120 = vector.broadcast %cst_28 : f32 to vector<2x64xf32>
    %121 = arith.maximumf %119, %120 : vector<2x64xf32>
    %cst_29 = arith.constant dense<0.000000e+00> : vector<2x128xf32>
    %122 = tpu.matmul %121, %9, %cst_29 {dimension_numbers = #tpu.dot_dimension_numbers<[1], [0], [0], [1], [0, 0, 1, 1], [], []>} : vector<2x64xf32>, vector<64x128xf32>, vector<2x128xf32> -> vector<2x128xf32>
    %c0_30 = arith.constant 0 : index
    %c0_31 = arith.constant 0 : index
    %123 = vector.load %arg11[%c0_30, %c0_31] : memref<1x128xf32, #tpu.memory_space<vmem>>, vector<1x128xf32>
    %124 = vector.broadcast %123 : vector<1x128xf32> to vector<2x128xf32>
    %125 = arith.addf %122, %124 : vector<2x128xf32>
    %126 = vector.extract_strided_slice %125 {offsets = [0, 0], sizes = [1, 128], strides = [1, 1]} : vector<2x128xf32> to vector<1x128xf32>
    %c0_32 = arith.constant 0 : index
    %c0_33 = arith.constant 0 : index
    %c0_34 = arith.constant 0 : index
    %127 = vector.load %arg12[%c0_32, %c0_33, %c0_34] : memref<2x1x128xf32, #tpu.memory_space<vmem>>, vector<1x1x128xf32>
    %128 = vector.shape_cast %127 : vector<1x1x128xf32> to vector<1x128xf32>
    %129 = vector.shape_cast %126 : vector<1x128xf32> to vector<1x1x128xf32>
    tpu.vector_store %arg12[%c0_32, %c0_33, %c0_34], %129 {strides = array<i32>} : memref<2x1x128xf32, #tpu.memory_space<vmem>>, vector<1x1x128xf32>,
    %130 = vector.extract_strided_slice %125 {offsets = [1, 0], sizes = [1, 128], strides = [1, 1]} : vector<2x128xf32> to vector<1x128xf32>
    %c1 = arith.constant 1 : index
    %c0_35 = arith.constant 0 : index
    %c0_36 = arith.constant 0 : index
    %131 = vector.load %arg12[%c1, %c0_35, %c0_36] : memref<2x1x128xf32, #tpu.memory_space<vmem>>, vector<1x1x128xf32>
    %132 = vector.shape_cast %131 : vector<1x1x128xf32> to vector<1x128xf32>
    %133 = vector.shape_cast %130 : vector<1x128xf32> to vector<1x1x128xf32>
    tpu.vector_store %arg12[%c1, %c0_35, %c0_36], %133 {strides = array<i32>} : memref<2x1x128xf32, #tpu.memory_space<vmem>>, vector<1x1x128xf32>,
    return
  }
  func.func @transform_0(%arg0: i32) -> (i32, i32, i32) {
    %c0_i32 = arith.constant 0 : i32
    %c0_i32_0 = arith.constant 0 : i32
    %c0_i32_1 = arith.constant 0 : i32
    return %arg0, %c0_i32, %c0_i32_0 : i32, i32, i32
  }
  func.func @transform_1(%arg0: i32) -> (i32, i32) {
    %c0_i32 = arith.constant 0 : i32
    %c0_i32_0 = arith.constant 0 : i32
    %c0_i32_1 = arith.constant 0 : i32
    return %c0_i32, %c0_i32_0 : i32, i32
  }
  func.func @transform_2(%arg0: i32) -> (i32, i32) {
    %c0_i32 = arith.constant 0 : i32
    %c0_i32_0 = arith.constant 0 : i32
    %c0_i32_1 = arith.constant 0 : i32
    return %c0_i32, %c0_i32_0 : i32, i32
  }
  func.func @transform_3(%arg0: i32) -> (i32, i32) {
    %c0_i32 = arith.constant 0 : i32
    %c0_i32_0 = arith.constant 0 : i32
    %c0_i32_1 = arith.constant 0 : i32
    return %c0_i32, %c0_i32_0 : i32, i32
  }
  func.func @transform_4(%arg0: i32) -> (i32, i32) {
    %c0_i32 = arith.constant 0 : i32
    %c0_i32_0 = arith.constant 0 : i32
    %c0_i32_1 = arith.constant 0 : i32
    return %c0_i32, %c0_i32_0 : i32, i32
  }
  func.func @transform_5(%arg0: i32) -> (i32, i32) {
    %c0_i32 = arith.constant 0 : i32
    %c0_i32_0 = arith.constant 0 : i32
    %c0_i32_1 = arith.constant 0 : i32
    return %c0_i32, %c0_i32_0 : i32, i32
  }
  func.func @transform_6(%arg0: i32) -> (i32, i32) {
    %c0_i32 = arith.constant 0 : i32
    %c0_i32_0 = arith.constant 0 : i32
    %c0_i32_1 = arith.constant 0 : i32
    return %c0_i32, %c0_i32_0 : i32, i32
  }
  func.func @transform_7(%arg0: i32) -> (i32, i32) {
    %c0_i32 = arith.constant 0 : i32
    %c0_i32_0 = arith.constant 0 : i32
    %c0_i32_1 = arith.constant 0 : i32
    return %c0_i32, %c0_i32_0 : i32, i32
  }
  func.func @transform_8(%arg0: i32) -> (i32, i32) {
    %c0_i32 = arith.constant 0 : i32
    %c0_i32_0 = arith.constant 0 : i32
    %c0_i32_1 = arith.constant 0 : i32
    return %c0_i32, %c0_i32_0 : i32, i32
  }
  func.func @transform_9(%arg0: i32) -> (i32, i32) {
    %c0_i32 = arith.constant 0 : i32
    %c0_i32_0 = arith.constant 0 : i32
    %c0_i32_1 = arith.constant 0 : i32
    return %c0_i32, %c0_i32_0 : i32, i32
  }
  func.func @transform_10(%arg0: i32) -> (i32, i32) {
    %c0_i32 = arith.constant 0 : i32
    %c0_i32_0 = arith.constant 0 : i32
    %c0_i32_1 = arith.constant 0 : i32
    return %c0_i32, %c0_i32_0 : i32, i32
  }
  func.func @transform_11(%arg0: i32) -> (i32, i32, i32) {
    %c0_i32 = arith.constant 0 : i32
    %c0_i32_0 = arith.constant 0 : i32
    %c0_i32_1 = arith.constant 0 : i32
    return %arg0, %c0_i32, %c0_i32_0 : i32, i32, i32
  }
}

</mosaic_0001>

<llo_original>
// kernel: _lambda_.1
$region0: #{_lambda_.1}
  #allocation0 [shape = 'u32[]', space=smem, size = 0x4, offset = 0x4, fixed_abs, tag = 'smem constant byte address 0x4 - core index']
  #allocation1 [shape = 'u32[72,128]{1,0:T(1,128)}', space=vmem, size = 0x9000, scoped, tag = 'internal scratch']
  %s0 = inlined_call_operand.hbm [shape: f32[2,32,90], index: 0, kind: input, shape index: {}]
  %s1 = inlined_call_operand.hbm [shape: bf16[96,128], index: 1, kind: input, shape index: {}]
  %s2 = inlined_call_operand.hbm [shape: f32[1,128], index: 2, kind: input, shape index: {}]
  %s3 = inlined_call_operand.hbm [shape: bf16[384,128], index: 3, kind: input, shape index: {}]
  %s4 = inlined_call_operand.hbm [shape: f32[1,128], index: 4, kind: input, shape index: {}]
  %s5 = inlined_call_operand.hbm [shape: bf16[384,128], index: 5, kind: input, shape index: {}]
  %s6 = inlined_call_operand.vmem [shape: f32[1,128], index: 6, kind: input, shape index: {}]
  %s7 = inlined_call_operand.hbm [shape: bf16[2432,64], index: 7, kind: input, shape index: {}]
  %s8 = inlined_call_operand.vmem [shape: f32[1,64], index: 8, kind: input, shape index: {}]
  %s9 = inlined_call_operand.hbm [shape: bf16[64,128], index: 9, kind: input, shape index: {}]
  %s10 = inlined_call_operand.vmem [shape: f32[1,128], index: 10, kind: input, shape index: {}]
  %s11 = inlined_call_operand.hbm [shape: f32[2,1,128], index: 11, kind: output, shape index: {}]
  %s12 = sld [smem:[#allocation0]]
  $region86: #{_lambda_.1} parent=0
    _
  %s14 = ssub.s32 1, %s12
  %s15 = scalar_select 0, %s14, %s12
  $region1: #{_lambda_.1} parent=0
    #allocation2 [shape = 'u8[32768]{0}', space=vmem, size = 0x8000, scoped, tag = 'input window, operand 0, single buffered']
    #allocation3 [shape = 's32[1]{0}', space=sflag, size = 0x4, scoped, tag = 'scoped memory for _lambda_.1']
    #allocation4 [shape = 's32[1]{0}', space=sflag, size = 0x4, scoped, tag = 'scoped memory for _lambda_.1']
    #allocation5 [shape = 'u8[24576]{0}', space=vmem, size = 0x6000, scoped, tag = 'input window, operand 1, single buffered']
    #allocation6 [shape = 's32[1]{0}', space=sflag, size = 0x4, scoped, tag = 'scoped memory for _lambda_.1']
    #allocation7 [shape = 'u8[512]{0}', space=vmem, size = 0x400, scoped, tag = 'input window, operand 2, single buffered']
    #allocation8 [shape = 'u8[98304]{0}', space=vmem, size = 0x18000, scoped, tag = 'input window, operand 3, single buffered']
    #allocation9 [shape = 's32[1]{0}', space=sflag, size = 0x4, scoped, tag = 'scoped memory for _lambda_.1']
    #allocation10 [shape = 'u8[512]{0}', space=vmem, size = 0x400, scoped, tag = 'input window, operand 4, single buffered']
    #allocation11 [shape = 'u8[98304]{0}', space=vmem, size = 0x18000, scoped, tag = 'input window, operand 5, single buffered']
    #allocation12 [shape = 's32[1]{0}', space=sflag, size = 0x4, scoped, tag = 'scoped memory for _lambda_.1']
    #allocation13 [shape = 'u8[622592]{0}', space=vmem, size = 0x98000, scoped, tag = 'input window, operand 7, single buffered']
    #allocation14 [shape = 'u8[16384]{0}', space=vmem, size = 0x4000, scoped, tag = 'input window, operand 9, single buffered']
    #allocation15 [shape = 's32[1]{0}', space=sflag, size = 0x4, scoped, tag = 'scoped memory for _lambda_.1']
    #allocation16 [shape = 'u8[1024]{0}', space=vmem, size = 0x400, scoped, tag = 'output window, operand 0, single buffered']
    %16 = vsyncpa [#allocation3], 0
    %17 = vsyncpa [#allocation6], 0
    %18 = vsyncpa [#allocation9], 0
    %19 = vsyncpa [#allocation12], 0
    %20 = vsyncpa [#allocation15], 0
    %21 = vsyncpa [#allocation4], 0
    // Predicated region
    $region2: #{_lambda_.1} parent=1 // pred_check
      _
    $region3: #{_lambda_.1} parent=1 // pred_check_branch
      %23 = sbr.rel (0) target = $region5
    $region4: #{_lambda_.1} parent=1 // pred_region
      %25 = vsyncadd [#allocation3], 0
      %s26 = sshll.u32 %s0, 4
      %s27 = int_to_ptr.hbm [resolvable:$true] %s26
      %s28 = sshll.u32 [#allocation2], 4
      %s29 = int_to_ptr.vmem [resolvable:$true] %s28
      %34 = dma.hbm_to_vmem [thread:$0]  %s27, 1024, %s29, [#allocation3], 128, 128, 8
    $region5: #{_lambda_.1} parent=1 // pred_fallthru
      _
    // Predicated region
    $region6: #{_lambda_.1} parent=1 // pred_check
      _
    $region7: #{_lambda_.1} parent=1 // pred_check_branch
      %36 = sbr.rel (0) target = $region9
    $region8: #{_lambda_.1} parent=1 // pred_region
      %38 = vsyncadd [#allocation6], 0
      %s39 = sshll.u32 %s1, 4
      %s40 = int_to_ptr.hbm [resolvable:$true] %s39
      %s41 = sshll.u32 [#allocation5], 4
      %s42 = int_to_ptr.vmem [resolvable:$true] %s41
      %47 = dma.hbm_to_vmem [thread:$0]  %s40, 768, %s42, [#allocation6], 64, 64, 4
    $region9: #{_lambda_.1} parent=1 // pred_fallthru
      _
    // Predicated region
    $region10: #{_lambda_.1} parent=1 // pred_check
      _
    $region11: #{_lambda_.1} parent=1 // pred_check_branch
      %49 = sbr.rel (0) target = $region13
    $region12: #{_lambda_.1} parent=1 // pred_region
      %51 = vsyncadd [#allocation6], 0
      %s53 = sshll.u32 %s2, 4
      %s54 = int_to_ptr.hbm [resolvable:$true] %s53
      %s55 = sshll.u32 [#allocation7], 4
      %s56 = int_to_ptr.vmem [resolvable:$true] %s55
      %58 = dma.hbm_to_vmem [thread:$0]  %s54, 16, %s56, [#allocation6]
    $region13: #{_lambda_.1} parent=1 // pred_fallthru
      _
    // Predicated region
    $region14: #{_lambda_.1} parent=1 // pred_check
      _
    $region15: #{_lambda_.1} parent=1 // pred_check_branch
      %60 = sbr.rel (0) target = $region17
    $region16: #{_lambda_.1} parent=1 // pred_region
      %62 = vsyncadd [#allocation9], 0
      %s63 = sshll.u32 %s3, 4
      %s64 = int_to_ptr.hbm [resolvable:$true] %s63
      %s65 = sshll.u32 [#allocation8], 4
      %s66 = int_to_ptr.vmem [resolvable:$true] %s65
      %71 = dma.hbm_to_vmem [thread:$0]  %s64, 3072, %s66, [#allocation9], 64, 64, 4
    $region17: #{_lambda_.1} parent=1 // pred_fallthru
      _
    // Predicated region
    $region18: #{_lambda_.1} parent=1 // pred_check
      _
    $region19: #{_lambda_.1} parent=1 // pred_check_branch
      %73 = sbr.rel (0) target = $region21
    $region20: #{_lambda_.1} parent=1 // pred_region
      %75 = vsyncadd [#allocation9], 0
      %s77 = sshll.u32 %s4, 4
      %s78 = int_to_ptr.hbm [resolvable:$true] %s77
      %s79 = sshll.u32 [#allocation10], 4
      %s80 = int_to_ptr.vmem [resolvable:$true] %s79
      %82 = dma.hbm_to_vmem [thread:$0]  %s78, 16, %s80, [#allocation9]
    $region21: #{_lambda_.1} parent=1 // pred_fallthru
      _
    // Predicated region
    $region22: #{_lambda_.1} parent=1 // pred_check
      _
    $region23: #{_lambda_.1} parent=1 // pred_check_branch
      %84 = sbr.rel (0) target = $region25
    $region24: #{_lambda_.1} parent=1 // pred_region
      %86 = vsyncadd [#allocation12], 0
      %s87 = sshll.u32 %s5, 4
      %s88 = int_to_ptr.hbm [resolvable:$true] %s87
      %s89 = sshll.u32 [#allocation11], 4
      %s90 = int_to_ptr.vmem [resolvable:$true] %s89
      %95 = dma.hbm_to_vmem [thread:$0]  %s88, 3072, %s90, [#allocation12], 64, 64, 4
    $region25: #{_lambda_.1} parent=1 // pred_fallthru
      _
    // Predicated region
    $region26: #{_lambda_.1} parent=1 // pred_check
      _
    $region27: #{_lambda_.1} parent=1 // pred_check_branch
      %97 = sbr.rel (0) target = $region29
    $region28: #{_lambda_.1} parent=1 // pred_region
      _
    $region29: #{_lambda_.1} parent=1 // pred_fallthru
      _
    // Predicated region
    $region30: #{_lambda_.1} parent=1 // pred_check
      _
    $region31: #{_lambda_.1} parent=1 // pred_check_branch
      %99 = sbr.rel (0) target = $region33
    $region32: #{_lambda_.1} parent=1 // pred_region
      %101 = vsyncadd [#allocation12], 0
      %s102 = sshll.u32 %s7, 4
      %s103 = int_to_ptr.hbm [resolvable:$true] %s102
      %s104 = sshll.u32 [#allocation13], 4
      %s105 = int_to_ptr.vmem [resolvable:$true] %s104
      %110 = dma.hbm_to_vmem [thread:$0]  %s103, 19456, %s105, [#allocation12], 64, 64, 4
    $region33: #{_lambda_.1} parent=1 // pred_fallthru
      _
    // Predicated region
    $region34: #{_lambda_.1} parent=1 // pred_check
      _
    $region35: #{_lambda_.1} parent=1 // pred_check_branch
      %112 = sbr.rel (0) target = $region37
    $region36: #{_lambda_.1} parent=1 // pred_region
      _
    $region37: #{_lambda_.1} parent=1 // pred_fallthru
      _
    // Predicated region
    $region38: #{_lambda_.1} parent=1 // pred_check
      _
    $region39: #{_lambda_.1} parent=1 // pred_check_branch
      %114 = sbr.rel (0) target = $region41
    $region40: #{_lambda_.1} parent=1 // pred_region
      %116 = vsyncadd [#allocation15], 0
      %s117 = sshll.u32 %s9, 4
      %s118 = int_to_ptr.hbm [resolvable:$true] %s117
      %s119 = sshll.u32 [#allocation14], 4
      %s120 = int_to_ptr.vmem [resolvable:$true] %s119
      %125 = dma.hbm_to_vmem [thread:$0]  %s118, 512, %s120, [#allocation15], 64, 64, 4
    $region41: #{_lambda_.1} parent=1 // pred_fallthru
      _
    // Predicated region
    $region42: #{_lambda_.1} parent=1 // pred_check
      _
    $region43: #{_lambda_.1} parent=1 // pred_check_branch
      %127 = sbr.rel (0) target = $region45
    $region44: #{_lambda_.1} parent=1 // pred_region
      _
    $region45: #{_lambda_.1} parent=1 // pred_fallthru
      _
    // Predicated region
    $region46: #{_lambda_.1} parent=1 // pred_check
      _
    $region47: #{_lambda_.1} parent=1 // pred_check_branch
      %129 = sbr.rel (0) target = $region49
    $region48: #{_lambda_.1} parent=1 // pred_region
      %131 = dma.done [#allocation3], 1024
    $region49: #{_lambda_.1} parent=1 // pred_fallthru
      _
    // Predicated region
    $region50: #{_lambda_.1} parent=1 // pred_check
      _
    $region51: #{_lambda_.1} parent=1 // pred_check_branch
      %133 = sbr.rel (0) target = $region53
    $region52: #{_lambda_.1} parent=1 // pred_region
      %135 = dma.done [#allocation6], 768
    $region53: #{_lambda_.1} parent=1 // pred_fallthru
      _
    // Predicated region
    $region54: #{_lambda_.1} parent=1 // pred_check
      _
    $region55: #{_lambda_.1} parent=1 // pred_check_branch
      %137 = sbr.rel (0) target = $region57
    $region56: #{_lambda_.1} parent=1 // pred_region
      %139 = dma.done [#allocation6], 16
    $region57: #{_lambda_.1} parent=1 // pred_fallthru
      _
    // Predicated region
    $region58: #{_lambda_.1} parent=1 // pred_check
      _
    $region59: #{_lambda_.1} parent=1 // pred_check_branch
      %141 = sbr.rel (0) target = $region61
    $region60: #{_lambda_.1} parent=1 // pred_region
      %143 = dma.done [#allocation9], 3072
    $region61: #{_lambda_.1} parent=1 // pred_fallthru
      _
    // Predicated region
    $region62: #{_lambda_.1} parent=1 // pred_check
      _
    $region63: #{_lambda_.1} parent=1 // pred_check_branch
      %145 = sbr.rel (0) target = $region65
    $region64: #{_lambda_.1} parent=1 // pred_region
      %147 = dma.done [#allocation9], 16
    $region65: #{_lambda_.1} parent=1 // pred_fallthru
      _
    // Predicated region
    $region66: #{_lambda_.1} parent=1 // pred_check
      _
    $region67: #{_lambda_.1} parent=1 // pred_check_branch
      %149 = sbr.rel (0) target = $region69
    $region68: #{_lambda_.1} parent=1 // pred_region
      %151 = dma.done [#allocation12], 3072
    $region69: #{_lambda_.1} parent=1 // pred_fallthru
      _
    // Predicated region
    $region70: #{_lambda_.1} parent=1 // pred_check
      _
    $region71: #{_lambda_.1} parent=1 // pred_check_branch
      %153 = sbr.rel (0) target = $region73
    $region72: #{_lambda_.1} parent=1 // pred_region
      %155 = dma.done [#allocation12], 19456
    $region73: #{_lambda_.1} parent=1 // pred_fallthru
      _
    // Predicated region
    $region74: #{_lambda_.1} parent=1 // pred_check
      _
    $region75: #{_lambda_.1} parent=1 // pred_check_branch
      %157 = sbr.rel (0) target = $region77
    $region76: #{_lambda_.1} parent=1 // pred_region
      %159 = dma.done [#allocation15], 512
    $region77: #{_lambda_.1} parent=1 // pred_fallthru
      _
    %v160 = vld [vmem:[#allocation5] sm:$0xf]
    %v161 = vld [vmem:[#allocation5 + $0x4] sm:$0xf]
    %v162 = vld [vmem:[#allocation5 + $0x8] sm:$0xf]
    %v163 = vld [vmem:[#allocation5 + $0xc] sm:$0xf]
    %v164 = vld [vmem:[#allocation5 + $0x10] sm:$0xf]
    %v165 = vld [vmem:[#allocation5 + $0x14] sm:$0xf]
    %v166 = vld [vmem:[#allocation5 + $0x18] sm:$0xf]
    %v167 = vld [vmem:[#allocation5 + $0x1c] sm:$0xf]
    %v168 = vld [vmem:[#allocation5 + $0x20] sm:$0xf]
    %v169 = vld [vmem:[#allocation5 + $0x24] sm:$0xf]
    %v170 = vld [vmem:[#allocation5 + $0x28] sm:$0xf]
    %v171 = vld [vmem:[#allocation5 + $0x2c] sm:$0xf]
    %v172 = vunpack.c.l.bf16 %v160
    %v173 = vunpack.c.l.bf16 %v161
    %v174 = vunpack.c.l.bf16 %v162
    %v175 = vunpack.c.l.bf16 %v163
    %v176 = vunpack.c.l.bf16 %v164
    %v177 = vunpack.c.l.bf16 %v165
    %v178 = vunpack.c.l.bf16 %v166
    %v179 = vunpack.c.l.bf16 %v167
    %v180 = vunpack.c.l.bf16 %v168
    %v181 = vunpack.c.l.bf16 %v169
    %v182 = vunpack.c.l.bf16 %v170
    %v183 = vunpack.c.l.bf16 %v171
    %v184 = vld [vmem:[#allocation8] sm:$0xf]
    %v185 = vld [vmem:[#allocation8 + $0x4] sm:$0xf]
    %v186 = vld [vmem:[#allocation8 + $0x8] sm:$0xf]
    %v187 = vld [vmem:[#allocation8 + $0xc] sm:$0xf]
    %v188 = vld [vmem:[#allocation8 + $0x10] sm:$0xf]
    %v189 = vld [vmem:[#allocation8 + $0x14] sm:$0xf]
    %v190 = vld [vmem:[#allocation8 + $0x18] sm:$0xf]
    %v191 = vld [vmem:[#allocation8 + $0x1c] sm:$0xf]
    %v192 = vld [vmem:[#allocation8 + $0x20] sm:$0xf]
    %v193 = vld [vmem:[#allocation8 + $0x24] sm:$0xf]
    %v194 = vld [vmem:[#allocation8 + $0x28] sm:$0xf]
    %v195 = vld [vmem:[#allocation8 + $0x2c] sm:$0xf]
    %v196 = vld [vmem:[#allocation8 + $0x30] sm:$0xf]
    %v197 = vld [vmem:[#allocation8 + $0x34] sm:$0xf]
    %v198 = vld [vmem:[#allocation8 + $0x38] sm:$0xf]
    %v199 = vld [vmem:[#allocation8 + $0x3c] sm:$0xf]
    %v200 = vld [vmem:[#allocation8 + $0x40] sm:$0xf]
    %v201 = vld [vmem:[#allocation8 + $0x44] sm:$0xf]
    %v202 = vld [vmem:[#allocation8 + $0x48] sm:$0xf]
    %v203 = vld [vmem:[#allocation8 + $0x4c] sm:$0xf]
    %v204 = vld [vmem:[#allocation8 + $0x50] sm:$0xf]
    %v205 = vld [vmem:[#allocation8 + $0x54] sm:$0xf]
    %v206 = vld [vmem:[#allocation8 + $0x58] sm:$0xf]
    %v207 = vld [vmem:[#allocation8 + $0x5c] sm:$0xf]
    %v208 = vld [vmem:[#allocation8 + $0x60] sm:$0xf]
    %v209 = vld [vmem:[#allocation8 + $0x64] sm:$0xf]
    %v210 = vld [vmem:[#allocation8 + $0x68] sm:$0xf]
    %v211 = vld [vmem:[#allocation8 + $0x6c] sm:$0xf]
    %v212 = vld [vmem:[#allocation8 + $0x70] sm:$0xf]
    %v213 = vld [vmem:[#allocation8 + $0x74] sm:$0xf]
    %v214 = vld [vmem:[#allocation8 + $0x78] sm:$0xf]
    %v215 = vld [vmem:[#allocation8 + $0x7c] sm:$0xf]
    %v216 = vld [vmem:[#allocation8 + $0x80] sm:$0xf]
    %v217 = vld [vmem:[#allocation8 + $0x84] sm:$0xf]
    %v218 = vld [vmem:[#allocation8 + $0x88] sm:$0xf]
    %v219 = vld [vmem:[#allocation8 + $0x8c] sm:$0xf]
    %v220 = vld [vmem:[#allocation8 + $0x90] sm:$0xf]
    %v221 = vld [vmem:[#allocation8 + $0x94] sm:$0xf]
    %v222 = vld [vmem:[#allocation8 + $0x98] sm:$0xf]
    %v223 = vld [vmem:[#allocation8 + $0x9c] sm:$0xf]
    %v224 = vld [vmem:[#allocation8 + $0xa0] sm:$0xf]
    %v225 = vld [vmem:[#allocation8 + $0xa4] sm:$0xf]
    %v226 = vld [vmem:[#allocation8 + $0xa8] sm:$0xf]
    %v227 = vld [vmem:[#allocation8 + $0xac] sm:$0xf]
    %v228 = vld [vmem:[#allocation8 + $0xb0] sm:$0xf]
    %v229 = vld [vmem:[#allocation8 + $0xb4] sm:$0xf]
    %v230 = vld [vmem:[#allocation8 + $0xb8] sm:$0xf]
    %v231 = vld [vmem:[#allocation8 + $0xbc] sm:$0xf]
    %v232 = vunpack.c.l.bf16 %v184
    %v233 = vunpack.c.l.bf16 %v185
    %v234 = vunpack.c.l.bf16 %v186
    %v235 = vunpack.c.l.bf16 %v187
    %v236 = vunpack.c.l.bf16 %v188
    %v237 = vunpack.c.l.bf16 %v189
    %v238 = vunpack.c.l.bf16 %v190
    %v239 = vunpack.c.l.bf16 %v191
    %v240 = vunpack.c.l.bf16 %v192
    %v241 = vunpack.c.l.bf16 %v193
    %v242 = vunpack.c.l.bf16 %v194
    %v243 = vunpack.c.l.bf16 %v195
    %v244 = vunpack.c.l.bf16 %v196
    %v245 = vunpack.c.l.bf16 %v197
    %v246 = vunpack.c.l.bf16 %v198
    %v247 = vunpack.c.l.bf16 %v199
    %v248 = vunpack.c.l.bf16 %v200
    %v249 = vunpack.c.l.bf16 %v201
    %v250 = vunpack.c.l.bf16 %v202
    %v251 = vunpack.c.l.bf16 %v203
    %v252 = vunpack.c.l.bf16 %v204
    %v253 = vunpack.c.l.bf16 %v205
    %v254 = vunpack.c.l.bf16 %v206
    %v255 = vunpack.c.l.bf16 %v207
    %v256 = vunpack.c.l.bf16 %v208
    %v257 = vunpack.c.l.bf16 %v209
    %v258 = vunpack.c.l.bf16 %v210
    %v259 = vunpack.c.l.bf16 %v211
    %v260 = vunpack.c.l.bf16 %v212
    %v261 = vunpack.c.l.bf16 %v213
    %v262 = vunpack.c.l.bf16 %v214
    %v263 = vunpack.c.l.bf16 %v215
    %v264 = vunpack.c.l.bf16 %v216
    %v265 = vunpack.c.l.bf16 %v217
    %v266 = vunpack.c.l.bf16 %v218
    %v267 = vunpack.c.l.bf16 %v219
    %v268 = vunpack.c.l.bf16 %v220
    %v269 = vunpack.c.l.bf16 %v221
    %v270 = vunpack.c.l.bf16 %v222
    %v271 = vunpack.c.l.bf16 %v223
    %v272 = vunpack.c.l.bf16 %v224
    %v273 = vunpack.c.l.bf16 %v225
    %v274 = vunpack.c.l.bf16 %v226
    %v275 = vunpack.c.l.bf16 %v227
    %v276 = vunpack.c.l.bf16 %v228
    %v277 = vunpack.c.l.bf16 %v229
    %v278 = vunpack.c.l.bf16 %v230
    %v279 = vunpack.c.l.bf16 %v231
    %v280 = vld [vmem:[#allocation11] sm:$0xf]
    %v281 = vld [vmem:[#allocation11 + $0x4] sm:$0xf]
    %v282 = vld [vmem:[#allocation11 + $0x8] sm:$0xf]
    %v283 = vld [vmem:[#allocation11 + $0xc] sm:$0xf]
    %v284 = vld [vmem:[#allocation11 + $0x10] sm:$0xf]
    %v285 = vld [vmem:[#allocation11 + $0x14] sm:$0xf]
    %v286 = vld [vmem:[#allocation11 + $0x18] sm:$0xf]
    %v287 = vld [vmem:[#allocation11 + $0x1c] sm:$0xf]
    %v288 = vld [vmem:[#allocation11 + $0x20] sm:$0xf]
    %v289 = vld [vmem:[#allocation11 + $0x24] sm:$0xf]
    %v290 = vld [vmem:[#allocation11 + $0x28] sm:$0xf]
    %v291 = vld [vmem:[#allocation11 + $0x2c] sm:$0xf]
    %v292 = vld [vmem:[#allocation11 + $0x30] sm:$0xf]
    %v293 = vld [vmem:[#allocation11 + $0x34] sm:$0xf]
    %v294 = vld [vmem:[#allocation11 + $0x38] sm:$0xf]
    %v295 = vld [vmem:[#allocation11 + $0x3c] sm:$0xf]
    %v296 = vld [vmem:[#allocation11 + $0x40] sm:$0xf]
    %v297 = vld [vmem:[#allocation11 + $0x44] sm:$0xf]
    %v298 = vld [vmem:[#allocation11 + $0x48] sm:$0xf]
    %v299 = vld [vmem:[#allocation11 + $0x4c] sm:$0xf]
    %v300 = vld [vmem:[#allocation11 + $0x50] sm:$0xf]
    %v301 = vld [vmem:[#allocation11 + $0x54] sm:$0xf]
    %v302 = vld [vmem:[#allocation11 + $0x58] sm:$0xf]
    %v303 = vld [vmem:[#allocation11 + $0x5c] sm:$0xf]
    %v304 = vld [vmem:[#allocation11 + $0x60] sm:$0xf]
    %v305 = vld [vmem:[#allocation11 + $0x64] sm:$0xf]
    %v306 = vld [vmem:[#allocation11 + $0x68] sm:$0xf]
    %v307 = vld [vmem:[#allocation11 + $0x6c] sm:$0xf]
    %v308 = vld [vmem:[#allocation11 + $0x70] sm:$0xf]
    %v309 = vld [vmem:[#allocation11 + $0x74] sm:$0xf]
    %v310 = vld [vmem:[#allocation11 + $0x78] sm:$0xf]
    %v311 = vld [vmem:[#allocation11 + $0x7c] sm:$0xf]
    %v312 = vld [vmem:[#allocation11 + $0x80] sm:$0xf]
    %v313 = vld [vmem:[#allocation11 + $0x84] sm:$0xf]
    %v314 = vld [vmem:[#allocation11 + $0x88] sm:$0xf]
    %v315 = vld [vmem:[#allocation11 + $0x8c] sm:$0xf]
    %v316 = vld [vmem:[#allocation11 + $0x90] sm:$0xf]
    %v317 = vld [vmem:[#allocation11 + $0x94] sm:$0xf]
    %v318 = vld [vmem:[#allocation11 + $0x98] sm:$0xf]
    %v319 = vld [vmem:[#allocation11 + $0x9c] sm:$0xf]
    %v320 = vld [vmem:[#allocation11 + $0xa0] sm:$0xf]
    %v321 = vld [vmem:[#allocation11 + $0xa4] sm:$0xf]
    %v322 = vld [vmem:[#allocation11 + $0xa8] sm:$0xf]
    %v323 = vld [vmem:[#allocation11 + $0xac] sm:$0xf]
    %v324 = vld [vmem:[#allocation11 + $0xb0] sm:$0xf]
    %v325 = vld [vmem:[#allocation11 + $0xb4] sm:$0xf]
    %v326 = vld [vmem:[#allocation11 + $0xb8] sm:$0xf]
    %v327 = vld [vmem:[#allocation11 + $0xbc] sm:$0xf]
    %v328 = vunpack.c.l.bf16 %v280
    %v329 = vunpack.c.l.bf16 %v281
    %v330 = vunpack.c.l.bf16 %v282
    %v331 = vunpack.c.l.bf16 %v283
    %v332 = vunpack.c.l.bf16 %v284
    %v333 = vunpack.c.l.bf16 %v285
    %v334 = vunpack.c.l.bf16 %v286
    %v335 = vunpack.c.l.bf16 %v287
    %v336 = vunpack.c.l.bf16 %v288
    %v337 = vunpack.c.l.bf16 %v289
    %v338 = vunpack.c.l.bf16 %v290
    %v339 = vunpack.c.l.bf16 %v291
    %v340 = vunpack.c.l.bf16 %v292
    %v341 = vunpack.c.l.bf16 %v293
    %v342 = vunpack.c.l.bf16 %v294
    %v343 = vunpack.c.l.bf16 %v295
    %v344 = vunpack.c.l.bf16 %v296
    %v345 = vunpack.c.l.bf16 %v297
    %v346 = vunpack.c.l.bf16 %v298
    %v347 = vunpack.c.l.bf16 %v299
    %v348 = vunpack.c.l.bf16 %v300
    %v349 = vunpack.c.l.bf16 %v301
    %v350 = vunpack.c.l.bf16 %v302
    %v351 = vunpack.c.l.bf16 %v303
    %v352 = vunpack.c.l.bf16 %v304
    %v353 = vunpack.c.l.bf16 %v305
    %v354 = vunpack.c.l.bf16 %v306
    %v355 = vunpack.c.l.bf16 %v307
    %v356 = vunpack.c.l.bf16 %v308
    %v357 = vunpack.c.l.bf16 %v309
    %v358 = vunpack.c.l.bf16 %v310
    %v359 = vunpack.c.l.bf16 %v311
    %v360 = vunpack.c.l.bf16 %v312
    %v361 = vunpack.c.l.bf16 %v313
    %v362 = vunpack.c.l.bf16 %v314
    %v363 = vunpack.c.l.bf16 %v315
    %v364 = vunpack.c.l.bf16 %v316
    %v365 = vunpack.c.l.bf16 %v317
    %v366 = vunpack.c.l.bf16 %v318
    %v367 = vunpack.c.l.bf16 %v319
    %v368 = vunpack.c.l.bf16 %v320
    %v369 = vunpack.c.l.bf16 %v321
    %v370 = vunpack.c.l.bf16 %v322
    %v371 = vunpack.c.l.bf16 %v323
    %v372 = vunpack.c.l.bf16 %v324
    %v373 = vunpack.c.l.bf16 %v325
    %v374 = vunpack.c.l.bf16 %v326
    %v375 = vunpack.c.l.bf16 %v327
    %v376 = vld [vmem:[#allocation13] sm:$0xf]
    %v377 = vld [vmem:[#allocation13 + $0x4] sm:$0xf]
    %v378 = vld [vmem:[#allocation13 + $0x8] sm:$0xf]
    %v379 = vld [vmem:[#allocation13 + $0xc] sm:$0xf]
    %v380 = vld [vmem:[#allocation13 + $0x10] sm:$0xf]
    %v381 = vld [vmem:[#allocation13 + $0x14] sm:$0xf]
    %v382 = vld [vmem:[#allocation13 + $0x18] sm:$0xf]
    %v383 = vld [vmem:[#allocation13 + $0x1c] sm:$0xf]
    %v384 = vld [vmem:[#allocation13 + $0x20] sm:$0xf]
    %v385 = vld [vmem:[#allocation13 + $0x24] sm:$0xf]
    %v386 = vld [vmem:[#allocation13 + $0x28] sm:$0xf]
    %v387 = vld [vmem:[#allocation13 + $0x2c] sm:$0xf]
    %v388 = vld [vmem:[#allocation13 + $0x30] sm:$0xf]
    %v389 = vld [vmem:[#allocation13 + $0x34] sm:$0xf]
    %v390 = vld [vmem:[#allocation13 + $0x38] sm:$0xf]
    %v391 = vld [vmem:[#allocation13 + $0x3c] sm:$0xf]
    %v392 = vld [vmem:[#allocation13 + $0x40] sm:$0xf]
    %v393 = vld [vmem:[#allocation13 + $0x44] sm:$0xf]
    %v394 = vld [vmem:[#allocation13 + $0x48] sm:$0xf]
    %v395 = vld [vmem:[#allocation13 + $0x4c] sm:$0xf]
    %v396 = vld [vmem:[#allocation13 + $0x50] sm:$0xf]
    %v397 = vld [vmem:[#allocation13 + $0x54] sm:$0xf]
    %v398 = vld [vmem:[#allocation13 + $0x58] sm:$0xf]
    %v399 = vld [vmem:[#allocation13 + $0x5c] sm:$0xf]
    %v400 = vld [vmem:[#allocation13 + $0x60] sm:$0xf]
    %v401 = vld [vmem:[#allocation13 + $0x64] sm:$0xf]
    %v402 = vld [vmem:[#allocation13 + $0x68] sm:$0xf]
    %v403 = vld [vmem:[#allocation13 + $0x6c] sm:$0xf]
    %v404 = vld [vmem:[#allocation13 + $0x70] sm:$0xf]
    %v405 = vld [vmem:[#allocation13 + $0x74] sm:$0xf]
    %v406 = vld [vmem:[#allocation13 + $0x78] sm:$0xf]
    %v407 = vld [vmem:[#allocation13 + $0x7c] sm:$0xf]
    %v408 = vld [vmem:[#allocation13 + $0x80] sm:$0xf]
    %v409 = vld [vmem:[#allocation13 + $0x84] sm:$0xf]
    %v410 = vld [vmem:[#allocation13 + $0x88] sm:$0xf]
    %v411 = vld [vmem:[#allocation13 + $0x8c] sm:$0xf]
    %v412 = vld [vmem:[#allocation13 + $0x90] sm:$0xf]
    %v413 = vld [vmem:[#allocation13 + $0x94] sm:$0xf]
    %v414 = vld [vmem:[#allocation13 + $0x98] sm:$0xf]
    %v415 = vld [vmem:[#allocation13 + $0x9c] sm:$0xf]
    %v416 = vld [vmem:[#allocation13 + $0xa0] sm:$0xf]
    %v417 = vld [vmem:[#allocation13 + $0xa4] sm:$0xf]
    %v418 = vld [vmem:[#allocation13 + $0xa8] sm:$0xf]
    %v419 = vld [vmem:[#allocation13 + $0xac] sm:$0xf]
    %v420 = vld [vmem:[#allocation13 + $0xb0] sm:$0xf]
    %v421 = vld [vmem:[#allocation13 + $0xb4] sm:$0xf]
    %v422 = vld [vmem:[#allocation13 + $0xb8] sm:$0xf]
    %v423 = vld [vmem:[#allocation13 + $0xbc] sm:$0xf]
    %v424 = vld [vmem:[#allocation13 + $0xc0] sm:$0xf]
    %v425 = vld [vmem:[#allocation13 + $0xc4] sm:$0xf]
    %v426 = vld [vmem:[#allocation13 + $0xc8] sm:$0xf]
    %v427 = vld [vmem:[#allocation13 + $0xcc] sm:$0xf]
    %v428 = vld [vmem:[#allocation13 + $0xd0] sm:$0xf]
    %v429 = vld [vmem:[#allocation13 + $0xd4] sm:$0xf]
    %v430 = vld [vmem:[#allocation13 + $0xd8] sm:$0xf]
    %v431 = vld [vmem:[#allocation13 + $0xdc] sm:$0xf]
    %v432 = vld [vmem:[#allocation13 + $0xe0] sm:$0xf]
    %v433 = vld [vmem:[#allocation13 + $0xe4] sm:$0xf]
    %v434 = vld [vmem:[#allocation13 + $0xe8] sm:$0xf]
    %v435 = vld [vmem:[#allocation13 + $0xec] sm:$0xf]
    %v436 = vld [vmem:[#allocation13 + $0xf0] sm:$0xf]
    %v437 = vld [vmem:[#allocation13 + $0xf4] sm:$0xf]
    %v438 = vld [vmem:[#allocation13 + $0xf8] sm:$0xf]
    %v439 = vld [vmem:[#allocation13 + $0xfc] sm:$0xf]
    %v440 = vld [vmem:[#allocation13 + $0x100] sm:$0xf]
    %v441 = vld [vmem:[#allocation13 + $0x104] sm:$0xf]
    %v442 = vld [vmem:[#allocation13 + $0x108] sm:$0xf]
    %v443 = vld [vmem:[#allocation13 + $0x10c] sm:$0xf]
    %v444 = vld [vmem:[#allocation13 + $0x110] sm:$0xf]
    %v445 = vld [vmem:[#allocation13 + $0x114] sm:$0xf]
    %v446 = vld [vmem:[#allocation13 + $0x118] sm:$0xf]
    %v447 = vld [vmem:[#allocation13 + $0x11c] sm:$0xf]
    %v448 = vld [vmem:[#allocation13 + $0x120] sm:$0xf]
    %v449 = vld [vmem:[#allocation13 + $0x124] sm:$0xf]
    %v450 = vld [vmem:[#allocation13 + $0x128] sm:$0xf]
    %v451 = vld [vmem:[#allocation13 + $0x12c] sm:$0xf]
    %v452 = vld [vmem:[#allocation13 + $0x130] sm:$0xf]
    %v453 = vld [vmem:[#allocation13 + $0x134] sm:$0xf]
    %v454 = vld [vmem:[#allocation13 + $0x138] sm:$0xf]
    %v455 = vld [vmem:[#allocation13 + $0x13c] sm:$0xf]
    %v456 = vld [vmem:[#allocation13 + $0x140] sm:$0xf]
    %v457 = vld [vmem:[#allocation13 + $0x144] sm:$0xf]
    %v458 = vld [vmem:[#allocation13 + $0x148] sm:$0xf]
    %v459 = vld [vmem:[#allocation13 + $0x14c] sm:$0xf]
    %v460 = vld [vmem:[#allocation13 + $0x150] sm:$0xf]
    %v461 = vld [vmem:[#allocation13 + $0x154] sm:$0xf]
    %v462 = vld [vmem:[#allocation13 + $0x158] sm:$0xf]
    %v463 = vld [vmem:[#allocation13 + $0x15c] sm:$0xf]
    %v464 = vld [vmem:[#allocation13 + $0x160] sm:$0xf]
    %v465 = vld [vmem:[#allocation13 + $0x164] sm:$0xf]
    %v466 = vld [vmem:[#allocation13 + $0x168] sm:$0xf]
    %v467 = vld [vmem:[#allocation13 + $0x16c] sm:$0xf]
    %v468 = vld [vmem:[#allocation13 + $0x170] sm:$0xf]
    %v469 = vld [vmem:[#allocation13 + $0x174] sm:$0xf]
    %v470 = vld [vmem:[#allocation13 + $0x178] sm:$0xf]
    %v471 = vld [vmem:[#allocation13 + $0x17c] sm:$0xf]
    %v472 = vld [vmem:[#allocation13 + $0x180] sm:$0xf]
    %v473 = vld [vmem:[#allocation13 + $0x184] sm:$0xf]
    %v474 = vld [vmem:[#allocation13 + $0x188] sm:$0xf]
    %v475 = vld [vmem:[#allocation13 + $0x18c] sm:$0xf]
    %v476 = vld [vmem:[#allocation13 + $0x190] sm:$0xf]
    %v477 = vld [vmem:[#allocation13 + $0x194] sm:$0xf]
    %v478 = vld [vmem:[#allocation13 + $0x198] sm:$0xf]
    %v479 = vld [vmem:[#allocation13 + $0x19c] sm:$0xf]
    %v480 = vld [vmem:[#allocation13 + $0x1a0] sm:$0xf]
    %v481 = vld [vmem:[#allocation13 + $0x1a4] sm:$0xf]
    %v482 = vld [vmem:[#allocation13 + $0x1a8] sm:$0xf]
    %v483 = vld [vmem:[#allocation13 + $0x1ac] sm:$0xf]
    %v484 = vld [vmem:[#allocation13 + $0x1b0] sm:$0xf]
    %v485 = vld [vmem:[#allocation13 + $0x1b4] sm:$0xf]
    %v486 = vld [vmem:[#allocation13 + $0x1b8] sm:$0xf]
    %v487 = vld [vmem:[#allocation13 + $0x1bc] sm:$0xf]
    %v488 = vld [vmem:[#allocation13 + $0x1c0] sm:$0xf]
    %v489 = vld [vmem:[#allocation13 + $0x1c4] sm:$0xf]
    %v490 = vld [vmem:[#allocation13 + $0x1c8] sm:$0xf]
    %v491 = vld [vmem:[#allocation13 + $0x1cc] sm:$0xf]
    %v492 = vld [vmem:[#allocation13 + $0x1d0] sm:$0xf]
    %v493 = vld [vmem:[#allocation13 + $0x1d4] sm:$0xf]
    %v494 = vld [vmem:[#allocation13 + $0x1d8] sm:$0xf]
    %v495 = vld [vmem:[#allocation13 + $0x1dc] sm:$0xf]
    %v496 = vld [vmem:[#allocation13 + $0x1e0] sm:$0xf]
    %v497 = vld [vmem:[#allocation13 + $0x1e4] sm:$0xf]
    %v498 = vld [vmem:[#allocation13 + $0x1e8] sm:$0xf]
    %v499 = vld [vmem:[#allocation13 + $0x1ec] sm:$0xf]
    %v500 = vld [vmem:[#allocation13 + $0x1f0] sm:$0xf]
    %v501 = vld [vmem:[#allocation13 + $0x1f4] sm:$0xf]
    %v502 = vld [vmem:[#allocation13 + $0x1f8] sm:$0xf]
    %v503 = vld [vmem:[#allocation13 + $0x1fc] sm:$0xf]
    %v504 = vld [vmem:[#allocation13 + $0x200] sm:$0xf]
    %v505 = vld [vmem:[#allocation13 + $0x204] sm:$0xf]
    %v506 = vld [vmem:[#allocation13 + $0x208] sm:$0xf]
    %v507 = vld [vmem:[#allocation13 + $0x20c] sm:$0xf]
    %v508 = vld [vmem:[#allocation13 + $0x210] sm:$0xf]
    %v509 = vld [vmem:[#allocation13 + $0x214] sm:$0xf]
    %v510 = vld [vmem:[#allocation13 + $0x218] sm:$0xf]
    %v511 = vld [vmem:[#allocation13 + $0x21c] sm:$0xf]
    %v512 = vld [vmem:[#allocation13 + $0x220] sm:$0xf]
    %v513 = vld [vmem:[#allocation13 + $0x224] sm:$0xf]
    %v514 = vld [vmem:[#allocation13 + $0x228] sm:$0xf]
    %v515 = vld [vmem:[#allocation13 + $0x22c] sm:$0xf]
    %v516 = vld [vmem:[#allocation13 + $0x230] sm:$0xf]
    %v517 = vld [vmem:[#allocation13 + $0x234] sm:$0xf]
    %v518 = vld [vmem:[#allocation13 + $0x238] sm:$0xf]
    %v519 = vld [vmem:[#allocation13 + $0x23c] sm:$0xf]
    %v520 = vld [vmem:[#allocation13 + $0x240] sm:$0xf]
    %v521 = vld [vmem:[#allocation13 + $0x244] sm:$0xf]
    %v522 = vld [vmem:[#allocation13 + $0x248] sm:$0xf]
    %v523 = vld [vmem:[#allocation13 + $0x24c] sm:$0xf]
    %v524 = vld [vmem:[#allocation13 + $0x250] sm:$0xf]
    %v525 = vld [vmem:[#allocation13 + $0x254] sm:$0xf]
    %v526 = vld [vmem:[#allocation13 + $0x258] sm:$0xf]
    %v527 = vld [vmem:[#allocation13 + $0x25c] sm:$0xf]
    %v528 = vld [vmem:[#allocation13 + $0x260] sm:$0xf]
    %v529 = vld [vmem:[#allocation13 + $0x264] sm:$0xf]
    %v530 = vld [vmem:[#allocation13 + $0x268] sm:$0xf]
    %v531 = vld [vmem:[#allocation13 + $0x26c] sm:$0xf]
    %v532 = vld [vmem:[#allocation13 + $0x270] sm:$0xf]
    %v533 = vld [vmem:[#allocation13 + $0x274] sm:$0xf]
    %v534 = vld [vmem:[#allocation13 + $0x278] sm:$0xf]
    %v535 = vld [vmem:[#allocation13 + $0x27c] sm:$0xf]
    %v536 = vld [vmem:[#allocation13 + $0x280] sm:$0xf]
    %v537 = vld [vmem:[#allocation13 + $0x284] sm:$0xf]
    %v538 = vld [vmem:[#allocation13 + $0x288] sm:$0xf]
    %v539 = vld [vmem:[#allocation13 + $0x28c] sm:$0xf]
    %v540 = vld [vmem:[#allocation13 + $0x290] sm:$0xf]
    %v541 = vld [vmem:[#allocation13 + $0x294] sm:$0xf]
    %v542 = vld [vmem:[#allocation13 + $0x298] sm:$0xf]
    %v543 = vld [vmem:[#allocation13 + $0x29c] sm:$0xf]
    %v544 = vld [vmem:[#allocation13 + $0x2a0] sm:$0xf]
    %v545 = vld [vmem:[#allocation13 + $0x2a4] sm:$0xf]
    %v546 = vld [vmem:[#allocation13 + $0x2a8] sm:$0xf]
    %v547 = vld [vmem:[#allocation13 + $0x2ac] sm:$0xf]
    %v548 = vld [vmem:[#allocation13 + $0x2b0] sm:$0xf]
    %v549 = vld [vmem:[#allocation13 + $0x2b4] sm:$0xf]
    %v550 = vld [vmem:[#allocation13 + $0x2b8] sm:$0xf]
    %v551 = vld [vmem:[#allocation13 + $0x2bc] sm:$0xf]
    %v552 = vld [vmem:[#allocation13 + $0x2c0] sm:$0xf]
    %v553 = vld [vmem:[#allocation13 + $0x2c4] sm:$0xf]
    %v554 = vld [vmem:[#allocation13 + $0x2c8] sm:$0xf]
    %v555 = vld [vmem:[#allocation13 + $0x2cc] sm:$0xf]
    %v556 = vld [vmem:[#allocation13 + $0x2d0] sm:$0xf]
    %v557 = vld [vmem:[#allocation13 + $0x2d4] sm:$0xf]
    %v558 = vld [vmem:[#allocation13 + $0x2d8] sm:$0xf]
    %v559 = vld [vmem:[#allocation13 + $0x2dc] sm:$0xf]
    %v560 = vld [vmem:[#allocation13 + $0x2e0] sm:$0xf]
    %v561 = vld [vmem:[#allocation13 + $0x2e4] sm:$0xf]
    %v562 = vld [vmem:[#allocation13 + $0x2e8] sm:$0xf]
    %v563 = vld [vmem:[#allocation13 + $0x2ec] sm:$0xf]
    %v564 = vld [vmem:[#allocation13 + $0x2f0] sm:$0xf]
    %v565 = vld [vmem:[#allocation13 + $0x2f4] sm:$0xf]
    %v566 = vld [vmem:[#allocation13 + $0x2f8] sm:$0xf]
    %v567 = vld [vmem:[#allocation13 + $0x2fc] sm:$0xf]
    %v568 = vld [vmem:[#allocation13 + $0x300] sm:$0xf]
    %v569 = vld [vmem:[#allocation13 + $0x304] sm:$0xf]
    %v570 = vld [vmem:[#allocation13 + $0x308] sm:$0xf]
    %v571 = vld [vmem:[#allocation13 + $0x30c] sm:$0xf]
    %v572 = vld [vmem:[#allocation13 + $0x310] sm:$0xf]
    %v573 = vld [vmem:[#allocation13 + $0x314] sm:$0xf]
    %v574 = vld [vmem:[#allocation13 + $0x318] sm:$0xf]
    %v575 = vld [vmem:[#allocation13 + $0x31c] sm:$0xf]
    %v576 = vld [vmem:[#allocation13 + $0x320] sm:$0xf]
    %v577 = vld [vmem:[#allocation13 + $0x324] sm:$0xf]
    %v578 = vld [vmem:[#allocation13 + $0x328] sm:$0xf]
    %v579 = vld [vmem:[#allocation13 + $0x32c] sm:$0xf]
    %v580 = vld [vmem:[#allocation13 + $0x330] sm:$0xf]
    %v581 = vld [vmem:[#allocation13 + $0x334] sm:$0xf]
    %v582 = vld [vmem:[#allocation13 + $0x338] sm:$0xf]
    %v583 = vld [vmem:[#allocation13 + $0x33c] sm:$0xf]
    %v584 = vld [vmem:[#allocation13 + $0x340] sm:$0xf]
    %v585 = vld [vmem:[#allocation13 + $0x344] sm:$0xf]
    %v586 = vld [vmem:[#allocation13 + $0x348] sm:$0xf]
    %v587 = vld [vmem:[#allocation13 + $0x34c] sm:$0xf]
    %v588 = vld [vmem:[#allocation13 + $0x350] sm:$0xf]
    %v589 = vld [vmem:[#allocation13 + $0x354] sm:$0xf]
    %v590 = vld [vmem:[#allocation13 + $0x358] sm:$0xf]
    %v591 = vld [vmem:[#allocation13 + $0x35c] sm:$0xf]
    %v592 = vld [vmem:[#allocation13 + $0x360] sm:$0xf]
    %v593 = vld [vmem:[#allocation13 + $0x364] sm:$0xf]
    %v594 = vld [vmem:[#allocation13 + $0x368] sm:$0xf]
    %v595 = vld [vmem:[#allocation13 + $0x36c] sm:$0xf]
    %v596 = vld [vmem:[#allocation13 + $0x370] sm:$0xf]
    %v597 = vld [vmem:[#allocation13 + $0x374] sm:$0xf]
    %v598 = vld [vmem:[#allocation13 + $0x378] sm:$0xf]
    %v599 = vld [vmem:[#allocation13 + $0x37c] sm:$0xf]
    %v600 = vld [vmem:[#allocation13 + $0x380] sm:$0xf]
    %v601 = vld [vmem:[#allocation13 + $0x384] sm:$0xf]
    %v602 = vld [vmem:[#allocation13 + $0x388] sm:$0xf]
    %v603 = vld [vmem:[#allocation13 + $0x38c] sm:$0xf]
    %v604 = vld [vmem:[#allocation13 + $0x390] sm:$0xf]
    %v605 = vld [vmem:[#allocation13 + $0x394] sm:$0xf]
    %v606 = vld [vmem:[#allocation13 + $0x398] sm:$0xf]
    %v607 = vld [vmem:[#allocation13 + $0x39c] sm:$0xf]
    %v608 = vld [vmem:[#allocation13 + $0x3a0] sm:$0xf]
    %v609 = vld [vmem:[#allocation13 + $0x3a4] sm:$0xf]
    %v610 = vld [vmem:[#allocation13 + $0x3a8] sm:$0xf]
    %v611 = vld [vmem:[#allocation13 + $0x3ac] sm:$0xf]
    %v612 = vld [vmem:[#allocation13 + $0x3b0] sm:$0xf]
    %v613 = vld [vmem:[#allocation13 + $0x3b4] sm:$0xf]
    %v614 = vld [vmem:[#allocation13 + $0x3b8] sm:$0xf]
    %v615 = vld [vmem:[#allocation13 + $0x3bc] sm:$0xf]
    %v616 = vld [vmem:[#allocation13 + $0x3c0] sm:$0xf]
    %v617 = vld [vmem:[#allocation13 + $0x3c4] sm:$0xf]
    %v618 = vld [vmem:[#allocation13 + $0x3c8] sm:$0xf]
    %v619 = vld [vmem:[#allocation13 + $0x3cc] sm:$0xf]
    %v620 = vld [vmem:[#allocation13 + $0x3d0] sm:$0xf]
    %v621 = vld [vmem:[#allocation13 + $0x3d4] sm:$0xf]
    %v622 = vld [vmem:[#allocation13 + $0x3d8] sm:$0xf]
    %v623 = vld [vmem:[#allocation13 + $0x3dc] sm:$0xf]
    %v624 = vld [vmem:[#allocation13 + $0x3e0] sm:$0xf]
    %v625 = vld [vmem:[#allocation13 + $0x3e4] sm:$0xf]
    %v626 = vld [vmem:[#allocation13 + $0x3e8] sm:$0xf]
    %v627 = vld [vmem:[#allocation13 + $0x3ec] sm:$0xf]
    %v628 = vld [vmem:[#allocation13 + $0x3f0] sm:$0xf]
    %v629 = vld [vmem:[#allocation13 + $0x3f4] sm:$0xf]
    %v630 = vld [vmem:[#allocation13 + $0x3f8] sm:$0xf]
    %v631 = vld [vmem:[#allocation13 + $0x3fc] sm:$0xf]
    %v632 = vld [vmem:[#allocation13 + $0x400] sm:$0xf]
    %v633 = vld [vmem:[#allocation13 + $0x404] sm:$0xf]
    %v634 = vld [vmem:[#allocation13 + $0x408] sm:$0xf]
    %v635 = vld [vmem:[#allocation13 + $0x40c] sm:$0xf]
    %v636 = vld [vmem:[#allocation13 + $0x410] sm:$0xf]
    %v637 = vld [vmem:[#allocation13 + $0x414] sm:$0xf]
    %v638 = vld [vmem:[#allocation13 + $0x418] sm:$0xf]
    %v639 = vld [vmem:[#allocation13 + $0x41c] sm:$0xf]
    %v640 = vld [vmem:[#allocation13 + $0x420] sm:$0xf]
    %v641 = vld [vmem:[#allocation13 + $0x424] sm:$0xf]
    %v642 = vld [vmem:[#allocation13 + $0x428] sm:$0xf]
    %v643 = vld [vmem:[#allocation13 + $0x42c] sm:$0xf]
    %v644 = vld [vmem:[#allocation13 + $0x430] sm:$0xf]
    %v645 = vld [vmem:[#allocation13 + $0x434] sm:$0xf]
    %v646 = vld [vmem:[#allocation13 + $0x438] sm:$0xf]
    %v647 = vld [vmem:[#allocation13 + $0x43c] sm:$0xf]
    %v648 = vld [vmem:[#allocation13 + $0x440] sm:$0xf]
    %v649 = vld [vmem:[#allocation13 + $0x444] sm:$0xf]
    %v650 = vld [vmem:[#allocation13 + $0x448] sm:$0xf]
    %v651 = vld [vmem:[#allocation13 + $0x44c] sm:$0xf]
    %v652 = vld [vmem:[#allocation13 + $0x450] sm:$0xf]
    %v653 = vld [vmem:[#allocation13 + $0x454] sm:$0xf]
    %v654 = vld [vmem:[#allocation13 + $0x458] sm:$0xf]
    %v655 = vld [vmem:[#allocation13 + $0x45c] sm:$0xf]
    %v656 = vld [vmem:[#allocation13 + $0x460] sm:$0xf]
    %v657 = vld [vmem:[#allocation13 + $0x464] sm:$0xf]
    %v658 = vld [vmem:[#allocation13 + $0x468] sm:$0xf]
    %v659 = vld [vmem:[#allocation13 + $0x46c] sm:$0xf]
    %v660 = vld [vmem:[#allocation13 + $0x470] sm:$0xf]
    %v661 = vld [vmem:[#allocation13 + $0x474] sm:$0xf]
    %v662 = vld [vmem:[#allocation13 + $0x478] sm:$0xf]
    %v663 = vld [vmem:[#allocation13 + $0x47c] sm:$0xf]
    %v664 = vld [vmem:[#allocation13 + $0x480] sm:$0xf]
    %v665 = vld [vmem:[#allocation13 + $0x484] sm:$0xf]
    %v666 = vld [vmem:[#allocation13 + $0x488] sm:$0xf]
    %v667 = vld [vmem:[#allocation13 + $0x48c] sm:$0xf]
    %v668 = vld [vmem:[#allocation13 + $0x490] sm:$0xf]
    %v669 = vld [vmem:[#allocation13 + $0x494] sm:$0xf]
    %v670 = vld [vmem:[#allocation13 + $0x498] sm:$0xf]
    %v671 = vld [vmem:[#allocation13 + $0x49c] sm:$0xf]
    %v672 = vld [vmem:[#allocation13 + $0x4a0] sm:$0xf]
    %v673 = vld [vmem:[#allocation13 + $0x4a4] sm:$0xf]
    %v674 = vld [vmem:[#allocation13 + $0x4a8] sm:$0xf]
    %v675 = vld [vmem:[#allocation13 + $0x4ac] sm:$0xf]
    %v676 = vld [vmem:[#allocation13 + $0x4b0] sm:$0xf]
    %v677 = vld [vmem:[#allocation13 + $0x4b4] sm:$0xf]
    %v678 = vld [vmem:[#allocation13 + $0x4b8] sm:$0xf]
    %v679 = vld [vmem:[#allocation13 + $0x4bc] sm:$0xf]
    %v680 = vunpack.c.l.bf16 %v376
    %v681 = vunpack.c.l.bf16 %v377
    %v682 = vunpack.c.l.bf16 %v378
    %v683 = vunpack.c.l.bf16 %v379
    %v684 = vunpack.c.l.bf16 %v380
    %v685 = vunpack.c.l.bf16 %v381
    %v686 = vunpack.c.l.bf16 %v382
    %v687 = vunpack.c.l.bf16 %v383
    %v688 = vunpack.c.l.bf16 %v384
    %v689 = vunpack.c.l.bf16 %v385
    %v690 = vunpack.c.l.bf16 %v386
    %v691 = vunpack.c.l.bf16 %v387
    %v692 = vunpack.c.l.bf16 %v388
    %v693 = vunpack.c.l.bf16 %v389
    %v694 = vunpack.c.l.bf16 %v390
    %v695 = vunpack.c.l.bf16 %v391
    %v696 = vunpack.c.l.bf16 %v392
    %v697 = vunpack.c.l.bf16 %v393
    %v698 = vunpack.c.l.bf16 %v394
    %v699 = vunpack.c.l.bf16 %v395
    %v700 = vunpack.c.l.bf16 %v396
    %v701 = vunpack.c.l.bf16 %v397
    %v702 = vunpack.c.l.bf16 %v398
    %v703 = vunpack.c.l.bf16 %v399
    %v704 = vunpack.c.l.bf16 %v400
    %v705 = vunpack.c.l.bf16 %v401
    %v706 = vunpack.c.l.bf16 %v402
    %v707 = vunpack.c.l.bf16 %v403
    %v708 = vunpack.c.l.bf16 %v404
    %v709 = vunpack.c.l.bf16 %v405
    %v710 = vunpack.c.l.bf16 %v406
    %v711 = vunpack.c.l.bf16 %v407
    %v712 = vunpack.c.l.bf16 %v408
    %v713 = vunpack.c.l.bf16 %v409
    %v714 = vunpack.c.l.bf16 %v410
    %v715 = vunpack.c.l.bf16 %v411
    %v716 = vunpack.c.l.bf16 %v412
    %v717 = vunpack.c.l.bf16 %v413
    %v718 = vunpack.c.l.bf16 %v414
    %v719 = vunpack.c.l.bf16 %v415
    %v720 = vunpack.c.l.bf16 %v416
    %v721 = vunpack.c.l.bf16 %v417
    %v722 = vunpack.c.l.bf16 %v418
    %v723 = vunpack.c.l.bf16 %v419
    %v724 = vunpack.c.l.bf16 %v420
    %v725 = vunpack.c.l.bf16 %v421
    %v726 = vunpack.c.l.bf16 %v422
    %v727 = vunpack.c.l.bf16 %v423
    %v728 = vunpack.c.l.bf16 %v424
    %v729 = vunpack.c.l.bf16 %v425
    %v730 = vunpack.c.l.bf16 %v426
    %v731 = vunpack.c.l.bf16 %v427
    %v732 = vunpack.c.l.bf16 %v428
    %v733 = vunpack.c.l.bf16 %v429
    %v734 = vunpack.c.l.bf16 %v430
    %v735 = vunpack.c.l.bf16 %v431
    %v736 = vunpack.c.l.bf16 %v432
    %v737 = vunpack.c.l.bf16 %v433
    %v738 = vunpack.c.l.bf16 %v434
    %v739 = vunpack.c.l.bf16 %v435
    %v740 = vunpack.c.l.bf16 %v436
    %v741 = vunpack.c.l.bf16 %v437
    %v742 = vunpack.c.l.bf16 %v438
    %v743 = vunpack.c.l.bf16 %v439
    %v744 = vunpack.c.l.bf16 %v440
    %v745 = vunpack.c.l.bf16 %v441
    %v746 = vunpack.c.l.bf16 %v442
    %v747 = vunpack.c.l.bf16 %v443
    %v748 = vunpack.c.l.bf16 %v444
    %v749 = vunpack.c.l.bf16 %v445
    %v750 = vunpack.c.l.bf16 %v446
    %v751 = vunpack.c.l.bf16 %v447
    %v752 = vunpack.c.l.bf16 %v448
    %v753 = vunpack.c.l.bf16 %v449
    %v754 = vunpack.c.l.bf16 %v450
    %v755 = vunpack.c.l.bf16 %v451
    %v756 = vunpack.c.l.bf16 %v452
    %v757 = vunpack.c.l.bf16 %v453
    %v758 = vunpack.c.l.bf16 %v454
    %v759 = vunpack.c.l.bf16 %v455
    %v760 = vunpack.c.l.bf16 %v456
    %v761 = vunpack.c.l.bf16 %v457
    %v762 = vunpack.c.l.bf16 %v458
    %v763 = vunpack.c.l.bf16 %v459
    %v764 = vunpack.c.l.bf16 %v460
    %v765 = vunpack.c.l.bf16 %v461
    %v766 = vunpack.c.l.bf16 %v462
    %v767 = vunpack.c.l.bf16 %v463
    %v768 = vunpack.c.l.bf16 %v464
    %v769 = vunpack.c.l.bf16 %v465
    %v770 = vunpack.c.l.bf16 %v466
    %v771 = vunpack.c.l.bf16 %v467
    %v772 = vunpack.c.l.bf16 %v468
    %v773 = vunpack.c.l.bf16 %v469
    %v774 = vunpack.c.l.bf16 %v470
    %v775 = vunpack.c.l.bf16 %v471
    %v776 = vunpack.c.l.bf16 %v472
    %v777 = vunpack.c.l.bf16 %v473
    %v778 = vunpack.c.l.bf16 %v474
    %v779 = vunpack.c.l.bf16 %v475
    %v780 = vunpack.c.l.bf16 %v476
    %v781 = vunpack.c.l.bf16 %v477
    %v782 = vunpack.c.l.bf16 %v478
    %v783 = vunpack.c.l.bf16 %v479
    %v784 = vunpack.c.l.bf16 %v480
    %v785 = vunpack.c.l.bf16 %v481
    %v786 = vunpack.c.l.bf16 %v482
    %v787 = vunpack.c.l.bf16 %v483
    %v788 = vunpack.c.l.bf16 %v484
    %v789 = vunpack.c.l.bf16 %v485
    %v790 = vunpack.c.l.bf16 %v486
    %v791 = vunpack.c.l.bf16 %v487
    %v792 = vunpack.c.l.bf16 %v488
    %v793 = vunpack.c.l.bf16 %v489
    %v794 = vunpack.c.l.bf16 %v490
    %v795 = vunpack.c.l.bf16 %v491
    %v796 = vunpack.c.l.bf16 %v492
    %v797 = vunpack.c.l.bf16 %v493
    %v798 = vunpack.c.l.bf16 %v494
    %v799 = vunpack.c.l.bf16 %v495
    %v800 = vunpack.c.l.bf16 %v496
    %v801 = vunpack.c.l.bf16 %v497
    %v802 = vunpack.c.l.bf16 %v498
    %v803 = vunpack.c.l.bf16 %v499
    %v804 = vunpack.c.l.bf16 %v500
    %v805 = vunpack.c.l.bf16 %v501
    %v806 = vunpack.c.l.bf16 %v502
    %v807 = vunpack.c.l.bf16 %v503
    %v808 = vunpack.c.l.bf16 %v504
    %v809 = vunpack.c.l.bf16 %v505
    %v810 = vunpack.c.l.bf16 %v506
    %v811 = vunpack.c.l.bf16 %v507
    %v812 = vunpack.c.l.bf16 %v508
    %v813 = vunpack.c.l.bf16 %v509
    %v814 = vunpack.c.l.bf16 %v510
    %v815 = vunpack.c.l.bf16 %v511
    %v816 = vunpack.c.l.bf16 %v512
    %v817 = vunpack.c.l.bf16 %v513
    %v818 = vunpack.c.l.bf16 %v514
    %v819 = vunpack.c.l.bf16 %v515
    %v820 = vunpack.c.l.bf16 %v516
    %v821 = vunpack.c.l.bf16 %v517
    %v822 = vunpack.c.l.bf16 %v518
    %v823 = vunpack.c.l.bf16 %v519
    %v824 = vunpack.c.l.bf16 %v520
    %v825 = vunpack.c.l.bf16 %v521
    %v826 = vunpack.c.l.bf16 %v522
    %v827 = vunpack.c.l.bf16 %v523
    %v828 = vunpack.c.l.bf16 %v524
    %v829 = vunpack.c.l.bf16 %v525
    %v830 = vunpack.c.l.bf16 %v526
    %v831 = vunpack.c.l.bf16 %v527
    %v832 = vunpack.c.l.bf16 %v528
    %v833 = vunpack.c.l.bf16 %v529
    %v834 = vunpack.c.l.bf16 %v530
    %v835 = vunpack.c.l.bf16 %v531
    %v836 = vunpack.c.l.bf16 %v532
    %v837 = vunpack.c.l.bf16 %v533
    %v838 = vunpack.c.l.bf16 %v534
    %v839 = vunpack.c.l.bf16 %v535
    %v840 = vunpack.c.l.bf16 %v536
    %v841 = vunpack.c.l.bf16 %v537
    %v842 = vunpack.c.l.bf16 %v538
    %v843 = vunpack.c.l.bf16 %v539
    %v844 = vunpack.c.l.bf16 %v540
    %v845 = vunpack.c.l.bf16 %v541
    %v846 = vunpack.c.l.bf16 %v542
    %v847 = vunpack.c.l.bf16 %v543
    %v848 = vunpack.c.l.bf16 %v544
    %v849 = vunpack.c.l.bf16 %v545
    %v850 = vunpack.c.l.bf16 %v546
    %v851 = vunpack.c.l.bf16 %v547
    %v852 = vunpack.c.l.bf16 %v548
    %v853 = vunpack.c.l.bf16 %v549
    %v854 = vunpack.c.l.bf16 %v550
    %v855 = vunpack.c.l.bf16 %v551
    %v856 = vunpack.c.l.bf16 %v552
    %v857 = vunpack.c.l.bf16 %v553
    %v858 = vunpack.c.l.bf16 %v554
    %v859 = vunpack.c.l.bf16 %v555
    %v860 = vunpack.c.l.bf16 %v556
    %v861 = vunpack.c.l.bf16 %v557
    %v862 = vunpack.c.l.bf16 %v558
    %v863 = vunpack.c.l.bf16 %v559
    %v864 = vunpack.c.l.bf16 %v560
    %v865 = vunpack.c.l.bf16 %v561
    %v866 = vunpack.c.l.bf16 %v562
    %v867 = vunpack.c.l.bf16 %v563
    %v868 = vunpack.c.l.bf16 %v564
    %v869 = vunpack.c.l.bf16 %v565
    %v870 = vunpack.c.l.bf16 %v566
    %v871 = vunpack.c.l.bf16 %v567
    %v872 = vunpack.c.l.bf16 %v568
    %v873 = vunpack.c.l.bf16 %v569
    %v874 = vunpack.c.l.bf16 %v570
    %v875 = vunpack.c.l.bf16 %v571
    %v876 = vunpack.c.l.bf16 %v572
    %v877 = vunpack.c.l.bf16 %v573
    %v878 = vunpack.c.l.bf16 %v574
    %v879 = vunpack.c.l.bf16 %v575
    %v880 = vunpack.c.l.bf16 %v576
    %v881 = vunpack.c.l.bf16 %v577
    %v882 = vunpack.c.l.bf16 %v578
    %v883 = vunpack.c.l.bf16 %v579
    %v884 = vunpack.c.l.bf16 %v580
    %v885 = vunpack.c.l.bf16 %v581
    %v886 = vunpack.c.l.bf16 %v582
    %v887 = vunpack.c.l.bf16 %v583
    %v888 = vunpack.c.l.bf16 %v584
    %v889 = vunpack.c.l.bf16 %v585
    %v890 = vunpack.c.l.bf16 %v586
    %v891 = vunpack.c.l.bf16 %v587
    %v892 = vunpack.c.l.bf16 %v588
    %v893 = vunpack.c.l.bf16 %v589
    %v894 = vunpack.c.l.bf16 %v590
    %v895 = vunpack.c.l.bf16 %v591
    %v896 = vunpack.c.l.bf16 %v592
    %v897 = vunpack.c.l.bf16 %v593
    %v898 = vunpack.c.l.bf16 %v594
    %v899 = vunpack.c.l.bf16 %v595
    %v900 = vunpack.c.l.bf16 %v596
    %v901 = vunpack.c.l.bf16 %v597
    %v902 = vunpack.c.l.bf16 %v598
    %v903 = vunpack.c.l.bf16 %v599
    %v904 = vunpack.c.l.bf16 %v600
    %v905 = vunpack.c.l.bf16 %v601
    %v906 = vunpack.c.l.bf16 %v602
    %v907 = vunpack.c.l.bf16 %v603
    %v908 = vunpack.c.l.bf16 %v604
    %v909 = vunpack.c.l.bf16 %v605
    %v910 = vunpack.c.l.bf16 %v606
    %v911 = vunpack.c.l.bf16 %v607
    %v912 = vunpack.c.l.bf16 %v608
    %v913 = vunpack.c.l.bf16 %v609
    %v914 = vunpack.c.l.bf16 %v610
    %v915 = vunpack.c.l.bf16 %v611
    %v916 = vunpack.c.l.bf16 %v612
    %v917 = vunpack.c.l.bf16 %v613
    %v918 = vunpack.c.l.bf16 %v614
    %v919 = vunpack.c.l.bf16 %v615
    %v920 = vunpack.c.l.bf16 %v616
    %v921 = vunpack.c.l.bf16 %v617
    %v922 = vunpack.c.l.bf16 %v618
    %v923 = vunpack.c.l.bf16 %v619
    %v924 = vunpack.c.l.bf16 %v620
    %v925 = vunpack.c.l.bf16 %v621
    %v926 = vunpack.c.l.bf16 %v622
    %v927 = vunpack.c.l.bf16 %v623
    %v928 = vunpack.c.l.bf16 %v624
    %v929 = vunpack.c.l.bf16 %v625
    %v930 = vunpack.c.l.bf16 %v626
    %v931 = vunpack.c.l.bf16 %v627
    %v932 = vunpack.c.l.bf16 %v628
    %v933 = vunpack.c.l.bf16 %v629
    %v934 = vunpack.c.l.bf16 %v630
    %v935 = vunpack.c.l.bf16 %v631
    %v936 = vunpack.c.l.bf16 %v632
    %v937 = vunpack.c.l.bf16 %v633
    %v938 = vunpack.c.l.bf16 %v634
    %v939 = vunpack.c.l.bf16 %v635
    %v940 = vunpack.c.l.bf16 %v636
    %v941 = vunpack.c.l.bf16 %v637
    %v942 = vunpack.c.l.bf16 %v638
    %v943 = vunpack.c.l.bf16 %v639
    %v944 = vunpack.c.l.bf16 %v640
    %v945 = vunpack.c.l.bf16 %v641
    %v946 = vunpack.c.l.bf16 %v642
    %v947 = vunpack.c.l.bf16 %v643
    %v948 = vunpack.c.l.bf16 %v644
    %v949 = vunpack.c.l.bf16 %v645
    %v950 = vunpack.c.l.bf16 %v646
    %v951 = vunpack.c.l.bf16 %v647
    %v952 = vunpack.c.l.bf16 %v648
    %v953 = vunpack.c.l.bf16 %v649
    %v954 = vunpack.c.l.bf16 %v650
    %v955 = vunpack.c.l.bf16 %v651
    %v956 = vunpack.c.l.bf16 %v652
    %v957 = vunpack.c.l.bf16 %v653
    %v958 = vunpack.c.l.bf16 %v654
    %v959 = vunpack.c.l.bf16 %v655
    %v960 = vunpack.c.l.bf16 %v656
    %v961 = vunpack.c.l.bf16 %v657
    %v962 = vunpack.c.l.bf16 %v658
    %v963 = vunpack.c.l.bf16 %v659
    %v964 = vunpack.c.l.bf16 %v660
    %v965 = vunpack.c.l.bf16 %v661
    %v966 = vunpack.c.l.bf16 %v662
    %v967 = vunpack.c.l.bf16 %v663
    %v968 = vunpack.c.l.bf16 %v664
    %v969 = vunpack.c.l.bf16 %v665
    %v970 = vunpack.c.l.bf16 %v666
    %v971 = vunpack.c.l.bf16 %v667
    %v972 = vunpack.c.l.bf16 %v668
    %v973 = vunpack.c.l.bf16 %v669
    %v974 = vunpack.c.l.bf16 %v670
    %v975 = vunpack.c.l.bf16 %v671
    %v976 = vunpack.c.l.bf16 %v672
    %v977 = vunpack.c.l.bf16 %v673
    %v978 = vunpack.c.l.bf16 %v674
    %v979 = vunpack.c.l.bf16 %v675
    %v980 = vunpack.c.l.bf16 %v676
    %v981 = vunpack.c.l.bf16 %v677
    %v982 = vunpack.c.l.bf16 %v678
    %v983 = vunpack.c.l.bf16 %v679
    %v984 = vld [vmem:[#allocation14] sm:$0xf]
    %v985 = vld [vmem:[#allocation14 + $0x4] sm:$0xf]
    %v986 = vld [vmem:[#allocation14 + $0x8] sm:$0xf]
    %v987 = vld [vmem:[#allocation14 + $0xc] sm:$0xf]
    %v988 = vld [vmem:[#allocation14 + $0x10] sm:$0xf]
    %v989 = vld [vmem:[#allocation14 + $0x14] sm:$0xf]
    %v990 = vld [vmem:[#allocation14 + $0x18] sm:$0xf]
    %v991 = vld [vmem:[#allocation14 + $0x1c] sm:$0xf]
    %v992 = vunpack.c.l.bf16 %v984
    %v993 = vunpack.c.l.bf16 %v985
    %v994 = vunpack.c.l.bf16 %v986
    %v995 = vunpack.c.l.bf16 %v987
    %v996 = vunpack.c.l.bf16 %v988
    %v997 = vunpack.c.l.bf16 %v989
    %v998 = vunpack.c.l.bf16 %v990
    %v999 = vunpack.c.l.bf16 %v991
    %v1000 = vld [vmem:[#allocation2] sm:$0xff]
    %v1001 = vld [vmem:[#allocation2 + $0x8] sm:$0xff]
    %v1002 = vld [vmem:[#allocation2 + $0x10] sm:$0xff]
    %v1003 = vld [vmem:[#allocation2 + $0x18] sm:$0xff]
    %v1004 = vld [vmem:[#allocation2 + $0x20] sm:$0xff]
    %v1005 = vld [vmem:[#allocation2 + $0x28] sm:$0xff]
    %v1006 = vld [vmem:[#allocation2 + $0x30] sm:$0xff]
    %v1007 = vld [vmem:[#allocation2 + $0x38] sm:$0xff]
    %1008 = vxpose.xlu0.b32.start [1/16] %v1000, 128
    %1009 = vxpose.xlu0.b32.cont [2/16] %v1001, 128
    %1010 = vxpose.xlu0.b32.cont [3/16] %v1002, 128
    %1011 = vxpose.xlu0.b32.cont [4/16] %v1003, 128
    %1012 = vxpose.xlu0.b32.cont [5/16] 0.0, 128
    %1013 = vxpose.xlu0.b32.cont [6/16] 0.0, 128
    %1014 = vxpose.xlu0.b32.cont [7/16] 0.0, 128
    %1015 = vxpose.xlu0.b32.cont [8/16] 0.0, 128
    %1016 = vxpose.xlu0.b32.cont [9/16] 0.0, 128
    %1017 = vxpose.xlu0.b32.cont [10/16] 0.0, 128
    %1018 = vxpose.xlu0.b32.cont [11/16] 0.0, 128
    %1019 = vxpose.xlu0.b32.cont [12/16] 0.0, 128
    %1020 = vxpose.xlu0.b32.cont [13/16] 0.0, 128
    %1021 = vxpose.xlu0.b32.cont [14/16] 0.0, 128
    %1022 = vxpose.xlu0.b32.cont [15/16] 0.0, 128
    %1023 = vxpose.xlu0.b32.end [16/16] 0.0, 128
    %v1024 = vpop.trf.xlu0
    %v1025 = vpop.trf.xlu0
    %v1026 = vpop.trf.xlu0
    %v1027 = vpop.trf.xlu0
    %v1028 = vpop.trf.xlu0
    %v1029 = vpop.trf.xlu0
    %v1030 = vpop.trf.xlu0
    %v1031 = vpop.trf.xlu0
    %v1032 = vpop.trf.xlu0
    %v1033 = vpop.trf.xlu0
    %v1034 = vpop.trf.xlu0
    %v1035 = vpop.trf.xlu0
    %v1036 = vpop.trf.xlu0
    %v1037 = vpop.trf.xlu0
    %v1038 = vpop.trf.xlu0
    %v1039 = vpop.trf.xlu0
    %1040 = vxpose.xlu0.b32.start [1/16] %v1004, 128
    %1041 = vxpose.xlu0.b32.cont [2/16] %v1005, 128
    %1042 = vxpose.xlu0.b32.cont [3/16] %v1006, 128
    %1043 = vxpose.xlu0.b32.cont [4/16] %v1007, 128
    %1044 = vxpose.xlu0.b32.cont [5/16] 0.0, 128
    %1045 = vxpose.xlu0.b32.cont [6/16] 0.0, 128
    %1046 = vxpose.xlu0.b32.cont [7/16] 0.0, 128
    %1047 = vxpose.xlu0.b32.cont [8/16] 0.0, 128
    %1048 = vxpose.xlu0.b32.cont [9/16] 0.0, 128
    %1049 = vxpose.xlu0.b32.cont [10/16] 0.0, 128
    %1050 = vxpose.xlu0.b32.cont [11/16] 0.0, 128
    %1051 = vxpose.xlu0.b32.cont [12/16] 0.0, 128
    %1052 = vxpose.xlu0.b32.cont [13/16] 0.0, 128
    %1053 = vxpose.xlu0.b32.cont [14/16] 0.0, 128
    %1054 = vxpose.xlu0.b32.cont [15/16] 0.0, 128
    %1055 = vxpose.xlu0.b32.end [16/16] 0.0, 128
    %v1056 = vpop.trf.xlu0
    %v1057 = vpop.trf.xlu0
    %v1058 = vpop.trf.xlu0
    %v1059 = vpop.trf.xlu0
    %v1060 = vpop.trf.xlu0
    %v1061 = vpop.trf.xlu0
    %v1062 = vpop.trf.xlu0
    %v1063 = vpop.trf.xlu0
    %v1064 = vpop.trf.xlu0
    %v1065 = vpop.trf.xlu0
    %v1066 = vpop.trf.xlu0
    %v1067 = vpop.trf.xlu0
    %v1068 = vpop.trf.xlu0
    %v1069 = vpop.trf.xlu0
    %v1070 = vpop.trf.xlu0
    %v1071 = vpop.trf.xlu0
    %v1072 = vld [vmem:[#allocation7] sm:$0x1]
    %vm1085 = vcmask 1046528
    %v1086 = vrot.slane %v1024, 1
    %v1087 = vrot.slane %v1025, 1
    %v1088 = vsel %vm1085, %v1086, %v1087
    %v1089 = vrot.slane %v1026, 1
    %v1090 = vsel %vm1085, %v1087, %v1089
    %v1091 = vrot.slane %v1027, 1
    %v1092 = vsel %vm1085, %v1089, %v1091
    %v1093 = vrot.slane %v1028, 1
    %v1094 = vsel %vm1085, %v1091, %v1093
    %v1095 = vrot.slane %v1029, 1
    %v1096 = vsel %vm1085, %v1093, %v1095
    %v1097 = vrot.slane %v1030, 1
    %v1098 = vsel %vm1085, %v1095, %v1097
    %v1099 = vrot.slane %v1031, 1
    %v1100 = vsel %vm1085, %v1097, %v1099
    %v1101 = vrot.slane %v1032, 1
    %v1102 = vsel %vm1085, %v1099, %v1101
    %v1103 = vrot.slane %v1033, 1
    %v1104 = vsel %vm1085, %v1101, %v1103
    %v1105 = vrot.slane %v1034, 1
    %v1106 = vsel %vm1085, %v1103, %v1105
    %v1107 = vrot.slane %v1035, 1
    %v1108 = vsel %vm1085, %v1105, %v1107
    %1109 = vrot.lane.b32.xlu0 %v1088, 32
    %v1110 = vpop.permute.xlu0 %1109
    %1111 = vrot.lane.b32.xlu0 %v1090, 32
    %v1112 = vpop.permute.xlu0 %1111
    %1113 = vrot.lane.b32.xlu0 %v1092, 32
    %v1114 = vpop.permute.xlu0 %1113
    %1115 = vrot.lane.b32.xlu0 %v1094, 32
    %v1116 = vpop.permute.xlu0 %1115
    %1117 = vrot.lane.b32.xlu0 %v1096, 32
    %v1118 = vpop.permute.xlu0 %1117
    %1119 = vrot.lane.b32.xlu0 %v1098, 32
    %v1120 = vpop.permute.xlu0 %1119
    %1121 = vrot.lane.b32.xlu0 %v1100, 32
    %v1122 = vpop.permute.xlu0 %1121
    %1123 = vrot.lane.b32.xlu0 %v1102, 32
    %v1124 = vpop.permute.xlu0 %1123
    %1125 = vrot.lane.b32.xlu0 %v1104, 32
    %v1126 = vpop.permute.xlu0 %1125
    %1127 = vrot.lane.b32.xlu0 %v1106, 32
    %v1128 = vpop.permute.xlu0 %1127
    %1129 = vrot.lane.b32.xlu0 %v1108, 32
    %v1130 = vpop.permute.xlu0 %1129
    %vm1142 = vcmask 1045504
    %v1143 = vrot.slane %v1024, 2
    %v1144 = vrot.slane %v1025, 2
    %v1145 = vsel %vm1142, %v1143, %v1144
    %v1146 = vrot.slane %v1026, 2
    %v1147 = vsel %vm1142, %v1144, %v1146
    %v1148 = vrot.slane %v1027, 2
    %v1149 = vsel %vm1142, %v1146, %v1148
    %v1150 = vrot.slane %v1028, 2
    %v1151 = vsel %vm1142, %v1148, %v1150
    %v1152 = vrot.slane %v1029, 2
    %v1153 = vsel %vm1142, %v1150, %v1152
    %v1154 = vrot.slane %v1030, 2
    %v1155 = vsel %vm1142, %v1152, %v1154
    %v1156 = vrot.slane %v1031, 2
    %v1157 = vsel %vm1142, %v1154, %v1156
    %v1158 = vrot.slane %v1032, 2
    %v1159 = vsel %vm1142, %v1156, %v1158
    %v1160 = vrot.slane %v1033, 2
    %v1161 = vsel %vm1142, %v1158, %v1160
    %v1162 = vrot.slane %v1034, 2
    %v1163 = vsel %vm1142, %v1160, %v1162
    %v1164 = vrot.slane %v1035, 2
    %v1165 = vsel %vm1142, %v1162, %v1164
    %1166 = vrot.lane.b32.xlu0 %v1145, 64
    %v1167 = vpop.permute.xlu0 %1166
    %1168 = vrot.lane.b32.xlu0 %v1147, 64
    %v1169 = vpop.permute.xlu0 %1168
    %1170 = vrot.lane.b32.xlu0 %v1149, 64
    %v1171 = vpop.permute.xlu0 %1170
    %1172 = vrot.lane.b32.xlu0 %v1151, 64
    %v1173 = vpop.permute.xlu0 %1172
    %1174 = vrot.lane.b32.xlu0 %v1153, 64
    %v1175 = vpop.permute.xlu0 %1174
    %1176 = vrot.lane.b32.xlu0 %v1155, 64
    %v1177 = vpop.permute.xlu0 %1176
    %1178 = vrot.lane.b32.xlu0 %v1157, 64
    %v1179 = vpop.permute.xlu0 %1178
    %1180 = vrot.lane.b32.xlu0 %v1159, 64
    %v1181 = vpop.permute.xlu0 %1180
    %1182 = vrot.lane.b32.xlu0 %v1161, 64
    %v1183 = vpop.permute.xlu0 %1182
    %1184 = vrot.lane.b32.xlu0 %v1163, 64
    %v1185 = vpop.permute.xlu0 %1184
    %1186 = vrot.lane.b32.xlu0 %v1165, 64
    %v1187 = vpop.permute.xlu0 %1186
    %vm1199 = vcmask 261120
    %v1200 = vsel %vm1199, %v1024, %v1110
    %v1201 = vsel %vm1199, %v1025, %v1112
    %v1202 = vsel %vm1199, %v1026, %v1114
    %v1203 = vsel %vm1199, %v1027, %v1116
    %v1204 = vsel %vm1199, %v1028, %v1118
    %v1205 = vsel %vm1199, %v1029, %v1120
    %v1206 = vsel %vm1199, %v1030, %v1122
    %v1207 = vsel %vm1199, %v1031, %v1124
    %v1208 = vsel %vm1199, %v1032, %v1126
    %v1209 = vsel %vm1199, %v1033, %v1128
    %v1210 = vsel %vm1199, %v1034, %v1130
    %vm1211 = vcmask 523264
    %v1212 = vsel %vm1211, %v1200, %v1167
    %v1213 = vsel %vm1211, %v1201, %v1169
    %v1214 = vsel %vm1211, %v1202, %v1171
    %v1215 = vsel %vm1211, %v1203, %v1173
    %v1216 = vsel %vm1211, %v1204, %v1175
    %v1217 = vsel %vm1211, %v1205, %v1177
    %v1218 = vsel %vm1211, %v1206, %v1179
    %v1219 = vsel %vm1211, %v1207, %v1181
    %v1220 = vsel %vm1211, %v1208, %v1183
    %v1221 = vsel %vm1211, %v1209, %v1185
    %v1222 = vsel %vm1211, %v1210, %v1187
    %v1235 = vrot.slane %v1056, 1
    %v1236 = vrot.slane %v1057, 1
    %v1237 = vsel %vm1085, %v1235, %v1236
    %v1238 = vrot.slane %v1058, 1
    %v1239 = vsel %vm1085, %v1236, %v1238
    %v1240 = vrot.slane %v1059, 1
    %v1241 = vsel %vm1085, %v1238, %v1240
    %v1242 = vrot.slane %v1060, 1
    %v1243 = vsel %vm1085, %v1240, %v1242
    %v1244 = vrot.slane %v1061, 1
    %v1245 = vsel %vm1085, %v1242, %v1244
    %v1246 = vrot.slane %v1062, 1
    %v1247 = vsel %vm1085, %v1244, %v1246
    %v1248 = vrot.slane %v1063, 1
    %v1249 = vsel %vm1085, %v1246, %v1248
    %v1250 = vrot.slane %v1064, 1
    %v1251 = vsel %vm1085, %v1248, %v1250
    %v1252 = vrot.slane %v1065, 1
    %v1253 = vsel %vm1085, %v1250, %v1252
    %v1254 = vrot.slane %v1066, 1
    %v1255 = vsel %vm1085, %v1252, %v1254
    %v1256 = vrot.slane %v1067, 1
    %v1257 = vsel %vm1085, %v1254, %v1256
    %1258 = vrot.lane.b32.xlu0 %v1237, 32
    %v1259 = vpop.permute.xlu0 %1258
    %1260 = vrot.lane.b32.xlu0 %v1239, 32
    %v1261 = vpop.permute.xlu0 %1260
    %1262 = vrot.lane.b32.xlu0 %v1241, 32
    %v1263 = vpop.permute.xlu0 %1262
    %1264 = vrot.lane.b32.xlu0 %v1243, 32
    %v1265 = vpop.permute.xlu0 %1264
    %1266 = vrot.lane.b32.xlu0 %v1245, 32
    %v1267 = vpop.permute.xlu0 %1266
    %1268 = vrot.lane.b32.xlu0 %v1247, 32
    %v1269 = vpop.permute.xlu0 %1268
    %1270 = vrot.lane.b32.xlu0 %v1249, 32
    %v1271 = vpop.permute.xlu0 %1270
    %1272 = vrot.lane.b32.xlu0 %v1251, 32
    %v1273 = vpop.permute.xlu0 %1272
    %1274 = vrot.lane.b32.xlu0 %v1253, 32
    %v1275 = vpop.permute.xlu0 %1274
    %1276 = vrot.lane.b32.xlu0 %v1255, 32
    %v1277 = vpop.permute.xlu0 %1276
    %1278 = vrot.lane.b32.xlu0 %v1257, 32
    %v1279 = vpop.permute.xlu0 %1278
    %v1291 = vrot.slane %v1056, 2
    %v1292 = vrot.slane %v1057, 2
    %v1293 = vsel %vm1142, %v1291, %v1292
    %v1294 = vrot.slane %v1058, 2
    %v1295 = vsel %vm1142, %v1292, %v1294
    %v1296 = vrot.slane %v1059, 2
    %v1297 = vsel %vm1142, %v1294, %v1296
    %v1298 = vrot.slane %v1060, 2
    %v1299 = vsel %vm1142, %v1296, %v1298
    %v1300 = vrot.slane %v1061, 2
    %v1301 = vsel %vm1142, %v1298, %v1300
    %v1302 = vrot.slane %v1062, 2
    %v1303 = vsel %vm1142, %v1300, %v1302
    %v1304 = vrot.slane %v1063, 2
    %v1305 = vsel %vm1142, %v1302, %v1304
    %v1306 = vrot.slane %v1064, 2
    %v1307 = vsel %vm1142, %v1304, %v1306
    %v1308 = vrot.slane %v1065, 2
    %v1309 = vsel %vm1142, %v1306, %v1308
    %v1310 = vrot.slane %v1066, 2
    %v1311 = vsel %vm1142, %v1308, %v1310
    %v1312 = vrot.slane %v1067, 2
    %v1313 = vsel %vm1142, %v1310, %v1312
    %1314 = vrot.lane.b32.xlu0 %v1293, 64
    %v1315 = vpop.permute.xlu0 %1314
    %1316 = vrot.lane.b32.xlu0 %v1295, 64
    %v1317 = vpop.permute.xlu0 %1316
    %1318 = vrot.lane.b32.xlu0 %v1297, 64
    %v1319 = vpop.permute.xlu0 %1318
    %1320 = vrot.lane.b32.xlu0 %v1299, 64
    %v1321 = vpop.permute.xlu0 %1320
    %1322 = vrot.lane.b32.xlu0 %v1301, 64
    %v1323 = vpop.permute.xlu0 %1322
    %1324 = vrot.lane.b32.xlu0 %v1303, 64
    %v1325 = vpop.permute.xlu0 %1324
    %1326 = vrot.lane.b32.xlu0 %v1305, 64
    %v1327 = vpop.permute.xlu0 %1326
    %1328 = vrot.lane.b32.xlu0 %v1307, 64
    %v1329 = vpop.permute.xlu0 %1328
    %1330 = vrot.lane.b32.xlu0 %v1309, 64
    %v1331 = vpop.permute.xlu0 %1330
    %1332 = vrot.lane.b32.xlu0 %v1311, 64
    %v1333 = vpop.permute.xlu0 %1332
    %1334 = vrot.lane.b32.xlu0 %v1313, 64
    %v1335 = vpop.permute.xlu0 %1334
    %v1347 = vsel %vm1199, %v1056, %v1259
    %v1348 = vsel %vm1199, %v1057, %v1261
    %v1349 = vsel %vm1199, %v1058, %v1263
    %v1350 = vsel %vm1199, %v1059, %v1265
    %v1351 = vsel %vm1199, %v1060, %v1267
    %v1352 = vsel %vm1199, %v1061, %v1269
    %v1353 = vsel %vm1199, %v1062, %v1271
    %v1354 = vsel %vm1199, %v1063, %v1273
    %v1355 = vsel %vm1199, %v1064, %v1275
    %v1356 = vsel %vm1199, %v1065, %v1277
    %v1357 = vsel %vm1199, %v1066, %v1279
    %v1358 = vsel %vm1211, %v1347, %v1315
    %v1359 = vsel %vm1211, %v1348, %v1317
    %v1360 = vsel %vm1211, %v1349, %v1319
    %v1361 = vsel %vm1211, %v1350, %v1321
    %v1362 = vsel %vm1211, %v1351, %v1323
    %v1363 = vsel %vm1211, %v1352, %v1325
    %v1364 = vsel %vm1211, %v1353, %v1327
    %v1365 = vsel %vm1211, %v1354, %v1329
    %v1366 = vsel %vm1211, %v1355, %v1331
    %v1367 = vsel %vm1211, %v1356, %v1333
    %v1368 = vsel %vm1211, %v1357, %v1335
    %v1370 = vperm.slane %v1072, 0
    %vm1372 = vcmask 785408
    %v1374 = vsel %vm1372, %v1212, 0
    %v1377 = vsel %vm1372, %v1213, 0
    %v1380 = vsel %vm1372, %v1214, 0
    %v1383 = vsel %vm1372, %v1215, 0
    %v1386 = vsel %vm1372, %v1216, 0
    %v1389 = vsel %vm1372, %v1217, 0
    %v1392 = vsel %vm1372, %v1218, 0
    %v1395 = vsel %vm1372, %v1219, 0
    %v1398 = vsel %vm1372, %v1220, 0
    %v1401 = vsel %vm1372, %v1221, 0
    %v1404 = vsel %vm1372, %v1222, 0
    %v1407 = vsel %vm1372, %v1358, 0
    %v1410 = vsel %vm1372, %v1359, 0
    %v1413 = vsel %vm1372, %v1360, 0
    %v1416 = vsel %vm1372, %v1361, 0
    %v1419 = vsel %vm1372, %v1362, 0
    %v1422 = vsel %vm1372, %v1363, 0
    %v1425 = vsel %vm1372, %v1364, 0
    %v1428 = vsel %vm1372, %v1365, 0
    %v1431 = vsel %vm1372, %v1366, 0
    %v1434 = vsel %vm1372, %v1367, 0
    %v1437 = vsel %vm1372, %v1368, 0
    %1439 = vmatpush.msra.mxu0 0.0
    %1440 = vmatpush.msra.mxu0 0.0
    %1441 = vmatpush.msra.mxu0 0.0
    %1442 = vmatpush.msra.mxu0 0.0
    %1443 = vmatpush.msra.mxu0 %v183
    %1444 = vmatpush.msra.mxu0 %v182
    %1445 = vmatpush.msra.mxu0 %v181
    %1446 = vmatpush.msra.mxu0 %v180
    %1447 = vmatpush.msra.mxu0 %v179
    %1448 = vmatpush.msra.mxu0 %v178
    %1449 = vmatpush.msra.mxu0 %v177
    %1450 = vmatpush.msra.mxu0 %v176
    %1451 = vmatpush.msra.mxu0 %v175
    %1452 = vmatpush.msra.mxu0 %v174
    %1453 = vmatpush.msra.mxu0 %v173
    %1454 = vmatpush.msra.mxu0 %v172
    %1455 = vmatmul.f32.gmra.mxu0 %v1374
    %v1456 = vpop.f32.mrf.mxu0
    %v1457 = vadd.f32 %v1370, %v1456
    %1458 = vmatmul.f32.gmra.mxu0 %v1377
    %v1459 = vpop.f32.mrf.mxu0
    %v1460 = vadd.f32 %v1370, %v1459
    %1461 = vmatmul.f32.gmra.mxu0 %v1380
    %v1462 = vpop.f32.mrf.mxu0
    %v1463 = vadd.f32 %v1370, %v1462
    %1464 = vmatmul.f32.gmra.mxu0 %v1383
    %v1465 = vpop.f32.mrf.mxu0
    %v1466 = vadd.f32 %v1370, %v1465
    %1467 = vmatmul.f32.gmra.mxu0 %v1386
    %v1468 = vpop.f32.mrf.mxu0
    %v1469 = vadd.f32 %v1370, %v1468
    %1470 = vmatmul.f32.gmra.mxu0 %v1389
    %v1471 = vpop.f32.mrf.mxu0
    %v1472 = vadd.f32 %v1370, %v1471
    %1473 = vmatmul.f32.gmra.mxu0 %v1392
    %v1474 = vpop.f32.mrf.mxu0
    %v1475 = vadd.f32 %v1370, %v1474
    %1476 = vmatmul.f32.gmra.mxu0 %v1395
    %v1477 = vpop.f32.mrf.mxu0
    %v1478 = vadd.f32 %v1370, %v1477
    %1479 = vmatmul.f32.gmra.mxu0 %v1398
    %v1480 = vpop.f32.mrf.mxu0
    %v1481 = vadd.f32 %v1370, %v1480
    %1482 = vmatmul.f32.gmra.mxu0 %v1401
    %v1483 = vpop.f32.mrf.mxu0
    %v1484 = vadd.f32 %v1370, %v1483
    %1485 = vmatmul.f32.gmra.mxu0 %v1404
    %v1486 = vpop.f32.mrf.mxu0
    %v1487 = vadd.f32 %v1370, %v1486
    %1488 = vmatmul.f32.gmra.mxu0 %v1407
    %v1489 = vpop.f32.mrf.mxu0
    %v1490 = vadd.f32 %v1370, %v1489
    %1491 = vmatmul.f32.gmra.mxu0 %v1410
    %v1492 = vpop.f32.mrf.mxu0
    %v1493 = vadd.f32 %v1370, %v1492
    %1494 = vmatmul.f32.gmra.mxu0 %v1413
    %v1495 = vpop.f32.mrf.mxu0
    %v1496 = vadd.f32 %v1370, %v1495
    %1497 = vmatmul.f32.gmra.mxu0 %v1416
    %v1498 = vpop.f32.mrf.mxu0
    %v1499 = vadd.f32 %v1370, %v1498
    %1500 = vmatmul.f32.gmra.mxu0 %v1419
    %v1501 = vpop.f32.mrf.mxu0
    %v1502 = vadd.f32 %v1370, %v1501
    %1503 = vmatmul.f32.gmra.mxu0 %v1422
    %v1504 = vpop.f32.mrf.mxu0
    %v1505 = vadd.f32 %v1370, %v1504
    %1506 = vmatmul.f32.gmra.mxu0 %v1425
    %v1507 = vpop.f32.mrf.mxu0
    %v1508 = vadd.f32 %v1370, %v1507
    %1509 = vmatmul.f32.gmra.mxu0 %v1428
    %v1510 = vpop.f32.mrf.mxu0
    %v1511 = vadd.f32 %v1370, %v1510
    %1512 = vmatmul.f32.gmra.mxu0 %v1431
    %v1513 = vpop.f32.mrf.mxu0
    %v1514 = vadd.f32 %v1370, %v1513
    %1515 = vmatmul.f32.gmra.mxu0 %v1434
    %v1516 = vpop.f32.mrf.mxu0
    %v1517 = vadd.f32 %v1370, %v1516
    %1518 = vmatmul.f32.gmra.mxu0 %v1437
    %v1519 = vpop.f32.mrf.mxu0
    %v1520 = vadd.f32 %v1370, %v1519
    %1521 = vdwg.mxu0
    %v1522 = vmax.f32 %v1457, 0.0
    %v1523 = vmax.f32 %v1460, 0.0
    %v1524 = vmax.f32 %v1463, 0.0
    %v1525 = vmax.f32 %v1466, 0.0
    %v1526 = vmax.f32 %v1469, 0.0
    %v1527 = vmax.f32 %v1472, 0.0
    %v1528 = vmax.f32 %v1475, 0.0
    %v1529 = vmax.f32 %v1478, 0.0
    %v1530 = vmax.f32 %v1481, 0.0
    %v1531 = vmax.f32 %v1484, 0.0
    %v1532 = vmax.f32 %v1487, 0.0
    %v1533 = vmax.f32 %v1490, 0.0
    %v1534 = vmax.f32 %v1493, 0.0
    %v1535 = vmax.f32 %v1496, 0.0
    %v1536 = vmax.f32 %v1499, 0.0
    %v1537 = vmax.f32 %v1502, 0.0
    %v1538 = vmax.f32 %v1505, 0.0
    %v1539 = vmax.f32 %v1508, 0.0
    %v1540 = vmax.f32 %v1511, 0.0
    %v1541 = vmax.f32 %v1514, 0.0
    %v1542 = vmax.f32 %v1517, 0.0
    %v1543 = vmax.f32 %v1520, 0.0
    %v1566 = vrot.slane %v1522, 2
    %v1567 = vrot.slane %v1522, 4
    %v1568 = vrot.slane %v1522, 6
    %v1569 = vrot.slane %v1523, 2
    %v1570 = vrot.slane %v1523, 4
    %v1571 = vrot.slane %v1523, 6
    %v1572 = vrot.slane %v1524, 2
    %v1573 = vrot.slane %v1524, 4
    %v1574 = vrot.slane %v1524, 6
    %v1575 = vrot.slane %v1525, 2
    %v1576 = vrot.slane %v1525, 4
    %v1577 = vrot.slane %v1525, 6
    %v1578 = vrot.slane %v1526, 2
    %v1579 = vrot.slane %v1526, 4
    %v1580 = vrot.slane %v1526, 6
    %v1581 = vrot.slane %v1527, 2
    %v1582 = vrot.slane %v1527, 4
    %v1583 = vrot.slane %v1527, 6
    %v1584 = vrot.slane %v1528, 2
    %v1585 = vrot.slane %v1528, 4
    %v1586 = vrot.slane %v1528, 6
    %v1587 = vrot.slane %v1529, 2
    %v1588 = vrot.slane %v1529, 4
    %v1589 = vrot.slane %v1529, 6
    %v1590 = vrot.slane %v1530, 2
    %v1591 = vrot.slane %v1530, 4
    %v1592 = vrot.slane %v1530, 6
    %v1593 = vrot.slane %v1531, 2
    %v1594 = vrot.slane %v1531, 4
    %v1595 = vrot.slane %v1531, 6
    %v1596 = vrot.slane %v1532, 2
    %v1597 = vrot.slane %v1532, 4
    %v1598 = vrot.slane %v1532, 6
    %v1599 = vrot.slane %v1533, 2
    %v1600 = vrot.slane %v1533, 4
    %v1601 = vrot.slane %v1533, 6
    %v1602 = vrot.slane %v1534, 2
    %v1603 = vrot.slane %v1534, 4
    %v1604 = vrot.slane %v1534, 6
    %v1605 = vrot.slane %v1535, 2
    %v1606 = vrot.slane %v1535, 4
    %v1607 = vrot.slane %v1535, 6
    %v1608 = vrot.slane %v1536, 2
    %v1609 = vrot.slane %v1536, 4
    %v1610 = vrot.slane %v1536, 6
    %v1611 = vrot.slane %v1537, 2
    %v1612 = vrot.slane %v1537, 4
    %v1613 = vrot.slane %v1537, 6
    %v1614 = vrot.slane %v1538, 2
    %v1615 = vrot.slane %v1538, 4
    %v1616 = vrot.slane %v1538, 6
    %v1617 = vrot.slane %v1539, 2
    %v1618 = vrot.slane %v1539, 4
    %v1619 = vrot.slane %v1539, 6
    %v1620 = vrot.slane %v1540, 2
    %v1621 = vrot.slane %v1540, 4
    %v1622 = vrot.slane %v1540, 6
    %v1623 = vrot.slane %v1541, 2
    %v1624 = vrot.slane %v1541, 4
    %v1625 = vrot.slane %v1541, 6
    %v1626 = vrot.slane %v1542, 2
    %v1627 = vrot.slane %v1542, 4
    %v1628 = vrot.slane %v1542, 6
    %v1629 = vrot.slane %v1543, 2
    %v1630 = vrot.slane %v1543, 4
    %v1631 = vrot.slane %v1543, 6
    %vm1698 = vcmask 1041408
    %v1699 = vsel %vm1698, %v1522, -inf
    %v1700 = vrot.slane %v1699, 4
    %v1701 = vmax.f32 %v1699, %v1700
    %v1702 = vrot.slane %v1701, 2
    %v1703 = vmax.f32 %v1701, %v1702
    %v1704 = vrot.slane %v1703, 1
    %v1705 = vmax.f32 %v1703, %v1704
    %v1706 = vsel %vm1698, %v1566, -inf
    %v1707 = vrot.slane %v1706, 4
    %v1708 = vmax.f32 %v1706, %v1707
    %v1709 = vrot.slane %v1708, 2
    %v1710 = vmax.f32 %v1708, %v1709
    %v1711 = vrot.slane %v1710, 1
    %v1712 = vmax.f32 %v1710, %v1711
    %v1713 = vsel %vm1698, %v1567, -inf
    %v1714 = vrot.slane %v1713, 4
    %v1715 = vmax.f32 %v1713, %v1714
    %v1716 = vrot.slane %v1715, 2
    %v1717 = vmax.f32 %v1715, %v1716
    %v1718 = vrot.slane %v1717, 1
    %v1719 = vmax.f32 %v1717, %v1718
    %v1720 = vsel %vm1698, %v1568, -inf
    %v1721 = vrot.slane %v1720, 4
    %v1722 = vmax.f32 %v1720, %v1721
    %v1723 = vrot.slane %v1722, 2
    %v1724 = vmax.f32 %v1722, %v1723
    %v1725 = vrot.slane %v1724, 1
    %v1726 = vmax.f32 %v1724, %v1725
    %v1727 = vsel %vm1698, %v1523, -inf
    %v1728 = vrot.slane %v1727, 4
    %v1729 = vmax.f32 %v1727, %v1728
    %v1730 = vrot.slane %v1729, 2
    %v1731 = vmax.f32 %v1729, %v1730
    %v1732 = vrot.slane %v1731, 1
    %v1733 = vmax.f32 %v1731, %v1732
    %v1734 = vsel %vm1698, %v1569, -inf
    %v1735 = vrot.slane %v1734, 4
    %v1736 = vmax.f32 %v1734, %v1735
    %v1737 = vrot.slane %v1736, 2
    %v1738 = vmax.f32 %v1736, %v1737
    %v1739 = vrot.slane %v1738, 1
    %v1740 = vmax.f32 %v1738, %v1739
    %v1741 = vsel %vm1698, %v1570, -inf
    %v1742 = vrot.slane %v1741, 4
    %v1743 = vmax.f32 %v1741, %v1742
    %v1744 = vrot.slane %v1743, 2
    %v1745 = vmax.f32 %v1743, %v1744
    %v1746 = vrot.slane %v1745, 1
    %v1747 = vmax.f32 %v1745, %v1746
    %v1748 = vsel %vm1698, %v1571, -inf
    %v1749 = vrot.slane %v1748, 4
    %v1750 = vmax.f32 %v1748, %v1749
    %v1751 = vrot.slane %v1750, 2
    %v1752 = vmax.f32 %v1750, %v1751
    %v1753 = vrot.slane %v1752, 1
    %v1754 = vmax.f32 %v1752, %v1753
    %v1755 = vsel %vm1698, %v1524, -inf
    %v1756 = vrot.slane %v1755, 4
    %v1757 = vmax.f32 %v1755, %v1756
    %v1758 = vrot.slane %v1757, 2
    %v1759 = vmax.f32 %v1757, %v1758
    %v1760 = vrot.slane %v1759, 1
    %v1761 = vmax.f32 %v1759, %v1760
    %v1762 = vsel %vm1698, %v1572, -inf
    %v1763 = vrot.slane %v1762, 4
    %v1764 = vmax.f32 %v1762, %v1763
    %v1765 = vrot.slane %v1764, 2
    %v1766 = vmax.f32 %v1764, %v1765
    %v1767 = vrot.slane %v1766, 1
    %v1768 = vmax.f32 %v1766, %v1767
    %v1769 = vsel %vm1698, %v1573, -inf
    %v1770 = vrot.slane %v1769, 4
    %v1771 = vmax.f32 %v1769, %v1770
    %v1772 = vrot.slane %v1771, 2
    %v1773 = vmax.f32 %v1771, %v1772
    %v1774 = vrot.slane %v1773, 1
    %v1775 = vmax.f32 %v1773, %v1774
    %v1776 = vsel %vm1698, %v1574, -inf
    %v1777 = vrot.slane %v1776, 4
    %v1778 = vmax.f32 %v1776, %v1777
    %v1779 = vrot.slane %v1778, 2
    %v1780 = vmax.f32 %v1778, %v1779
    %v1781 = vrot.slane %v1780, 1
    %v1782 = vmax.f32 %v1780, %v1781
    %v1783 = vsel %vm1698, %v1525, -inf
    %v1784 = vrot.slane %v1783, 4
    %v1785 = vmax.f32 %v1783, %v1784
    %v1786 = vrot.slane %v1785, 2
    %v1787 = vmax.f32 %v1785, %v1786
    %v1788 = vrot.slane %v1787, 1
    %v1789 = vmax.f32 %v1787, %v1788
    %v1790 = vsel %vm1698, %v1575, -inf
    %v1791 = vrot.slane %v1790, 4
    %v1792 = vmax.f32 %v1790, %v1791
    %v1793 = vrot.slane %v1792, 2
    %v1794 = vmax.f32 %v1792, %v1793
    %v1795 = vrot.slane %v1794, 1
    %v1796 = vmax.f32 %v1794, %v1795
    %v1797 = vsel %vm1698, %v1576, -inf
    %v1798 = vrot.slane %v1797, 4
    %v1799 = vmax.f32 %v1797, %v1798
    %v1800 = vrot.slane %v1799, 2
    %v1801 = vmax.f32 %v1799, %v1800
    %v1802 = vrot.slane %v1801, 1
    %v1803 = vmax.f32 %v1801, %v1802
    %v1804 = vsel %vm1698, %v1577, -inf
    %v1805 = vrot.slane %v1804, 4
    %v1806 = vmax.f32 %v1804, %v1805
    %v1807 = vrot.slane %v1806, 2
    %v1808 = vmax.f32 %v1806, %v1807
    %v1809 = vrot.slane %v1808, 1
    %v1810 = vmax.f32 %v1808, %v1809
    %v1811 = vsel %vm1698, %v1526, -inf
    %v1812 = vrot.slane %v1811, 4
    %v1813 = vmax.f32 %v1811, %v1812
    %v1814 = vrot.slane %v1813, 2
    %v1815 = vmax.f32 %v1813, %v1814
    %v1816 = vrot.slane %v1815, 1
    %v1817 = vmax.f32 %v1815, %v1816
    %v1818 = vsel %vm1698, %v1578, -inf
    %v1819 = vrot.slane %v1818, 4
    %v1820 = vmax.f32 %v1818, %v1819
    %v1821 = vrot.slane %v1820, 2
    %v1822 = vmax.f32 %v1820, %v1821
    %v1823 = vrot.slane %v1822, 1
    %v1824 = vmax.f32 %v1822, %v1823
    %v1825 = vsel %vm1698, %v1579, -inf
    %v1826 = vrot.slane %v1825, 4
    %v1827 = vmax.f32 %v1825, %v1826
    %v1828 = vrot.slane %v1827, 2
    %v1829 = vmax.f32 %v1827, %v1828
    %v1830 = vrot.slane %v1829, 1
    %v1831 = vmax.f32 %v1829, %v1830
    %v1832 = vsel %vm1698, %v1580, -inf
    %v1833 = vrot.slane %v1832, 4
    %v1834 = vmax.f32 %v1832, %v1833
    %v1835 = vrot.slane %v1834, 2
    %v1836 = vmax.f32 %v1834, %v1835
    %v1837 = vrot.slane %v1836, 1
    %v1838 = vmax.f32 %v1836, %v1837
    %v1839 = vsel %vm1698, %v1527, -inf
    %v1840 = vrot.slane %v1839, 4
    %v1841 = vmax.f32 %v1839, %v1840
    %v1842 = vrot.slane %v1841, 2
    %v1843 = vmax.f32 %v1841, %v1842
    %v1844 = vrot.slane %v1843, 1
    %v1845 = vmax.f32 %v1843, %v1844
    %v1846 = vsel %vm1698, %v1581, -inf
    %v1847 = vrot.slane %v1846, 4
    %v1848 = vmax.f32 %v1846, %v1847
    %v1849 = vrot.slane %v1848, 2
    %v1850 = vmax.f32 %v1848, %v1849
    %v1851 = vrot.slane %v1850, 1
    %v1852 = vmax.f32 %v1850, %v1851
    %v1853 = vsel %vm1698, %v1582, -inf
    %v1854 = vrot.slane %v1853, 4
    %v1855 = vmax.f32 %v1853, %v1854
    %v1856 = vrot.slane %v1855, 2
    %v1857 = vmax.f32 %v1855, %v1856
    %v1858 = vrot.slane %v1857, 1
    %v1859 = vmax.f32 %v1857, %v1858
    %v1860 = vsel %vm1698, %v1583, -inf
    %v1861 = vrot.slane %v1860, 4
    %v1862 = vmax.f32 %v1860, %v1861
    %v1863 = vrot.slane %v1862, 2
    %v1864 = vmax.f32 %v1862, %v1863
    %v1865 = vrot.slane %v1864, 1
    %v1866 = vmax.f32 %v1864, %v1865
    %v1867 = vsel %vm1698, %v1528, -inf
    %v1868 = vrot.slane %v1867, 4
    %v1869 = vmax.f32 %v1867, %v1868
    %v1870 = vrot.slane %v1869, 2
    %v1871 = vmax.f32 %v1869, %v1870
    %v1872 = vrot.slane %v1871, 1
    %v1873 = vmax.f32 %v1871, %v1872
    %v1874 = vsel %vm1698, %v1584, -inf
    %v1875 = vrot.slane %v1874, 4
    %v1876 = vmax.f32 %v1874, %v1875
    %v1877 = vrot.slane %v1876, 2
    %v1878 = vmax.f32 %v1876, %v1877
    %v1879 = vrot.slane %v1878, 1
    %v1880 = vmax.f32 %v1878, %v1879
    %v1881 = vsel %vm1698, %v1585, -inf
    %v1882 = vrot.slane %v1881, 4
    %v1883 = vmax.f32 %v1881, %v1882
    %v1884 = vrot.slane %v1883, 2
    %v1885 = vmax.f32 %v1883, %v1884
    %v1886 = vrot.slane %v1885, 1
    %v1887 = vmax.f32 %v1885, %v1886
    %v1888 = vsel %vm1698, %v1586, -inf
    %v1889 = vrot.slane %v1888, 4
    %v1890 = vmax.f32 %v1888, %v1889
    %v1891 = vrot.slane %v1890, 2
    %v1892 = vmax.f32 %v1890, %v1891
    %v1893 = vrot.slane %v1892, 1
    %v1894 = vmax.f32 %v1892, %v1893
    %v1895 = vsel %vm1698, %v1529, -inf
    %v1896 = vrot.slane %v1895, 4
    %v1897 = vmax.f32 %v1895, %v1896
    %v1898 = vrot.slane %v1897, 2
    %v1899 = vmax.f32 %v1897, %v1898
    %v1900 = vrot.slane %v1899, 1
    %v1901 = vmax.f32 %v1899, %v1900
    %v1902 = vsel %vm1698, %v1587, -inf
    %v1903 = vrot.slane %v1902, 4
    %v1904 = vmax.f32 %v1902, %v1903
    %v1905 = vrot.slane %v1904, 2
    %v1906 = vmax.f32 %v1904, %v1905
    %v1907 = vrot.slane %v1906, 1
    %v1908 = vmax.f32 %v1906, %v1907
    %v1909 = vsel %vm1698, %v1588, -inf
    %v1910 = vrot.slane %v1909, 4
    %v1911 = vmax.f32 %v1909, %v1910
    %v1912 = vrot.slane %v1911, 2
    %v1913 = vmax.f32 %v1911, %v1912
    %v1914 = vrot.slane %v1913, 1
    %v1915 = vmax.f32 %v1913, %v1914
    %v1916 = vsel %vm1698, %v1589, -inf
    %v1917 = vrot.slane %v1916, 4
    %v1918 = vmax.f32 %v1916, %v1917
    %v1919 = vrot.slane %v1918, 2
    %v1920 = vmax.f32 %v1918, %v1919
    %v1921 = vrot.slane %v1920, 1
    %v1922 = vmax.f32 %v1920, %v1921
    %v1923 = vsel %vm1698, %v1530, -inf
    %v1924 = vrot.slane %v1923, 4
    %v1925 = vmax.f32 %v1923, %v1924
    %v1926 = vrot.slane %v1925, 2
    %v1927 = vmax.f32 %v1925, %v1926
    %v1928 = vrot.slane %v1927, 1
    %v1929 = vmax.f32 %v1927, %v1928
    %v1930 = vsel %vm1698, %v1590, -inf
    %v1931 = vrot.slane %v1930, 4
    %v1932 = vmax.f32 %v1930, %v1931
    %v1933 = vrot.slane %v1932, 2
    %v1934 = vmax.f32 %v1932, %v1933
    %v1935 = vrot.slane %v1934, 1
    %v1936 = vmax.f32 %v1934, %v1935
    %v1937 = vsel %vm1698, %v1591, -inf
    %v1938 = vrot.slane %v1937, 4
    %v1939 = vmax.f32 %v1937, %v1938
    %v1940 = vrot.slane %v1939, 2
    %v1941 = vmax.f32 %v1939, %v1940
    %v1942 = vrot.slane %v1941, 1
    %v1943 = vmax.f32 %v1941, %v1942
    %v1944 = vsel %vm1698, %v1592, -inf
    %v1945 = vrot.slane %v1944, 4
    %v1946 = vmax.f32 %v1944, %v1945
    %v1947 = vrot.slane %v1946, 2
    %v1948 = vmax.f32 %v1946, %v1947
    %v1949 = vrot.slane %v1948, 1
    %v1950 = vmax.f32 %v1948, %v1949
    %v1951 = vsel %vm1698, %v1531, -inf
    %v1952 = vrot.slane %v1951, 4
    %v1953 = vmax.f32 %v1951, %v1952
    %v1954 = vrot.slane %v1953, 2
    %v1955 = vmax.f32 %v1953, %v1954
    %v1956 = vrot.slane %v1955, 1
    %v1957 = vmax.f32 %v1955, %v1956
    %v1958 = vsel %vm1698, %v1593, -inf
    %v1959 = vrot.slane %v1958, 4
    %v1960 = vmax.f32 %v1958, %v1959
    %v1961 = vrot.slane %v1960, 2
    %v1962 = vmax.f32 %v1960, %v1961
    %v1963 = vrot.slane %v1962, 1
    %v1964 = vmax.f32 %v1962, %v1963
    %v1965 = vsel %vm1698, %v1594, -inf
    %v1966 = vrot.slane %v1965, 4
    %v1967 = vmax.f32 %v1965, %v1966
    %v1968 = vrot.slane %v1967, 2
    %v1969 = vmax.f32 %v1967, %v1968
    %v1970 = vrot.slane %v1969, 1
    %v1971 = vmax.f32 %v1969, %v1970
    %v1972 = vsel %vm1698, %v1595, -inf
    %v1973 = vrot.slane %v1972, 4
    %v1974 = vmax.f32 %v1972, %v1973
    %v1975 = vrot.slane %v1974, 2
    %v1976 = vmax.f32 %v1974, %v1975
    %v1977 = vrot.slane %v1976, 1
    %v1978 = vmax.f32 %v1976, %v1977
    %v1979 = vsel %vm1698, %v1532, -inf
    %v1980 = vrot.slane %v1979, 4
    %v1981 = vmax.f32 %v1979, %v1980
    %v1982 = vrot.slane %v1981, 2
    %v1983 = vmax.f32 %v1981, %v1982
    %v1984 = vrot.slane %v1983, 1
    %v1985 = vmax.f32 %v1983, %v1984
    %v1986 = vsel %vm1698, %v1596, -inf
    %v1987 = vrot.slane %v1986, 4
    %v1988 = vmax.f32 %v1986, %v1987
    %v1989 = vrot.slane %v1988, 2
    %v1990 = vmax.f32 %v1988, %v1989
    %v1991 = vrot.slane %v1990, 1
    %v1992 = vmax.f32 %v1990, %v1991
    %v1993 = vsel %vm1698, %v1597, -inf
    %v1994 = vrot.slane %v1993, 4
    %v1995 = vmax.f32 %v1993, %v1994
    %v1996 = vrot.slane %v1995, 2
    %v1997 = vmax.f32 %v1995, %v1996
    %v1998 = vrot.slane %v1997, 1
    %v1999 = vmax.f32 %v1997, %v1998
    %v2000 = vsel %vm1698, %v1598, -inf
    %v2001 = vrot.slane %v2000, 4
    %v2002 = vmax.f32 %v2000, %v2001
    %v2003 = vrot.slane %v2002, 2
    %v2004 = vmax.f32 %v2002, %v2003
    %v2005 = vrot.slane %v2004, 1
    %v2006 = vmax.f32 %v2004, %v2005
    %v2007 = vsel %vm1698, %v1533, -inf
    %v2008 = vrot.slane %v2007, 4
    %v2009 = vmax.f32 %v2007, %v2008
    %v2010 = vrot.slane %v2009, 2
    %v2011 = vmax.f32 %v2009, %v2010
    %v2012 = vrot.slane %v2011, 1
    %v2013 = vmax.f32 %v2011, %v2012
    %v2014 = vsel %vm1698, %v1599, -inf
    %v2015 = vrot.slane %v2014, 4
    %v2016 = vmax.f32 %v2014, %v2015
    %v2017 = vrot.slane %v2016, 2
    %v2018 = vmax.f32 %v2016, %v2017
    %v2019 = vrot.slane %v2018, 1
    %v2020 = vmax.f32 %v2018, %v2019
    %v2021 = vsel %vm1698, %v1600, -inf
    %v2022 = vrot.slane %v2021, 4
    %v2023 = vmax.f32 %v2021, %v2022
    %v2024 = vrot.slane %v2023, 2
    %v2025 = vmax.f32 %v2023, %v2024
    %v2026 = vrot.slane %v2025, 1
    %v2027 = vmax.f32 %v2025, %v2026
    %v2028 = vsel %vm1698, %v1601, -inf
    %v2029 = vrot.slane %v2028, 4
    %v2030 = vmax.f32 %v2028, %v2029
    %v2031 = vrot.slane %v2030, 2
    %v2032 = vmax.f32 %v2030, %v2031
    %v2033 = vrot.slane %v2032, 1
    %v2034 = vmax.f32 %v2032, %v2033
    %v2035 = vsel %vm1698, %v1534, -inf
    %v2036 = vrot.slane %v2035, 4
    %v2037 = vmax.f32 %v2035, %v2036
    %v2038 = vrot.slane %v2037, 2
    %v2039 = vmax.f32 %v2037, %v2038
    %v2040 = vrot.slane %v2039, 1
    %v2041 = vmax.f32 %v2039, %v2040
    %v2042 = vsel %vm1698, %v1602, -inf
    %v2043 = vrot.slane %v2042, 4
    %v2044 = vmax.f32 %v2042, %v2043
    %v2045 = vrot.slane %v2044, 2
    %v2046 = vmax.f32 %v2044, %v2045
    %v2047 = vrot.slane %v2046, 1
    %v2048 = vmax.f32 %v2046, %v2047
    %v2049 = vsel %vm1698, %v1603, -inf
    %v2050 = vrot.slane %v2049, 4
    %v2051 = vmax.f32 %v2049, %v2050
    %v2052 = vrot.slane %v2051, 2
    %v2053 = vmax.f32 %v2051, %v2052
    %v2054 = vrot.slane %v2053, 1
    %v2055 = vmax.f32 %v2053, %v2054
    %v2056 = vsel %vm1698, %v1604, -inf
    %v2057 = vrot.slane %v2056, 4
    %v2058 = vmax.f32 %v2056, %v2057
    %v2059 = vrot.slane %v2058, 2
    %v2060 = vmax.f32 %v2058, %v2059
    %v2061 = vrot.slane %v2060, 1
    %v2062 = vmax.f32 %v2060, %v2061
    %v2063 = vsel %vm1698, %v1535, -inf
    %v2064 = vrot.slane %v2063, 4
    %v2065 = vmax.f32 %v2063, %v2064
    %v2066 = vrot.slane %v2065, 2
    %v2067 = vmax.f32 %v2065, %v2066
    %v2068 = vrot.slane %v2067, 1
    %v2069 = vmax.f32 %v2067, %v2068
    %v2070 = vsel %vm1698, %v1605, -inf
    %v2071 = vrot.slane %v2070, 4
    %v2072 = vmax.f32 %v2070, %v2071
    %v2073 = vrot.slane %v2072, 2
    %v2074 = vmax.f32 %v2072, %v2073
    %v2075 = vrot.slane %v2074, 1
    %v2076 = vmax.f32 %v2074, %v2075
    %v2077 = vsel %vm1698, %v1606, -inf
    %v2078 = vrot.slane %v2077, 4
    %v2079 = vmax.f32 %v2077, %v2078
    %v2080 = vrot.slane %v2079, 2
    %v2081 = vmax.f32 %v2079, %v2080
    %v2082 = vrot.slane %v2081, 1
    %v2083 = vmax.f32 %v2081, %v2082
    %v2084 = vsel %vm1698, %v1607, -inf
    %v2085 = vrot.slane %v2084, 4
    %v2086 = vmax.f32 %v2084, %v2085
    %v2087 = vrot.slane %v2086, 2
    %v2088 = vmax.f32 %v2086, %v2087
    %v2089 = vrot.slane %v2088, 1
    %v2090 = vmax.f32 %v2088, %v2089
    %v2091 = vsel %vm1698, %v1536, -inf
    %v2092 = vrot.slane %v2091, 4
    %v2093 = vmax.f32 %v2091, %v2092
    %v2094 = vrot.slane %v2093, 2
    %v2095 = vmax.f32 %v2093, %v2094
    %v2096 = vrot.slane %v2095, 1
    %v2097 = vmax.f32 %v2095, %v2096
    %v2098 = vsel %vm1698, %v1608, -inf
    %v2099 = vrot.slane %v2098, 4
    %v2100 = vmax.f32 %v2098, %v2099
    %v2101 = vrot.slane %v2100, 2
    %v2102 = vmax.f32 %v2100, %v2101
    %v2103 = vrot.slane %v2102, 1
    %v2104 = vmax.f32 %v2102, %v2103
    %v2105 = vsel %vm1698, %v1609, -inf
    %v2106 = vrot.slane %v2105, 4
    %v2107 = vmax.f32 %v2105, %v2106
    %v2108 = vrot.slane %v2107, 2
    %v2109 = vmax.f32 %v2107, %v2108
    %v2110 = vrot.slane %v2109, 1
    %v2111 = vmax.f32 %v2109, %v2110
    %v2112 = vsel %vm1698, %v1610, -inf
    %v2113 = vrot.slane %v2112, 4
    %v2114 = vmax.f32 %v2112, %v2113
    %v2115 = vrot.slane %v2114, 2
    %v2116 = vmax.f32 %v2114, %v2115
    %v2117 = vrot.slane %v2116, 1
    %v2118 = vmax.f32 %v2116, %v2117
    %v2119 = vsel %vm1698, %v1537, -inf
    %v2120 = vrot.slane %v2119, 4
    %v2121 = vmax.f32 %v2119, %v2120
    %v2122 = vrot.slane %v2121, 2
    %v2123 = vmax.f32 %v2121, %v2122
    %v2124 = vrot.slane %v2123, 1
    %v2125 = vmax.f32 %v2123, %v2124
    %v2126 = vsel %vm1698, %v1611, -inf
    %v2127 = vrot.slane %v2126, 4
    %v2128 = vmax.f32 %v2126, %v2127
    %v2129 = vrot.slane %v2128, 2
    %v2130 = vmax.f32 %v2128, %v2129
    %v2131 = vrot.slane %v2130, 1
    %v2132 = vmax.f32 %v2130, %v2131
    %v2133 = vsel %vm1698, %v1612, -inf
    %v2134 = vrot.slane %v2133, 4
    %v2135 = vmax.f32 %v2133, %v2134
    %v2136 = vrot.slane %v2135, 2
    %v2137 = vmax.f32 %v2135, %v2136
    %v2138 = vrot.slane %v2137, 1
    %v2139 = vmax.f32 %v2137, %v2138
    %v2140 = vsel %vm1698, %v1613, -inf
    %v2141 = vrot.slane %v2140, 4
    %v2142 = vmax.f32 %v2140, %v2141
    %v2143 = vrot.slane %v2142, 2
    %v2144 = vmax.f32 %v2142, %v2143
    %v2145 = vrot.slane %v2144, 1
    %v2146 = vmax.f32 %v2144, %v2145
    %v2147 = vsel %vm1698, %v1538, -inf
    %v2148 = vrot.slane %v2147, 4
    %v2149 = vmax.f32 %v2147, %v2148
    %v2150 = vrot.slane %v2149, 2
    %v2151 = vmax.f32 %v2149, %v2150
    %v2152 = vrot.slane %v2151, 1
    %v2153 = vmax.f32 %v2151, %v2152
    %v2154 = vsel %vm1698, %v1614, -inf
    %v2155 = vrot.slane %v2154, 4
    %v2156 = vmax.f32 %v2154, %v2155
    %v2157 = vrot.slane %v2156, 2
    %v2158 = vmax.f32 %v2156, %v2157
    %v2159 = vrot.slane %v2158, 1
    %v2160 = vmax.f32 %v2158, %v2159
    %v2161 = vsel %vm1698, %v1615, -inf
    %v2162 = vrot.slane %v2161, 4
    %v2163 = vmax.f32 %v2161, %v2162
    %v2164 = vrot.slane %v2163, 2
    %v2165 = vmax.f32 %v2163, %v2164
    %v2166 = vrot.slane %v2165, 1
    %v2167 = vmax.f32 %v2165, %v2166
    %v2168 = vsel %vm1698, %v1616, -inf
    %v2169 = vrot.slane %v2168, 4
    %v2170 = vmax.f32 %v2168, %v2169
    %v2171 = vrot.slane %v2170, 2
    %v2172 = vmax.f32 %v2170, %v2171
    %v2173 = vrot.slane %v2172, 1
    %v2174 = vmax.f32 %v2172, %v2173
    %v2175 = vsel %vm1698, %v1539, -inf
    %v2176 = vrot.slane %v2175, 4
    %v2177 = vmax.f32 %v2175, %v2176
    %v2178 = vrot.slane %v2177, 2
    %v2179 = vmax.f32 %v2177, %v2178
    %v2180 = vrot.slane %v2179, 1
    %v2181 = vmax.f32 %v2179, %v2180
    %v2182 = vsel %vm1698, %v1617, -inf
    %v2183 = vrot.slane %v2182, 4
    %v2184 = vmax.f32 %v2182, %v2183
    %v2185 = vrot.slane %v2184, 2
    %v2186 = vmax.f32 %v2184, %v2185
    %v2187 = vrot.slane %v2186, 1
    %v2188 = vmax.f32 %v2186, %v2187
    %v2189 = vsel %vm1698, %v1618, -inf
    %v2190 = vrot.slane %v2189, 4
    %v2191 = vmax.f32 %v2189, %v2190
    %v2192 = vrot.slane %v2191, 2
    %v2193 = vmax.f32 %v2191, %v2192
    %v2194 = vrot.slane %v2193, 1
    %v2195 = vmax.f32 %v2193, %v2194
    %v2196 = vsel %vm1698, %v1619, -inf
    %v2197 = vrot.slane %v2196, 4
    %v2198 = vmax.f32 %v2196, %v2197
    %v2199 = vrot.slane %v2198, 2
    %v2200 = vmax.f32 %v2198, %v2199
    %v2201 = vrot.slane %v2200, 1
    %v2202 = vmax.f32 %v2200, %v2201
    %v2203 = vsel %vm1698, %v1540, -inf
    %v2204 = vrot.slane %v2203, 4
    %v2205 = vmax.f32 %v2203, %v2204
    %v2206 = vrot.slane %v2205, 2
    %v2207 = vmax.f32 %v2205, %v2206
    %v2208 = vrot.slane %v2207, 1
    %v2209 = vmax.f32 %v2207, %v2208
    %v2210 = vsel %vm1698, %v1620, -inf
    %v2211 = vrot.slane %v2210, 4
    %v2212 = vmax.f32 %v2210, %v2211
    %v2213 = vrot.slane %v2212, 2
    %v2214 = vmax.f32 %v2212, %v2213
    %v2215 = vrot.slane %v2214, 1
    %v2216 = vmax.f32 %v2214, %v2215
    %v2217 = vsel %vm1698, %v1621, -inf
    %v2218 = vrot.slane %v2217, 4
    %v2219 = vmax.f32 %v2217, %v2218
    %v2220 = vrot.slane %v2219, 2
    %v2221 = vmax.f32 %v2219, %v2220
    %v2222 = vrot.slane %v2221, 1
    %v2223 = vmax.f32 %v2221, %v2222
    %v2224 = vsel %vm1698, %v1622, -inf
    %v2225 = vrot.slane %v2224, 4
    %v2226 = vmax.f32 %v2224, %v2225
    %v2227 = vrot.slane %v2226, 2
    %v2228 = vmax.f32 %v2226, %v2227
    %v2229 = vrot.slane %v2228, 1
    %v2230 = vmax.f32 %v2228, %v2229
    %v2231 = vsel %vm1698, %v1541, -inf
    %v2232 = vrot.slane %v2231, 4
    %v2233 = vmax.f32 %v2231, %v2232
    %v2234 = vrot.slane %v2233, 2
    %v2235 = vmax.f32 %v2233, %v2234
    %v2236 = vrot.slane %v2235, 1
    %v2237 = vmax.f32 %v2235, %v2236
    %v2238 = vsel %vm1698, %v1623, -inf
    %v2239 = vrot.slane %v2238, 4
    %v2240 = vmax.f32 %v2238, %v2239
    %v2241 = vrot.slane %v2240, 2
    %v2242 = vmax.f32 %v2240, %v2241
    %v2243 = vrot.slane %v2242, 1
    %v2244 = vmax.f32 %v2242, %v2243
    %v2245 = vsel %vm1698, %v1624, -inf
    %v2246 = vrot.slane %v2245, 4
    %v2247 = vmax.f32 %v2245, %v2246
    %v2248 = vrot.slane %v2247, 2
    %v2249 = vmax.f32 %v2247, %v2248
    %v2250 = vrot.slane %v2249, 1
    %v2251 = vmax.f32 %v2249, %v2250
    %v2252 = vsel %vm1698, %v1625, -inf
    %v2253 = vrot.slane %v2252, 4
    %v2254 = vmax.f32 %v2252, %v2253
    %v2255 = vrot.slane %v2254, 2
    %v2256 = vmax.f32 %v2254, %v2255
    %v2257 = vrot.slane %v2256, 1
    %v2258 = vmax.f32 %v2256, %v2257
    %v2259 = vsel %vm1698, %v1542, -inf
    %v2260 = vrot.slane %v2259, 4
    %v2261 = vmax.f32 %v2259, %v2260
    %v2262 = vrot.slane %v2261, 2
    %v2263 = vmax.f32 %v2261, %v2262
    %v2264 = vrot.slane %v2263, 1
    %v2265 = vmax.f32 %v2263, %v2264
    %v2266 = vsel %vm1698, %v1626, -inf
    %v2267 = vrot.slane %v2266, 4
    %v2268 = vmax.f32 %v2266, %v2267
    %v2269 = vrot.slane %v2268, 2
    %v2270 = vmax.f32 %v2268, %v2269
    %v2271 = vrot.slane %v2270, 1
    %v2272 = vmax.f32 %v2270, %v2271
    %v2273 = vsel %vm1698, %v1627, -inf
    %v2274 = vrot.slane %v2273, 4
    %v2275 = vmax.f32 %v2273, %v2274
    %v2276 = vrot.slane %v2275, 2
    %v2277 = vmax.f32 %v2275, %v2276
    %v2278 = vrot.slane %v2277, 1
    %v2279 = vmax.f32 %v2277, %v2278
    %v2280 = vsel %vm1698, %v1628, -inf
    %v2281 = vrot.slane %v2280, 4
    %v2282 = vmax.f32 %v2280, %v2281
    %v2283 = vrot.slane %v2282, 2
    %v2284 = vmax.f32 %v2282, %v2283
    %v2285 = vrot.slane %v2284, 1
    %v2286 = vmax.f32 %v2284, %v2285
    %v2287 = vsel %vm1698, %v1543, -inf
    %v2288 = vrot.slane %v2287, 4
    %v2289 = vmax.f32 %v2287, %v2288
    %v2290 = vrot.slane %v2289, 2
    %v2291 = vmax.f32 %v2289, %v2290
    %v2292 = vrot.slane %v2291, 1
    %v2293 = vmax.f32 %v2291, %v2292
    %v2294 = vsel %vm1698, %v1629, -inf
    %v2295 = vrot.slane %v2294, 4
    %v2296 = vmax.f32 %v2294, %v2295
    %v2297 = vrot.slane %v2296, 2
    %v2298 = vmax.f32 %v2296, %v2297
    %v2299 = vrot.slane %v2298, 1
    %v2300 = vmax.f32 %v2298, %v2299
    %v2301 = vsel %vm1698, %v1630, -inf
    %v2302 = vrot.slane %v2301, 4
    %v2303 = vmax.f32 %v2301, %v2302
    %v2304 = vrot.slane %v2303, 2
    %v2305 = vmax.f32 %v2303, %v2304
    %v2306 = vrot.slane %v2305, 1
    %v2307 = vmax.f32 %v2305, %v2306
    %v2308 = vsel %vm1698, %v1631, -inf
    %v2309 = vrot.slane %v2308, 4
    %v2310 = vmax.f32 %v2308, %v2309
    %v2311 = vrot.slane %v2310, 2
    %v2312 = vmax.f32 %v2310, %v2311
    %v2313 = vrot.slane %v2312, 1
    %v2314 = vmax.f32 %v2312, %v2313
    %v2315 = vld [vmem:[#allocation10] sm:$0x1]
    %vm2358 = vcmask 1041409
    %v2359 = vsel %vm2358, %v1712, %v1705
    %vm2360 = vcmask 1042434
    %v2361 = vsel %vm2360, %v1719, %v2359
    %vm2362 = vcmask 1043459
    %v2363 = vsel %vm2362, %v1726, %v2361
    %vm2364 = vcmask 1044484
    %v2365 = vsel %vm2364, %v1733, %v2363
    %vm2366 = vcmask 1045509
    %v2367 = vsel %vm2366, %v1740, %v2365
    %vm2368 = vcmask 1046534
    %v2369 = vsel %vm2368, %v1747, %v2367
    %vm2370 = vcmask 1047559
    %v2371 = vsel %vm2370, %v1754, %v2369
    %v2372 = vsel %vm2358, %v1768, %v1761
    %v2373 = vsel %vm2360, %v1775, %v2372
    %v2374 = vsel %vm2362, %v1782, %v2373
    %v2375 = vsel %vm2364, %v1789, %v2374
    %v2376 = vsel %vm2366, %v1796, %v2375
    %v2377 = vsel %vm2368, %v1803, %v2376
    %v2378 = vsel %vm2370, %v1810, %v2377
    %v2379 = vsel %vm2358, %v1824, %v1817
    %v2380 = vsel %vm2360, %v1831, %v2379
    %v2381 = vsel %vm2362, %v1838, %v2380
    %v2382 = vsel %vm2364, %v1845, %v2381
    %v2383 = vsel %vm2366, %v1852, %v2382
    %v2384 = vsel %vm2368, %v1859, %v2383
    %v2385 = vsel %vm2370, %v1866, %v2384
    %v2386 = vsel %vm2358, %v1880, %v1873
    %v2387 = vsel %vm2360, %v1887, %v2386
    %v2388 = vsel %vm2362, %v1894, %v2387
    %v2389 = vsel %vm2364, %v1901, %v2388
    %v2390 = vsel %vm2366, %v1908, %v2389
    %v2391 = vsel %vm2368, %v1915, %v2390
    %v2392 = vsel %vm2370, %v1922, %v2391
    %v2393 = vsel %vm2358, %v1936, %v1929
    %v2394 = vsel %vm2360, %v1943, %v2393
    %v2395 = vsel %vm2362, %v1950, %v2394
    %v2396 = vsel %vm2364, %v1957, %v2395
    %v2397 = vsel %vm2366, %v1964, %v2396
    %v2398 = vsel %vm2368, %v1971, %v2397
    %v2399 = vsel %vm2370, %v1978, %v2398
    %v2400 = vsel %vm2358, %v1992, %v1985
    %v2408 = vsel %vm2358, %v1719, %v1712
    %v2409 = vsel %vm2360, %v1726, %v2408
    %v2410 = vsel %vm2362, %v1733, %v2409
    %v2411 = vsel %vm2364, %v1740, %v2410
    %v2412 = vsel %vm2366, %v1747, %v2411
    %v2413 = vsel %vm2368, %v1754, %v2412
    %v2414 = vsel %vm2370, %v1761, %v2413
    %v2415 = vsel %vm2358, %v1775, %v1768
    %v2416 = vsel %vm2360, %v1782, %v2415
    %v2417 = vsel %vm2362, %v1789, %v2416
    %v2418 = vsel %vm2364, %v1796, %v2417
    %v2419 = vsel %vm2366, %v1803, %v2418
    %v2420 = vsel %vm2368, %v1810, %v2419
    %v2421 = vsel %vm2370, %v1817, %v2420
    %v2422 = vsel %vm2358, %v1831, %v1824
    %v2423 = vsel %vm2360, %v1838, %v2422
    %v2424 = vsel %vm2362, %v1845, %v2423
    %v2425 = vsel %vm2364, %v1852, %v2424
    %v2426 = vsel %vm2366, %v1859, %v2425
    %v2427 = vsel %vm2368, %v1866, %v2426
    %v2428 = vsel %vm2370, %v1873, %v2427
    %v2429 = vsel %vm2358, %v1887, %v1880
    %v2430 = vsel %vm2360, %v1894, %v2429
    %v2431 = vsel %vm2362, %v1901, %v2430
    %v2432 = vsel %vm2364, %v1908, %v2431
    %v2433 = vsel %vm2366, %v1915, %v2432
    %v2434 = vsel %vm2368, %v1922, %v2433
    %v2435 = vsel %vm2370, %v1929, %v2434
    %v2436 = vsel %vm2358, %v1943, %v1936
    %v2437 = vsel %vm2360, %v1950, %v2436
    %v2438 = vsel %vm2362, %v1957, %v2437
    %v2439 = vsel %vm2364, %v1964, %v2438
    %v2440 = vsel %vm2366, %v1971, %v2439
    %v2441 = vsel %vm2368, %v1978, %v2440
    %v2442 = vsel %vm2370, %v1985, %v2441
    %v2443 = vsel %vm2358, %v1999, %v1992
    %v2451 = vsel %vm2358, %v1726, %v1719
    %v2452 = vsel %vm2360, %v1733, %v2451
    %v2453 = vsel %vm2362, %v1740, %v2452
    %v2454 = vsel %vm2364, %v1747, %v2453
    %v2455 = vsel %vm2366, %v1754, %v2454
    %v2456 = vsel %vm2368, %v1761, %v2455
    %v2457 = vsel %vm2370, %v1768, %v2456
    %v2458 = vsel %vm2358, %v1782, %v1775
    %v2459 = vsel %vm2360, %v1789, %v2458
    %v2460 = vsel %vm2362, %v1796, %v2459
    %v2461 = vsel %vm2364, %v1803, %v2460
    %v2462 = vsel %vm2366, %v1810, %v2461
    %v2463 = vsel %vm2368, %v1817, %v2462
    %v2464 = vsel %vm2370, %v1824, %v2463
    %v2465 = vsel %vm2358, %v1838, %v1831
    %v2466 = vsel %vm2360, %v1845, %v2465
    %v2467 = vsel %vm2362, %v1852, %v2466
    %v2468 = vsel %vm2364, %v1859, %v2467
    %v2469 = vsel %vm2366, %v1866, %v2468
    %v2470 = vsel %vm2368, %v1873, %v2469
    %v2471 = vsel %vm2370, %v1880, %v2470
    %v2472 = vsel %vm2358, %v1894, %v1887
    %v2473 = vsel %vm2360, %v1901, %v2472
    %v2474 = vsel %vm2362, %v1908, %v2473
    %v2475 = vsel %vm2364, %v1915, %v2474
    %v2476 = vsel %vm2366, %v1922, %v2475
    %v2477 = vsel %vm2368, %v1929, %v2476
    %v2478 = vsel %vm2370, %v1936, %v2477
    %v2479 = vsel %vm2358, %v1950, %v1943
    %v2480 = vsel %vm2360, %v1957, %v2479
    %v2481 = vsel %vm2362, %v1964, %v2480
    %v2482 = vsel %vm2364, %v1971, %v2481
    %v2483 = vsel %vm2366, %v1978, %v2482
    %v2484 = vsel %vm2368, %v1985, %v2483
    %v2485 = vsel %vm2370, %v1992, %v2484
    %v2486 = vsel %vm2358, %v2006, %v1999
    %v2535 = vsel %vm2358, %v2020, %v2013
    %v2536 = vsel %vm2360, %v2027, %v2535
    %v2537 = vsel %vm2362, %v2034, %v2536
    %v2538 = vsel %vm2364, %v2041, %v2537
    %v2539 = vsel %vm2366, %v2048, %v2538
    %v2540 = vsel %vm2368, %v2055, %v2539
    %v2541 = vsel %vm2370, %v2062, %v2540
    %v2542 = vsel %vm2358, %v2076, %v2069
    %v2543 = vsel %vm2360, %v2083, %v2542
    %v2544 = vsel %vm2362, %v2090, %v2543
    %v2545 = vsel %vm2364, %v2097, %v2544
    %v2546 = vsel %vm2366, %v2104, %v2545
    %v2547 = vsel %vm2368, %v2111, %v2546
    %v2548 = vsel %vm2370, %v2118, %v2547
    %v2549 = vsel %vm2358, %v2132, %v2125
    %v2550 = vsel %vm2360, %v2139, %v2549
    %v2551 = vsel %vm2362, %v2146, %v2550
    %v2552 = vsel %vm2364, %v2153, %v2551
    %v2553 = vsel %vm2366, %v2160, %v2552
    %v2554 = vsel %vm2368, %v2167, %v2553
    %v2555 = vsel %vm2370, %v2174, %v2554
    %v2556 = vsel %vm2358, %v2188, %v2181
    %v2557 = vsel %vm2360, %v2195, %v2556
    %v2558 = vsel %vm2362, %v2202, %v2557
    %v2559 = vsel %vm2364, %v2209, %v2558
    %v2560 = vsel %vm2366, %v2216, %v2559
    %v2561 = vsel %vm2368, %v2223, %v2560
    %v2562 = vsel %vm2370, %v2230, %v2561
    %v2563 = vsel %vm2358, %v2244, %v2237
    %v2564 = vsel %vm2360, %v2251, %v2563
    %v2565 = vsel %vm2362, %v2258, %v2564
    %v2566 = vsel %vm2364, %v2265, %v2565
    %v2567 = vsel %vm2366, %v2272, %v2566
    %v2568 = vsel %vm2368, %v2279, %v2567
    %v2569 = vsel %vm2370, %v2286, %v2568
    %v2570 = vsel %vm2358, %v2300, %v2293
    %v2572 = vsel %vm2358, %v2027, %v2020
    %v2573 = vsel %vm2360, %v2034, %v2572
    %v2574 = vsel %vm2362, %v2041, %v2573
    %v2575 = vsel %vm2364, %v2048, %v2574
    %v2576 = vsel %vm2366, %v2055, %v2575
    %v2577 = vsel %vm2368, %v2062, %v2576
    %v2578 = vsel %vm2370, %v2069, %v2577
    %v2579 = vsel %vm2358, %v2083, %v2076
    %v2580 = vsel %vm2360, %v2090, %v2579
    %v2581 = vsel %vm2362, %v2097, %v2580
    %v2582 = vsel %vm2364, %v2104, %v2581
    %v2583 = vsel %vm2366, %v2111, %v2582
    %v2584 = vsel %vm2368, %v2118, %v2583
    %v2585 = vsel %vm2370, %v2125, %v2584
    %v2586 = vsel %vm2358, %v2139, %v2132
    %v2587 = vsel %vm2360, %v2146, %v2586
    %v2588 = vsel %vm2362, %v2153, %v2587
    %v2589 = vsel %vm2364, %v2160, %v2588
    %v2590 = vsel %vm2366, %v2167, %v2589
    %v2591 = vsel %vm2368, %v2174, %v2590
    %v2592 = vsel %vm2370, %v2181, %v2591
    %v2593 = vsel %vm2358, %v2195, %v2188
    %v2594 = vsel %vm2360, %v2202, %v2593
    %v2595 = vsel %vm2362, %v2209, %v2594
    %v2596 = vsel %vm2364, %v2216, %v2595
    %v2597 = vsel %vm2366, %v2223, %v2596
    %v2598 = vsel %vm2368, %v2230, %v2597
    %v2599 = vsel %vm2370, %v2237, %v2598
    %v2600 = vsel %vm2358, %v2251, %v2244
    %v2601 = vsel %vm2360, %v2258, %v2600
    %v2602 = vsel %vm2362, %v2265, %v2601
    %v2603 = vsel %vm2364, %v2272, %v2602
    %v2604 = vsel %vm2366, %v2279, %v2603
    %v2605 = vsel %vm2368, %v2286, %v2604
    %v2606 = vsel %vm2370, %v2293, %v2605
    %v2607 = vsel %vm2358, %v2307, %v2300
    %v2609 = vsel %vm2358, %v2034, %v2027
    %v2610 = vsel %vm2360, %v2041, %v2609
    %v2611 = vsel %vm2362, %v2048, %v2610
    %v2612 = vsel %vm2364, %v2055, %v2611
    %v2613 = vsel %vm2366, %v2062, %v2612
    %v2614 = vsel %vm2368, %v2069, %v2613
    %v2615 = vsel %vm2370, %v2076, %v2614
    %v2616 = vsel %vm2358, %v2090, %v2083
    %v2617 = vsel %vm2360, %v2097, %v2616
    %v2618 = vsel %vm2362, %v2104, %v2617
    %v2619 = vsel %vm2364, %v2111, %v2618
    %v2620 = vsel %vm2366, %v2118, %v2619
    %v2621 = vsel %vm2368, %v2125, %v2620
    %v2622 = vsel %vm2370, %v2132, %v2621
    %v2623 = vsel %vm2358, %v2146, %v2139
    %v2624 = vsel %vm2360, %v2153, %v2623
    %v2625 = vsel %vm2362, %v2160, %v2624
    %v2626 = vsel %vm2364, %v2167, %v2625
    %v2627 = vsel %vm2366, %v2174, %v2626
    %v2628 = vsel %vm2368, %v2181, %v2627
    %v2629 = vsel %vm2370, %v2188, %v2628
    %v2630 = vsel %vm2358, %v2202, %v2195
    %v2631 = vsel %vm2360, %v2209, %v2630
    %v2632 = vsel %vm2362, %v2216, %v2631
    %v2633 = vsel %vm2364, %v2223, %v2632
    %v2634 = vsel %vm2366, %v2230, %v2633
    %v2635 = vsel %vm2368, %v2237, %v2634
    %v2636 = vsel %vm2370, %v2244, %v2635
    %v2637 = vsel %vm2358, %v2258, %v2251
    %v2638 = vsel %vm2360, %v2265, %v2637
    %v2639 = vsel %vm2362, %v2272, %v2638
    %v2640 = vsel %vm2364, %v2279, %v2639
    %v2641 = vsel %vm2366, %v2286, %v2640
    %v2642 = vsel %vm2368, %v2293, %v2641
    %v2643 = vsel %vm2370, %v2300, %v2642
    %v2644 = vsel %vm2358, %v2314, %v2307
    %v2645 = vrot.slane %v2541, 6
    %v2646 = vrot.slane %v2578, 6
    %v2647 = vrot.slane %v2615, 6
    %v2648 = vrot.slane %v2548, 6
    %v2649 = vsel %vm1698, %v2645, %v2648
    %v2650 = vrot.slane %v2585, 6
    %v2651 = vsel %vm1698, %v2646, %v2650
    %v2652 = vrot.slane %v2622, 6
    %v2653 = vsel %vm1698, %v2647, %v2652
    %v2654 = vrot.slane %v2555, 6
    %v2655 = vsel %vm1698, %v2648, %v2654
    %v2656 = vrot.slane %v2592, 6
    %v2657 = vsel %vm1698, %v2650, %v2656
    %v2658 = vrot.slane %v2629, 6
    %v2659 = vsel %vm1698, %v2652, %v2658
    %v2660 = vrot.slane %v2562, 6
    %v2661 = vsel %vm1698, %v2654, %v2660
    %v2662 = vrot.slane %v2599, 6
    %v2663 = vsel %vm1698, %v2656, %v2662
    %v2664 = vrot.slane %v2636, 6
    %v2665 = vsel %vm1698, %v2658, %v2664
    %v2666 = vrot.slane %v2569, 6
    %v2667 = vsel %vm1698, %v2660, %v2666
    %v2668 = vrot.slane %v2606, 6
    %v2669 = vsel %vm1698, %v2662, %v2668
    %v2670 = vrot.slane %v2643, 6
    %v2671 = vsel %vm1698, %v2664, %v2670
    %v2672 = vrot.slane %v2570, 6
    %v2673 = vsel %vm1698, %v2666, %v2672
    %v2674 = vrot.slane %v2607, 6
    %v2675 = vsel %vm1698, %v2668, %v2674
    %v2676 = vrot.slane %v2644, 6
    %v2677 = vsel %vm1698, %v2670, %v2676
    %v2696 = vsel %vm1698, %v2400, %v2645
    %v2697 = vsel %vm1698, %v2443, %v2646
    %v2698 = vsel %vm1698, %v2486, %v2647
    %v2700 = vperm.slane %v2315, 0
    %2702 = vmatpush.msra.mxu0 %v247
    %2703 = vmatpush.msra.mxu0 %v246
    %2704 = vmatpush.msra.mxu0 %v245
    %2705 = vmatpush.msra.mxu0 %v244
    %2706 = vmatpush.msra.mxu0 %v243
    %2707 = vmatpush.msra.mxu0 %v242
    %2708 = vmatpush.msra.mxu0 %v241
    %2709 = vmatpush.msra.mxu0 %v240
    %2710 = vmatpush.msra.mxu0 %v239
    %2711 = vmatpush.msra.mxu0 %v238
    %2712 = vmatpush.msra.mxu0 %v237
    %2713 = vmatpush.msra.mxu0 %v236
    %2714 = vmatpush.msra.mxu0 %v235
    %2715 = vmatpush.msra.mxu0 %v234
    %2716 = vmatpush.msra.mxu0 %v233
    %2717 = vmatpush.msra.mxu0 %v232
    %2718 = vmatmul.f32.gmra.mxu0 %v2371
    %v2719 = vpop.f32.mrf.mxu0
    %v2720 = vadd.f32 %v2700, %v2719
    %2721 = vmatmul.f32.gmra.mxu0 %v2378
    %v2722 = vpop.f32.mrf.mxu0
    %v2723 = vadd.f32 %v2700, %v2722
    %2724 = vmatmul.f32.gmra.mxu0 %v2385
    %v2725 = vpop.f32.mrf.mxu0
    %v2726 = vadd.f32 %v2700, %v2725
    %2727 = vmatmul.f32.gmra.mxu0 %v2392
    %v2728 = vpop.f32.mrf.mxu0
    %v2729 = vadd.f32 %v2700, %v2728
    %2730 = vmatmul.f32.gmra.mxu0 %v2399
    %v2731 = vpop.f32.mrf.mxu0
    %v2732 = vadd.f32 %v2700, %v2731
    %2733 = vmatmul.f32.gmra.mxu0 %v2696
    %v2734 = vpop.f32.mrf.mxu0
    %v2735 = vadd.f32 %v2700, %v2734
    %2736 = vmatmul.f32.gmra.mxu0 %v2649
    %v2737 = vpop.f32.mrf.mxu0
    %v2738 = vadd.f32 %v2700, %v2737
    %2739 = vmatmul.f32.gmra.mxu0 %v2655
    %v2740 = vpop.f32.mrf.mxu0
    %v2741 = vadd.f32 %v2700, %v2740
    %2742 = vmatmul.f32.gmra.mxu0 %v2661
    %v2743 = vpop.f32.mrf.mxu0
    %v2744 = vadd.f32 %v2700, %v2743
    %2745 = vmatmul.f32.gmra.mxu0 %v2667
    %v2746 = vpop.f32.mrf.mxu0
    %v2747 = vadd.f32 %v2700, %v2746
    %2748 = vmatmul.f32.gmra.mxu0 %v2673
    %v2749 = vpop.f32.mrf.mxu0
    %v2750 = vadd.f32 %v2700, %v2749
    %2751 = vdwg.mxu0
    %2752 = vmatpush.msra.mxu0 %v263
    %2753 = vmatpush.msra.mxu0 %v262
    %2754 = vmatpush.msra.mxu0 %v261
    %2755 = vmatpush.msra.mxu0 %v260
    %2756 = vmatpush.msra.mxu0 %v259
    %2757 = vmatpush.msra.mxu0 %v258
    %2758 = vmatpush.msra.mxu0 %v257
    %2759 = vmatpush.msra.mxu0 %v256
    %2760 = vmatpush.msra.mxu0 %v255
    %2761 = vmatpush.msra.mxu0 %v254
    %2762 = vmatpush.msra.mxu0 %v253
    %2763 = vmatpush.msra.mxu0 %v252
    %2764 = vmatpush.msra.mxu0 %v251
    %2765 = vmatpush.msra.mxu0 %v250
    %2766 = vmatpush.msra.mxu0 %v249
    %2767 = vmatpush.msra.mxu0 %v248
    %2768 = vmatmul.f32.gmra.mxu0 %v2414
    %v2769 = vpop.f32.mrf.mxu0
    %v2770 = vadd.f32 %v2720, %v2769
    %2771 = vmatmul.f32.gmra.mxu0 %v2421
    %v2772 = vpop.f32.mrf.mxu0
    %v2773 = vadd.f32 %v2723, %v2772
    %2774 = vmatmul.f32.gmra.mxu0 %v2428
    %v2775 = vpop.f32.mrf.mxu0
    %v2776 = vadd.f32 %v2726, %v2775
    %2777 = vmatmul.f32.gmra.mxu0 %v2435
    %v2778 = vpop.f32.mrf.mxu0
    %v2779 = vadd.f32 %v2729, %v2778
    %2780 = vmatmul.f32.gmra.mxu0 %v2442
    %v2781 = vpop.f32.mrf.mxu0
    %v2782 = vadd.f32 %v2732, %v2781
    %2783 = vmatmul.f32.gmra.mxu0 %v2697
    %v2784 = vpop.f32.mrf.mxu0
    %v2785 = vadd.f32 %v2735, %v2784
    %2786 = vmatmul.f32.gmra.mxu0 %v2651
    %v2787 = vpop.f32.mrf.mxu0
    %v2788 = vadd.f32 %v2738, %v2787
    %2789 = vmatmul.f32.gmra.mxu0 %v2657
    %v2790 = vpop.f32.mrf.mxu0
    %v2791 = vadd.f32 %v2741, %v2790
    %2792 = vmatmul.f32.gmra.mxu0 %v2663
    %v2793 = vpop.f32.mrf.mxu0
    %v2794 = vadd.f32 %v2744, %v2793
    %2795 = vmatmul.f32.gmra.mxu0 %v2669
    %v2796 = vpop.f32.mrf.mxu0
    %v2797 = vadd.f32 %v2747, %v2796
    %2798 = vmatmul.f32.gmra.mxu0 %v2675
    %v2799 = vpop.f32.mrf.mxu0
    %v2800 = vadd.f32 %v2750, %v2799
    %2801 = vdwg.mxu0
    %2802 = vmatpush.msra.mxu0 %v279
    %2803 = vmatpush.msra.mxu0 %v278
    %2804 = vmatpush.msra.mxu0 %v277
    %2805 = vmatpush.msra.mxu0 %v276
    %2806 = vmatpush.msra.mxu0 %v275
    %2807 = vmatpush.msra.mxu0 %v274
    %2808 = vmatpush.msra.mxu0 %v273
    %2809 = vmatpush.msra.mxu0 %v272
    %2810 = vmatpush.msra.mxu0 %v271
    %2811 = vmatpush.msra.mxu0 %v270
    %2812 = vmatpush.msra.mxu0 %v269
    %2813 = vmatpush.msra.mxu0 %v268
    %2814 = vmatpush.msra.mxu0 %v267
    %2815 = vmatpush.msra.mxu0 %v266
    %2816 = vmatpush.msra.mxu0 %v265
    %2817 = vmatpush.msra.mxu0 %v264
    %2818 = vmatmul.f32.gmra.mxu0 %v2457
    %v2819 = vpop.f32.mrf.mxu0
    %v2820 = vadd.f32 %v2770, %v2819
    %2821 = vmatmul.f32.gmra.mxu0 %v2464
    %v2822 = vpop.f32.mrf.mxu0
    %v2823 = vadd.f32 %v2773, %v2822
    %2824 = vmatmul.f32.gmra.mxu0 %v2471
    %v2825 = vpop.f32.mrf.mxu0
    %v2826 = vadd.f32 %v2776, %v2825
    %2827 = vmatmul.f32.gmra.mxu0 %v2478
    %v2828 = vpop.f32.mrf.mxu0
    %v2829 = vadd.f32 %v2779, %v2828
    %2830 = vmatmul.f32.gmra.mxu0 %v2485
    %v2831 = vpop.f32.mrf.mxu0
    %v2832 = vadd.f32 %v2782, %v2831
    %2833 = vmatmul.f32.gmra.mxu0 %v2698
    %v2834 = vpop.f32.mrf.mxu0
    %v2835 = vadd.f32 %v2785, %v2834
    %2836 = vmatmul.f32.gmra.mxu0 %v2653
    %v2837 = vpop.f32.mrf.mxu0
    %v2838 = vadd.f32 %v2788, %v2837
    %2839 = vmatmul.f32.gmra.mxu0 %v2659
    %v2840 = vpop.f32.mrf.mxu0
    %v2841 = vadd.f32 %v2791, %v2840
    %2842 = vmatmul.f32.gmra.mxu0 %v2665
    %v2843 = vpop.f32.mrf.mxu0
    %v2844 = vadd.f32 %v2794, %v2843
    %2845 = vmatmul.f32.gmra.mxu0 %v2671
    %v2846 = vpop.f32.mrf.mxu0
    %v2847 = vadd.f32 %v2797, %v2846
    %2848 = vmatmul.f32.gmra.mxu0 %v2677
    %v2849 = vpop.f32.mrf.mxu0
    %v2850 = vadd.f32 %v2800, %v2849
    %2851 = vdwg.mxu0
    %v2852 = vmax.f32 %v2820, 0.0
    %v2853 = vmax.f32 %v2823, 0.0
    %v2854 = vmax.f32 %v2826, 0.0
    %v2855 = vmax.f32 %v2829, 0.0
    %v2856 = vmax.f32 %v2832, 0.0
    %v2857 = vmax.f32 %v2835, 0.0
    %v2858 = vmax.f32 %v2838, 0.0
    %v2859 = vmax.f32 %v2841, 0.0
    %v2860 = vmax.f32 %v2844, 0.0
    %v2861 = vmax.f32 %v2847, 0.0
    %v2862 = vmax.f32 %v2850, 0.0
    %v2874 = vrot.slane %v2852, 2
    %v2875 = vrot.slane %v2852, 4
    %v2876 = vrot.slane %v2852, 6
    %v2877 = vrot.slane %v2853, 2
    %v2878 = vrot.slane %v2853, 4
    %v2879 = vrot.slane %v2853, 6
    %v2880 = vrot.slane %v2854, 2
    %v2881 = vrot.slane %v2854, 4
    %v2882 = vrot.slane %v2854, 6
    %v2883 = vrot.slane %v2855, 2
    %v2884 = vrot.slane %v2855, 4
    %v2885 = vrot.slane %v2855, 6
    %v2886 = vrot.slane %v2856, 2
    %v2887 = vrot.slane %v2856, 4
    %v2888 = vrot.slane %v2856, 6
    %v2889 = vrot.slane %v2857, 2
    %v2890 = vrot.slane %v2857, 4
    %v2891 = vrot.slane %v2857, 6
    %v2892 = vrot.slane %v2858, 2
    %v2893 = vrot.slane %v2858, 4
    %v2894 = vrot.slane %v2858, 6
    %v2895 = vrot.slane %v2859, 2
    %v2896 = vrot.slane %v2859, 4
    %v2897 = vrot.slane %v2859, 6
    %v2898 = vrot.slane %v2860, 2
    %v2899 = vrot.slane %v2860, 4
    %v2900 = vrot.slane %v2860, 6
    %v2901 = vrot.slane %v2861, 2
    %v2902 = vrot.slane %v2861, 4
    %v2903 = vrot.slane %v2861, 6
    %v2904 = vrot.slane %v2862, 2
    %v2936 = vsel %vm1698, %v2852, -inf
    %v2937 = vrot.slane %v2936, 4
    %v2938 = vmax.f32 %v2936, %v2937
    %v2939 = vrot.slane %v2938, 2
    %v2940 = vmax.f32 %v2938, %v2939
    %v2941 = vrot.slane %v2940, 1
    %v2942 = vmax.f32 %v2940, %v2941
    %v2943 = vsel %vm1698, %v2874, -inf
    %v2944 = vrot.slane %v2943, 4
    %v2945 = vmax.f32 %v2943, %v2944
    %v2946 = vrot.slane %v2945, 2
    %v2947 = vmax.f32 %v2945, %v2946
    %v2948 = vrot.slane %v2947, 1
    %v2949 = vmax.f32 %v2947, %v2948
    %v2950 = vsel %vm1698, %v2875, -inf
    %v2951 = vrot.slane %v2950, 4
    %v2952 = vmax.f32 %v2950, %v2951
    %v2953 = vrot.slane %v2952, 2
    %v2954 = vmax.f32 %v2952, %v2953
    %v2955 = vrot.slane %v2954, 1
    %v2956 = vmax.f32 %v2954, %v2955
    %v2957 = vsel %vm1698, %v2876, -inf
    %v2958 = vrot.slane %v2957, 4
    %v2959 = vmax.f32 %v2957, %v2958
    %v2960 = vrot.slane %v2959, 2
    %v2961 = vmax.f32 %v2959, %v2960
    %v2962 = vrot.slane %v2961, 1
    %v2963 = vmax.f32 %v2961, %v2962
    %v2964 = vsel %vm1698, %v2853, -inf
    %v2965 = vrot.slane %v2964, 4
    %v2966 = vmax.f32 %v2964, %v2965
    %v2967 = vrot.slane %v2966, 2
    %v2968 = vmax.f32 %v2966, %v2967
    %v2969 = vrot.slane %v2968, 1
    %v2970 = vmax.f32 %v2968, %v2969
    %v2971 = vsel %vm1698, %v2877, -inf
    %v2972 = vrot.slane %v2971, 4
    %v2973 = vmax.f32 %v2971, %v2972
    %v2974 = vrot.slane %v2973, 2
    %v2975 = vmax.f32 %v2973, %v2974
    %v2976 = vrot.slane %v2975, 1
    %v2977 = vmax.f32 %v2975, %v2976
    %v2978 = vsel %vm1698, %v2878, -inf
    %v2979 = vrot.slane %v2978, 4
    %v2980 = vmax.f32 %v2978, %v2979
    %v2981 = vrot.slane %v2980, 2
    %v2982 = vmax.f32 %v2980, %v2981
    %v2983 = vrot.slane %v2982, 1
    %v2984 = vmax.f32 %v2982, %v2983
    %v2985 = vsel %vm1698, %v2879, -inf
    %v2986 = vrot.slane %v2985, 4
    %v2987 = vmax.f32 %v2985, %v2986
    %v2988 = vrot.slane %v2987, 2
    %v2989 = vmax.f32 %v2987, %v2988
    %v2990 = vrot.slane %v2989, 1
    %v2991 = vmax.f32 %v2989, %v2990
    %v2992 = vsel %vm1698, %v2854, -inf
    %v2993 = vrot.slane %v2992, 4
    %v2994 = vmax.f32 %v2992, %v2993
    %v2995 = vrot.slane %v2994, 2
    %v2996 = vmax.f32 %v2994, %v2995
    %v2997 = vrot.slane %v2996, 1
    %v2998 = vmax.f32 %v2996, %v2997
    %v2999 = vsel %vm1698, %v2880, -inf
    %v3000 = vrot.slane %v2999, 4
    %v3001 = vmax.f32 %v2999, %v3000
    %v3002 = vrot.slane %v3001, 2
    %v3003 = vmax.f32 %v3001, %v3002
    %v3004 = vrot.slane %v3003, 1
    %v3005 = vmax.f32 %v3003, %v3004
    %v3006 = vsel %vm1698, %v2881, -inf
    %v3007 = vrot.slane %v3006, 4
    %v3008 = vmax.f32 %v3006, %v3007
    %v3009 = vrot.slane %v3008, 2
    %v3010 = vmax.f32 %v3008, %v3009
    %v3011 = vrot.slane %v3010, 1
    %v3012 = vmax.f32 %v3010, %v3011
    %v3013 = vsel %vm1698, %v2882, -inf
    %v3014 = vrot.slane %v3013, 4
    %v3015 = vmax.f32 %v3013, %v3014
    %v3016 = vrot.slane %v3015, 2
    %v3017 = vmax.f32 %v3015, %v3016
    %v3018 = vrot.slane %v3017, 1
    %v3019 = vmax.f32 %v3017, %v3018
    %v3020 = vsel %vm1698, %v2855, -inf
    %v3021 = vrot.slane %v3020, 4
    %v3022 = vmax.f32 %v3020, %v3021
    %v3023 = vrot.slane %v3022, 2
    %v3024 = vmax.f32 %v3022, %v3023
    %v3025 = vrot.slane %v3024, 1
    %v3026 = vmax.f32 %v3024, %v3025
    %v3027 = vsel %vm1698, %v2883, -inf
    %v3028 = vrot.slane %v3027, 4
    %v3029 = vmax.f32 %v3027, %v3028
    %v3030 = vrot.slane %v3029, 2
    %v3031 = vmax.f32 %v3029, %v3030
    %v3032 = vrot.slane %v3031, 1
    %v3033 = vmax.f32 %v3031, %v3032
    %v3034 = vsel %vm1698, %v2884, -inf
    %v3035 = vrot.slane %v3034, 4
    %v3036 = vmax.f32 %v3034, %v3035
    %v3037 = vrot.slane %v3036, 2
    %v3038 = vmax.f32 %v3036, %v3037
    %v3039 = vrot.slane %v3038, 1
    %v3040 = vmax.f32 %v3038, %v3039
    %v3041 = vsel %vm1698, %v2885, -inf
    %v3042 = vrot.slane %v3041, 4
    %v3043 = vmax.f32 %v3041, %v3042
    %v3044 = vrot.slane %v3043, 2
    %v3045 = vmax.f32 %v3043, %v3044
    %v3046 = vrot.slane %v3045, 1
    %v3047 = vmax.f32 %v3045, %v3046
    %v3048 = vsel %vm1698, %v2856, -inf
    %v3049 = vrot.slane %v3048, 4
    %v3050 = vmax.f32 %v3048, %v3049
    %v3051 = vrot.slane %v3050, 2
    %v3052 = vmax.f32 %v3050, %v3051
    %v3053 = vrot.slane %v3052, 1
    %v3054 = vmax.f32 %v3052, %v3053
    %v3055 = vsel %vm1698, %v2886, -inf
    %v3056 = vrot.slane %v3055, 4
    %v3057 = vmax.f32 %v3055, %v3056
    %v3058 = vrot.slane %v3057, 2
    %v3059 = vmax.f32 %v3057, %v3058
    %v3060 = vrot.slane %v3059, 1
    %v3061 = vmax.f32 %v3059, %v3060
    %v3062 = vsel %vm1698, %v2887, -inf
    %v3063 = vrot.slane %v3062, 4
    %v3064 = vmax.f32 %v3062, %v3063
    %v3065 = vrot.slane %v3064, 2
    %v3066 = vmax.f32 %v3064, %v3065
    %v3067 = vrot.slane %v3066, 1
    %v3068 = vmax.f32 %v3066, %v3067
    %v3069 = vsel %vm1698, %v2888, -inf
    %v3070 = vrot.slane %v3069, 4
    %v3071 = vmax.f32 %v3069, %v3070
    %v3072 = vrot.slane %v3071, 2
    %v3073 = vmax.f32 %v3071, %v3072
    %v3074 = vrot.slane %v3073, 1
    %v3075 = vmax.f32 %v3073, %v3074
    %v3076 = vsel %vm1698, %v2857, -inf
    %v3077 = vrot.slane %v3076, 4
    %v3078 = vmax.f32 %v3076, %v3077
    %v3079 = vrot.slane %v3078, 2
    %v3080 = vmax.f32 %v3078, %v3079
    %v3081 = vrot.slane %v3080, 1
    %v3082 = vmax.f32 %v3080, %v3081
    %v3083 = vsel %vm1698, %v2889, -inf
    %v3084 = vrot.slane %v3083, 4
    %v3085 = vmax.f32 %v3083, %v3084
    %v3086 = vrot.slane %v3085, 2
    %v3087 = vmax.f32 %v3085, %v3086
    %v3088 = vrot.slane %v3087, 1
    %v3089 = vmax.f32 %v3087, %v3088
    %v3090 = vsel %vm1698, %v2890, -inf
    %v3091 = vrot.slane %v3090, 4
    %v3092 = vmax.f32 %v3090, %v3091
    %v3093 = vrot.slane %v3092, 2
    %v3094 = vmax.f32 %v3092, %v3093
    %v3095 = vrot.slane %v3094, 1
    %v3096 = vmax.f32 %v3094, %v3095
    %v3097 = vsel %vm1698, %v2891, -inf
    %v3098 = vrot.slane %v3097, 4
    %v3099 = vmax.f32 %v3097, %v3098
    %v3100 = vrot.slane %v3099, 2
    %v3101 = vmax.f32 %v3099, %v3100
    %v3102 = vrot.slane %v3101, 1
    %v3103 = vmax.f32 %v3101, %v3102
    %v3104 = vsel %vm1698, %v2858, -inf
    %v3105 = vrot.slane %v3104, 4
    %v3106 = vmax.f32 %v3104, %v3105
    %v3107 = vrot.slane %v3106, 2
    %v3108 = vmax.f32 %v3106, %v3107
    %v3109 = vrot.slane %v3108, 1
    %v3110 = vmax.f32 %v3108, %v3109
    %v3111 = vsel %vm1698, %v2892, -inf
    %v3112 = vrot.slane %v3111, 4
    %v3113 = vmax.f32 %v3111, %v3112
    %v3114 = vrot.slane %v3113, 2
    %v3115 = vmax.f32 %v3113, %v3114
    %v3116 = vrot.slane %v3115, 1
    %v3117 = vmax.f32 %v3115, %v3116
    %v3118 = vsel %vm1698, %v2893, -inf
    %v3119 = vrot.slane %v3118, 4
    %v3120 = vmax.f32 %v3118, %v3119
    %v3121 = vrot.slane %v3120, 2
    %v3122 = vmax.f32 %v3120, %v3121
    %v3123 = vrot.slane %v3122, 1
    %v3124 = vmax.f32 %v3122, %v3123
    %v3125 = vsel %vm1698, %v2894, -inf
    %v3126 = vrot.slane %v3125, 4
    %v3127 = vmax.f32 %v3125, %v3126
    %v3128 = vrot.slane %v3127, 2
    %v3129 = vmax.f32 %v3127, %v3128
    %v3130 = vrot.slane %v3129, 1
    %v3131 = vmax.f32 %v3129, %v3130
    %v3132 = vsel %vm1698, %v2859, -inf
    %v3133 = vrot.slane %v3132, 4
    %v3134 = vmax.f32 %v3132, %v3133
    %v3135 = vrot.slane %v3134, 2
    %v3136 = vmax.f32 %v3134, %v3135
    %v3137 = vrot.slane %v3136, 1
    %v3138 = vmax.f32 %v3136, %v3137
    %v3139 = vsel %vm1698, %v2895, -inf
    %v3140 = vrot.slane %v3139, 4
    %v3141 = vmax.f32 %v3139, %v3140
    %v3142 = vrot.slane %v3141, 2
    %v3143 = vmax.f32 %v3141, %v3142
    %v3144 = vrot.slane %v3143, 1
    %v3145 = vmax.f32 %v3143, %v3144
    %v3146 = vsel %vm1698, %v2896, -inf
    %v3147 = vrot.slane %v3146, 4
    %v3148 = vmax.f32 %v3146, %v3147
    %v3149 = vrot.slane %v3148, 2
    %v3150 = vmax.f32 %v3148, %v3149
    %v3151 = vrot.slane %v3150, 1
    %v3152 = vmax.f32 %v3150, %v3151
    %v3153 = vsel %vm1698, %v2897, -inf
    %v3154 = vrot.slane %v3153, 4
    %v3155 = vmax.f32 %v3153, %v3154
    %v3156 = vrot.slane %v3155, 2
    %v3157 = vmax.f32 %v3155, %v3156
    %v3158 = vrot.slane %v3157, 1
    %v3159 = vmax.f32 %v3157, %v3158
    %v3160 = vsel %vm1698, %v2860, -inf
    %v3161 = vrot.slane %v3160, 4
    %v3162 = vmax.f32 %v3160, %v3161
    %v3163 = vrot.slane %v3162, 2
    %v3164 = vmax.f32 %v3162, %v3163
    %v3165 = vrot.slane %v3164, 1
    %v3166 = vmax.f32 %v3164, %v3165
    %v3167 = vsel %vm1698, %v2898, -inf
    %v3168 = vrot.slane %v3167, 4
    %v3169 = vmax.f32 %v3167, %v3168
    %v3170 = vrot.slane %v3169, 2
    %v3171 = vmax.f32 %v3169, %v3170
    %v3172 = vrot.slane %v3171, 1
    %v3173 = vmax.f32 %v3171, %v3172
    %v3174 = vsel %vm1698, %v2899, -inf
    %v3175 = vrot.slane %v3174, 4
    %v3176 = vmax.f32 %v3174, %v3175
    %v3177 = vrot.slane %v3176, 2
    %v3178 = vmax.f32 %v3176, %v3177
    %v3179 = vrot.slane %v3178, 1
    %v3180 = vmax.f32 %v3178, %v3179
    %v3181 = vsel %vm1698, %v2900, -inf
    %v3182 = vrot.slane %v3181, 4
    %v3183 = vmax.f32 %v3181, %v3182
    %v3184 = vrot.slane %v3183, 2
    %v3185 = vmax.f32 %v3183, %v3184
    %v3186 = vrot.slane %v3185, 1
    %v3187 = vmax.f32 %v3185, %v3186
    %v3188 = vsel %vm1698, %v2861, -inf
    %v3189 = vrot.slane %v3188, 4
    %v3190 = vmax.f32 %v3188, %v3189
    %v3191 = vrot.slane %v3190, 2
    %v3192 = vmax.f32 %v3190, %v3191
    %v3193 = vrot.slane %v3192, 1
    %v3194 = vmax.f32 %v3192, %v3193
    %v3195 = vsel %vm1698, %v2901, -inf
    %v3196 = vrot.slane %v3195, 4
    %v3197 = vmax.f32 %v3195, %v3196
    %v3198 = vrot.slane %v3197, 2
    %v3199 = vmax.f32 %v3197, %v3198
    %v3200 = vrot.slane %v3199, 1
    %v3201 = vmax.f32 %v3199, %v3200
    %v3202 = vsel %vm1698, %v2902, -inf
    %v3203 = vrot.slane %v3202, 4
    %v3204 = vmax.f32 %v3202, %v3203
    %v3205 = vrot.slane %v3204, 2
    %v3206 = vmax.f32 %v3204, %v3205
    %v3207 = vrot.slane %v3206, 1
    %v3208 = vmax.f32 %v3206, %v3207
    %v3209 = vsel %vm1698, %v2903, -inf
    %v3210 = vrot.slane %v3209, 4
    %v3211 = vmax.f32 %v3209, %v3210
    %v3212 = vrot.slane %v3211, 2
    %v3213 = vmax.f32 %v3211, %v3212
    %v3214 = vrot.slane %v3213, 1
    %v3215 = vmax.f32 %v3213, %v3214
    %v3216 = vsel %vm1698, %v2862, -inf
    %v3217 = vrot.slane %v3216, 4
    %v3218 = vmax.f32 %v3216, %v3217
    %v3219 = vrot.slane %v3218, 2
    %v3220 = vmax.f32 %v3218, %v3219
    %v3221 = vrot.slane %v3220, 1
    %v3222 = vmax.f32 %v3220, %v3221
    %v3223 = vsel %vm1698, %v2904, -inf
    %v3224 = vrot.slane %v3223, 4
    %v3225 = vmax.f32 %v3223, %v3224
    %v3226 = vrot.slane %v3225, 2
    %v3227 = vmax.f32 %v3225, %v3226
    %v3228 = vrot.slane %v3227, 1
    %v3229 = vmax.f32 %v3227, %v3228
    %v3230 = vld [vmem:[%s6] sm:$0x1]
    %v3250 = vsel %vm2358, %v2949, %v2942
    %v3251 = vsel %vm2360, %v2956, %v3250
    %v3252 = vsel %vm2362, %v2963, %v3251
    %v3253 = vsel %vm2364, %v2970, %v3252
    %v3254 = vsel %vm2366, %v2977, %v3253
    %v3255 = vsel %vm2368, %v2984, %v3254
    %v3256 = vsel %vm2370, %v2991, %v3255
    %v3257 = vsel %vm2358, %v3005, %v2998
    %v3258 = vsel %vm2360, %v3012, %v3257
    %v3259 = vsel %vm2362, %v3019, %v3258
    %v3260 = vsel %vm2364, %v3026, %v3259
    %v3261 = vsel %vm2366, %v3033, %v3260
    %v3262 = vsel %vm2368, %v3040, %v3261
    %v3263 = vsel %vm2370, %v3047, %v3262
    %v3264 = vsel %vm2358, %v3061, %v3054
    %v3265 = vsel %vm2360, %v3068, %v3264
    %v3270 = vsel %vm2358, %v2956, %v2949
    %v3271 = vsel %vm2360, %v2963, %v3270
    %v3272 = vsel %vm2362, %v2970, %v3271
    %v3273 = vsel %vm2364, %v2977, %v3272
    %v3274 = vsel %vm2366, %v2984, %v3273
    %v3275 = vsel %vm2368, %v2991, %v3274
    %v3276 = vsel %vm2370, %v2998, %v3275
    %v3277 = vsel %vm2358, %v3012, %v3005
    %v3278 = vsel %vm2360, %v3019, %v3277
    %v3279 = vsel %vm2362, %v3026, %v3278
    %v3280 = vsel %vm2364, %v3033, %v3279
    %v3281 = vsel %vm2366, %v3040, %v3280
    %v3282 = vsel %vm2368, %v3047, %v3281
    %v3283 = vsel %vm2370, %v3054, %v3282
    %v3284 = vsel %vm2358, %v3068, %v3061
    %v3285 = vsel %vm2360, %v3075, %v3284
    %v3290 = vsel %vm2358, %v2963, %v2956
    %v3291 = vsel %vm2360, %v2970, %v3290
    %v3292 = vsel %vm2362, %v2977, %v3291
    %v3293 = vsel %vm2364, %v2984, %v3292
    %v3294 = vsel %vm2366, %v2991, %v3293
    %v3295 = vsel %vm2368, %v2998, %v3294
    %v3296 = vsel %vm2370, %v3005, %v3295
    %v3297 = vsel %vm2358, %v3019, %v3012
    %v3298 = vsel %vm2360, %v3026, %v3297
    %v3299 = vsel %vm2362, %v3033, %v3298
    %v3300 = vsel %vm2364, %v3040, %v3299
    %v3301 = vsel %vm2366, %v3047, %v3300
    %v3302 = vsel %vm2368, %v3054, %v3301
    %v3303 = vsel %vm2370, %v3061, %v3302
    %v3304 = vsel %vm2358, %v3075, %v3068
    %v3305 = vsel %vm2360, %v3082, %v3304
    %v3328 = vsel %vm2358, %v3096, %v3089
    %v3329 = vsel %vm2360, %v3103, %v3328
    %v3330 = vsel %vm2362, %v3110, %v3329
    %v3331 = vsel %vm2364, %v3117, %v3330
    %v3332 = vsel %vm2366, %v3124, %v3331
    %v3333 = vsel %vm2368, %v3131, %v3332
    %v3334 = vsel %vm2370, %v3138, %v3333
    %v3335 = vsel %vm2358, %v3152, %v3145
    %v3336 = vsel %vm2360, %v3159, %v3335
    %v3337 = vsel %vm2362, %v3166, %v3336
    %v3338 = vsel %vm2364, %v3173, %v3337
    %v3339 = vsel %vm2366, %v3180, %v3338
    %v3340 = vsel %vm2368, %v3187, %v3339
    %v3341 = vsel %vm2370, %v3194, %v3340
    %v3342 = vsel %vm2358, %v3208, %v3201
    %v3343 = vsel %vm2360, %v3215, %v3342
    %v3345 = vsel %vm2358, %v3103, %v3096
    %v3346 = vsel %vm2360, %v3110, %v3345
    %v3347 = vsel %vm2362, %v3117, %v3346
    %v3348 = vsel %vm2364, %v3124, %v3347
    %v3349 = vsel %vm2366, %v3131, %v3348
    %v3350 = vsel %vm2368, %v3138, %v3349
    %v3351 = vsel %vm2370, %v3145, %v3350
    %v3352 = vsel %vm2358, %v3159, %v3152
    %v3353 = vsel %vm2360, %v3166, %v3352
    %v3354 = vsel %vm2362, %v3173, %v3353
    %v3355 = vsel %vm2364, %v3180, %v3354
    %v3356 = vsel %vm2366, %v3187, %v3355
    %v3357 = vsel %vm2368, %v3194, %v3356
    %v3358 = vsel %vm2370, %v3201, %v3357
    %v3359 = vsel %vm2358, %v3215, %v3208
    %v3360 = vsel %vm2360, %v3222, %v3359
    %v3362 = vsel %vm2358, %v3110, %v3103
    %v3363 = vsel %vm2360, %v3117, %v3362
    %v3364 = vsel %vm2362, %v3124, %v3363
    %v3365 = vsel %vm2364, %v3131, %v3364
    %v3366 = vsel %vm2366, %v3138, %v3365
    %v3367 = vsel %vm2368, %v3145, %v3366
    %v3368 = vsel %vm2370, %v3152, %v3367
    %v3369 = vsel %vm2358, %v3166, %v3159
    %v3370 = vsel %vm2360, %v3173, %v3369
    %v3371 = vsel %vm2362, %v3180, %v3370
    %v3372 = vsel %vm2364, %v3187, %v3371
    %v3373 = vsel %vm2366, %v3194, %v3372
    %v3374 = vsel %vm2368, %v3201, %v3373
    %v3375 = vsel %vm2370, %v3208, %v3374
    %v3376 = vsel %vm2358, %v3222, %v3215
    %v3377 = vsel %vm2360, %v3229, %v3376
    %vm3378 = vcmask 1042432
    %v3379 = vrot.slane %v3334, 5
    %v3380 = vrot.slane %v3351, 5
    %v3381 = vrot.slane %v3368, 5
    %v3382 = vrot.slane %v3341, 5
    %v3383 = vsel %vm3378, %v3379, %v3382
    %v3384 = vrot.slane %v3358, 5
    %v3385 = vsel %vm3378, %v3380, %v3384
    %v3386 = vrot.slane %v3375, 5
    %v3387 = vsel %vm3378, %v3381, %v3386
    %v3388 = vrot.slane %v3343, 5
    %v3389 = vsel %vm3378, %v3382, %v3388
    %v3390 = vrot.slane %v3360, 5
    %v3391 = vsel %vm3378, %v3384, %v3390
    %v3392 = vrot.slane %v3377, 5
    %v3393 = vsel %vm3378, %v3386, %v3392
    %v3403 = vsel %vm3378, %v3265, %v3379
    %v3404 = vsel %vm3378, %v3285, %v3380
    %v3405 = vsel %vm3378, %v3305, %v3381
    %v3407 = vperm.slane %v3230, 0
    %3409 = vmatpush.msra.mxu0 %v343
    %3410 = vmatpush.msra.mxu0 %v342
    %3411 = vmatpush.msra.mxu0 %v341
    %3412 = vmatpush.msra.mxu0 %v340
    %3413 = vmatpush.msra.mxu0 %v339
    %3414 = vmatpush.msra.mxu0 %v338
    %3415 = vmatpush.msra.mxu0 %v337
    %3416 = vmatpush.msra.mxu0 %v336
    %3417 = vmatpush.msra.mxu0 %v335
    %3418 = vmatpush.msra.mxu0 %v334
    %3419 = vmatpush.msra.mxu0 %v333
    %3420 = vmatpush.msra.mxu0 %v332
    %3421 = vmatpush.msra.mxu0 %v331
    %3422 = vmatpush.msra.mxu0 %v330
    %3423 = vmatpush.msra.mxu0 %v329
    %3424 = vmatpush.msra.mxu0 %v328
    %3425 = vmatmul.f32.gmra.mxu0 %v3256
    %v3426 = vpop.f32.mrf.mxu0
    %v3427 = vadd.f32 %v3407, %v3426
    %3428 = vmatmul.f32.gmra.mxu0 %v3263
    %v3429 = vpop.f32.mrf.mxu0
    %v3430 = vadd.f32 %v3407, %v3429
    %3431 = vmatmul.f32.gmra.mxu0 %v3403
    %v3432 = vpop.f32.mrf.mxu0
    %v3433 = vadd.f32 %v3407, %v3432
    %3434 = vmatmul.f32.gmra.mxu0 %v3383
    %v3435 = vpop.f32.mrf.mxu0
    %v3436 = vadd.f32 %v3407, %v3435
    %3437 = vmatmul.f32.gmra.mxu0 %v3389
    %v3438 = vpop.f32.mrf.mxu0
    %v3439 = vadd.f32 %v3407, %v3438
    %3440 = vdwg.mxu0
    %3441 = vmatpush.msra.mxu0 %v359
    %3442 = vmatpush.msra.mxu0 %v358
    %3443 = vmatpush.msra.mxu0 %v357
    %3444 = vmatpush.msra.mxu0 %v356
    %3445 = vmatpush.msra.mxu0 %v355
    %3446 = vmatpush.msra.mxu0 %v354
    %3447 = vmatpush.msra.mxu0 %v353
    %3448 = vmatpush.msra.mxu0 %v352
    %3449 = vmatpush.msra.mxu0 %v351
    %3450 = vmatpush.msra.mxu0 %v350
    %3451 = vmatpush.msra.mxu0 %v349
    %3452 = vmatpush.msra.mxu0 %v348
    %3453 = vmatpush.msra.mxu0 %v347
    %3454 = vmatpush.msra.mxu0 %v346
    %3455 = vmatpush.msra.mxu0 %v345
    %3456 = vmatpush.msra.mxu0 %v344
    %3457 = vmatmul.f32.gmra.mxu0 %v3276
    %v3458 = vpop.f32.mrf.mxu0
    %v3459 = vadd.f32 %v3427, %v3458
    %3460 = vmatmul.f32.gmra.mxu0 %v3283
    %v3461 = vpop.f32.mrf.mxu0
    %v3462 = vadd.f32 %v3430, %v3461
    %3463 = vmatmul.f32.gmra.mxu0 %v3404
    %v3464 = vpop.f32.mrf.mxu0
    %v3465 = vadd.f32 %v3433, %v3464
    %3466 = vmatmul.f32.gmra.mxu0 %v3385
    %v3467 = vpop.f32.mrf.mxu0
    %v3468 = vadd.f32 %v3436, %v3467
    %3469 = vmatmul.f32.gmra.mxu0 %v3391
    %v3470 = vpop.f32.mrf.mxu0
    %v3471 = vadd.f32 %v3439, %v3470
    %3472 = vdwg.mxu0
    %3473 = vmatpush.msra.mxu0 %v375
    %3474 = vmatpush.msra.mxu0 %v374
    %3475 = vmatpush.msra.mxu0 %v373
    %3476 = vmatpush.msra.mxu0 %v372
    %3477 = vmatpush.msra.mxu0 %v371
    %3478 = vmatpush.msra.mxu0 %v370
    %3479 = vmatpush.msra.mxu0 %v369
    %3480 = vmatpush.msra.mxu0 %v368
    %3481 = vmatpush.msra.mxu0 %v367
    %3482 = vmatpush.msra.mxu0 %v366
    %3483 = vmatpush.msra.mxu0 %v365
    %3484 = vmatpush.msra.mxu0 %v364
    %3485 = vmatpush.msra.mxu0 %v363
    %3486 = vmatpush.msra.mxu0 %v362
    %3487 = vmatpush.msra.mxu0 %v361
    %3488 = vmatpush.msra.mxu0 %v360
    %3489 = vmatmul.f32.gmra.mxu0 %v3296
    %v3490 = vpop.f32.mrf.mxu0
    %v3491 = vadd.f32 %v3459, %v3490
    %3492 = vmatmul.f32.gmra.mxu0 %v3303
    %v3493 = vpop.f32.mrf.mxu0
    %v3494 = vadd.f32 %v3462, %v3493
    %3495 = vmatmul.f32.gmra.mxu0 %v3405
    %v3496 = vpop.f32.mrf.mxu0
    %v3497 = vadd.f32 %v3465, %v3496
    %3498 = vmatmul.f32.gmra.mxu0 %v3387
    %v3499 = vpop.f32.mrf.mxu0
    %v3500 = vadd.f32 %v3468, %v3499
    %3501 = vmatmul.f32.gmra.mxu0 %v3393
    %v3502 = vpop.f32.mrf.mxu0
    %v3503 = vadd.f32 %v3471, %v3502
    %3504 = vdwg.mxu0
    %v3505 = vmax.f32 %v3491, 0.0
    %v3506 = vmax.f32 %v3494, 0.0
    %v3507 = vmax.f32 %v3497, 0.0
    %v3508 = vmax.f32 %v3500, 0.0
    %v3509 = vmax.f32 %v3503, 0.0
    %v3511 = vrot.slane %v3505, 1
    %v3513 = vrot.slane %v3505, 2
    %v3515 = vrot.slane %v3505, 3
    %v3517 = vrot.slane %v3505, 4
    %v3519 = vrot.slane %v3505, 5
    %v3521 = vrot.slane %v3505, 6
    %v3523 = vrot.slane %v3505, 7
    %v3526 = vrot.slane %v3506, 1
    %v3528 = vrot.slane %v3506, 2
    %v3530 = vrot.slane %v3506, 3
    %v3532 = vrot.slane %v3506, 4
    %v3534 = vrot.slane %v3506, 5
    %v3536 = vrot.slane %v3506, 6
    %v3538 = vrot.slane %v3506, 7
    %v3541 = vrot.slane %v3507, 1
    %v3543 = vrot.slane %v3507, 2
    %v3545 = vrot.slane %v3507, 3
    %v3546 = vrot.slane %v3507, 4
    %v3548 = vrot.slane %v3508, 5
    %v3549 = vrot.slane %v3508, 6
    %v3550 = vrot.slane %v3508, 7
    %v3551 = vrot.slane %v3508, 1
    %v3552 = vrot.slane %v3508, 2
    %v3553 = vrot.slane %v3508, 3
    %v3554 = vrot.slane %v3508, 4
    %v3556 = vrot.slane %v3509, 5
    %v3557 = vrot.slane %v3509, 6
    %v3558 = vrot.slane %v3509, 7
    %v3559 = vrot.slane %v3509, 1
    %v3560 = vrot.slane %v3509, 2
    %v3561 = vrot.slane %v3541, 2
    %v3562 = vrot.slane %v3543, 2
    %v3563 = vrot.slane %v3545, 2
    %v3564 = vrot.slane %v3546, 2
    %v3565 = vrot.slane %v3548, 2
    %v3566 = vrot.slane %v3549, 2
    %v3567 = vrot.slane %v3550, 2
    %v3568 = vrot.slane %v3551, 2
    %v3569 = vrot.slane %v3552, 2
    %v3570 = vrot.slane %v3553, 2
    %v3571 = vrot.slane %v3554, 2
    %v3572 = vrot.slane %v3556, 2
    %v3573 = vrot.slane %v3557, 2
    %v3574 = vrot.slane %v3558, 2
    %v3575 = vrot.slane %v3559, 2
    %v3576 = vrot.slane %v3560, 2
    %vm3595 = vcmask 1040384
    %v3596 = vsel %vm3595, %v3505, %v3543
    %v3597 = vsel %vm3595, %v3511, %v3561
    %v3598 = vsel %vm3595, %v3513, %v3562
    %v3599 = vsel %vm3595, %v3515, %v3563
    %v3600 = vsel %vm3595, %v3517, %v3564
    %v3601 = vsel %vm3595, %v3519, %v3565
    %v3602 = vsel %vm3595, %v3521, %v3566
    %v3603 = vsel %vm3595, %v3523, %v3567
    %v3604 = vsel %vm3595, %v3506, %v3552
    %v3605 = vsel %vm3595, %v3526, %v3568
    %v3606 = vsel %vm3595, %v3528, %v3569
    %v3607 = vsel %vm3595, %v3530, %v3570
    %v3608 = vsel %vm3595, %v3532, %v3571
    %v3609 = vsel %vm3595, %v3534, %v3572
    %v3610 = vsel %vm3595, %v3536, %v3573
    %v3611 = vsel %vm3595, %v3538, %v3574
    %v3612 = vsel %vm3595, %v3507, %v3560
    %v3613 = vsel %vm3595, %v3541, %v3575
    %v3614 = vsel %vm3595, %v3543, %v3576
    %v3615 = vld [vmem:[%s8] sm:$0x1]
    %v3617 = vperm.slane %v3615, 0
    %3619 = vmatpush.msra.mxu0 %v695
    %3620 = vmatpush.msra.mxu0 %v694
    %3621 = vmatpush.msra.mxu0 %v693
    %3622 = vmatpush.msra.mxu0 %v692
    %3623 = vmatpush.msra.mxu0 %v691
    %3624 = vmatpush.msra.mxu0 %v690
    %3625 = vmatpush.msra.mxu0 %v689
    %3626 = vmatpush.msra.mxu0 %v688
    %3627 = vmatpush.msra.mxu0 %v687
    %3628 = vmatpush.msra.mxu0 %v686
    %3629 = vmatpush.msra.mxu0 %v685
    %3630 = vmatpush.msra.mxu0 %v684
    %3631 = vmatpush.msra.mxu0 %v683
    %3632 = vmatpush.msra.mxu0 %v682
    %3633 = vmatpush.msra.mxu0 %v681
    %3634 = vmatpush.msra.mxu0 %v680
    %3635 = vmatmul.f32.gmra.mxu0 %v3596
    %v3636 = vpop.f32.mrf.mxu0
    %v3637 = vadd.f32 %v3617, %v3636
    %3638 = vdwg.mxu0
    %3639 = vmatpush.msra.mxu0 %v711
    %3640 = vmatpush.msra.mxu0 %v710
    %3641 = vmatpush.msra.mxu0 %v709
    %3642 = vmatpush.msra.mxu0 %v708
    %3643 = vmatpush.msra.mxu0 %v707
    %3644 = vmatpush.msra.mxu0 %v706
    %3645 = vmatpush.msra.mxu0 %v705
    %3646 = vmatpush.msra.mxu0 %v704
    %3647 = vmatpush.msra.mxu0 %v703
    %3648 = vmatpush.msra.mxu0 %v702
    %3649 = vmatpush.msra.mxu0 %v701
    %3650 = vmatpush.msra.mxu0 %v700
    %3651 = vmatpush.msra.mxu0 %v699
    %3652 = vmatpush.msra.mxu0 %v698
    %3653 = vmatpush.msra.mxu0 %v697
    %3654 = vmatpush.msra.mxu0 %v696
    %3655 = vmatmul.f32.gmra.mxu0 %v3597
    %v3656 = vpop.f32.mrf.mxu0
    %v3657 = vadd.f32 %v3637, %v3656
    %3658 = vdwg.mxu0
    %3659 = vmatpush.msra.mxu0 %v727
    %3660 = vmatpush.msra.mxu0 %v726
    %3661 = vmatpush.msra.mxu0 %v725
    %3662 = vmatpush.msra.mxu0 %v724
    %3663 = vmatpush.msra.mxu0 %v723
    %3664 = vmatpush.msra.mxu0 %v722
    %3665 = vmatpush.msra.mxu0 %v721
    %3666 = vmatpush.msra.mxu0 %v720
    %3667 = vmatpush.msra.mxu0 %v719
    %3668 = vmatpush.msra.mxu0 %v718
    %3669 = vmatpush.msra.mxu0 %v717
    %3670 = vmatpush.msra.mxu0 %v716
    %3671 = vmatpush.msra.mxu0 %v715
    %3672 = vmatpush.msra.mxu0 %v714
    %3673 = vmatpush.msra.mxu0 %v713
    %3674 = vmatpush.msra.mxu0 %v712
    %3675 = vmatmul.f32.gmra.mxu0 %v3598
    %v3676 = vpop.f32.mrf.mxu0
    %v3677 = vadd.f32 %v3657, %v3676
    %3678 = vdwg.mxu0
    %3679 = vmatpush.msra.mxu0 %v743
    %3680 = vmatpush.msra.mxu0 %v742
    %3681 = vmatpush.msra.mxu0 %v741
    %3682 = vmatpush.msra.mxu0 %v740
    %3683 = vmatpush.msra.mxu0 %v739
    %3684 = vmatpush.msra.mxu0 %v738
    %3685 = vmatpush.msra.mxu0 %v737
    %3686 = vmatpush.msra.mxu0 %v736
    %3687 = vmatpush.msra.mxu0 %v735
    %3688 = vmatpush.msra.mxu0 %v734
    %3689 = vmatpush.msra.mxu0 %v733
    %3690 = vmatpush.msra.mxu0 %v732
    %3691 = vmatpush.msra.mxu0 %v731
    %3692 = vmatpush.msra.mxu0 %v730
    %3693 = vmatpush.msra.mxu0 %v729
    %3694 = vmatpush.msra.mxu0 %v728
    %3695 = vmatmul.f32.gmra.mxu0 %v3599
    %v3696 = vpop.f32.mrf.mxu0
    %v3697 = vadd.f32 %v3677, %v3696
    %3698 = vdwg.mxu0
    %3699 = vmatpush.msra.mxu0 %v759
    %3700 = vmatpush.msra.mxu0 %v758
    %3701 = vmatpush.msra.mxu0 %v757
    %3702 = vmatpush.msra.mxu0 %v756
    %3703 = vmatpush.msra.mxu0 %v755
    %3704 = vmatpush.msra.mxu0 %v754
    %3705 = vmatpush.msra.mxu0 %v753
    %3706 = vmatpush.msra.mxu0 %v752
    %3707 = vmatpush.msra.mxu0 %v751
    %3708 = vmatpush.msra.mxu0 %v750
    %3709 = vmatpush.msra.mxu0 %v749
    %3710 = vmatpush.msra.mxu0 %v748
    %3711 = vmatpush.msra.mxu0 %v747
    %3712 = vmatpush.msra.mxu0 %v746
    %3713 = vmatpush.msra.mxu0 %v745
    %3714 = vmatpush.msra.mxu0 %v744
    %3715 = vmatmul.f32.gmra.mxu0 %v3600
    %v3716 = vpop.f32.mrf.mxu0
    %v3717 = vadd.f32 %v3697, %v3716
    %3718 = vdwg.mxu0
    %3719 = vmatpush.msra.mxu0 %v775
    %3720 = vmatpush.msra.mxu0 %v774
    %3721 = vmatpush.msra.mxu0 %v773
    %3722 = vmatpush.msra.mxu0 %v772
    %3723 = vmatpush.msra.mxu0 %v771
    %3724 = vmatpush.msra.mxu0 %v770
    %3725 = vmatpush.msra.mxu0 %v769
    %3726 = vmatpush.msra.mxu0 %v768
    %3727 = vmatpush.msra.mxu0 %v767
    %3728 = vmatpush.msra.mxu0 %v766
    %3729 = vmatpush.msra.mxu0 %v765
    %3730 = vmatpush.msra.mxu0 %v764
    %3731 = vmatpush.msra.mxu0 %v763
    %3732 = vmatpush.msra.mxu0 %v762
    %3733 = vmatpush.msra.mxu0 %v761
    %3734 = vmatpush.msra.mxu0 %v760
    %3735 = vmatmul.f32.gmra.mxu0 %v3601
    %v3736 = vpop.f32.mrf.mxu0
    %v3737 = vadd.f32 %v3717, %v3736
    %3738 = vdwg.mxu0
    %3739 = vmatpush.msra.mxu0 %v791
    %3740 = vmatpush.msra.mxu0 %v790
    %3741 = vmatpush.msra.mxu0 %v789
    %3742 = vmatpush.msra.mxu0 %v788
    %3743 = vmatpush.msra.mxu0 %v787
    %3744 = vmatpush.msra.mxu0 %v786
    %3745 = vmatpush.msra.mxu0 %v785
    %3746 = vmatpush.msra.mxu0 %v784
    %3747 = vmatpush.msra.mxu0 %v783
    %3748 = vmatpush.msra.mxu0 %v782
    %3749 = vmatpush.msra.mxu0 %v781
    %3750 = vmatpush.msra.mxu0 %v780
    %3751 = vmatpush.msra.mxu0 %v779
    %3752 = vmatpush.msra.mxu0 %v778
    %3753 = vmatpush.msra.mxu0 %v777
    %3754 = vmatpush.msra.mxu0 %v776
    %3755 = vmatmul.f32.gmra.mxu0 %v3602
    %v3756 = vpop.f32.mrf.mxu0
    %v3757 = vadd.f32 %v3737, %v3756
    %3758 = vdwg.mxu0
    %3759 = vmatpush.msra.mxu0 %v807
    %3760 = vmatpush.msra.mxu0 %v806
    %3761 = vmatpush.msra.mxu0 %v805
    %3762 = vmatpush.msra.mxu0 %v804
    %3763 = vmatpush.msra.mxu0 %v803
    %3764 = vmatpush.msra.mxu0 %v802
    %3765 = vmatpush.msra.mxu0 %v801
    %3766 = vmatpush.msra.mxu0 %v800
    %3767 = vmatpush.msra.mxu0 %v799
    %3768 = vmatpush.msra.mxu0 %v798
    %3769 = vmatpush.msra.mxu0 %v797
    %3770 = vmatpush.msra.mxu0 %v796
    %3771 = vmatpush.msra.mxu0 %v795
    %3772 = vmatpush.msra.mxu0 %v794
    %3773 = vmatpush.msra.mxu0 %v793
    %3774 = vmatpush.msra.mxu0 %v792
    %3775 = vmatmul.f32.gmra.mxu0 %v3603
    %v3776 = vpop.f32.mrf.mxu0
    %v3777 = vadd.f32 %v3757, %v3776
    %3778 = vdwg.mxu0
    %3779 = vmatpush.msra.mxu0 %v823
    %3780 = vmatpush.msra.mxu0 %v822
    %3781 = vmatpush.msra.mxu0 %v821
    %3782 = vmatpush.msra.mxu0 %v820
    %3783 = vmatpush.msra.mxu0 %v819
    %3784 = vmatpush.msra.mxu0 %v818
    %3785 = vmatpush.msra.mxu0 %v817
    %3786 = vmatpush.msra.mxu0 %v816
    %3787 = vmatpush.msra.mxu0 %v815
    %3788 = vmatpush.msra.mxu0 %v814
    %3789 = vmatpush.msra.mxu0 %v813
    %3790 = vmatpush.msra.mxu0 %v812
    %3791 = vmatpush.msra.mxu0 %v811
    %3792 = vmatpush.msra.mxu0 %v810
    %3793 = vmatpush.msra.mxu0 %v809
    %3794 = vmatpush.msra.mxu0 %v808
    %3795 = vmatmul.f32.gmra.mxu0 %v3604
    %v3796 = vpop.f32.mrf.mxu0
    %v3797 = vadd.f32 %v3777, %v3796
    %3798 = vdwg.mxu0
    %3799 = vmatpush.msra.mxu0 %v839
    %3800 = vmatpush.msra.mxu0 %v838
    %3801 = vmatpush.msra.mxu0 %v837
    %3802 = vmatpush.msra.mxu0 %v836
    %3803 = vmatpush.msra.mxu0 %v835
    %3804 = vmatpush.msra.mxu0 %v834
    %3805 = vmatpush.msra.mxu0 %v833
    %3806 = vmatpush.msra.mxu0 %v832
    %3807 = vmatpush.msra.mxu0 %v831
    %3808 = vmatpush.msra.mxu0 %v830
    %3809 = vmatpush.msra.mxu0 %v829
    %3810 = vmatpush.msra.mxu0 %v828
    %3811 = vmatpush.msra.mxu0 %v827
    %3812 = vmatpush.msra.mxu0 %v826
    %3813 = vmatpush.msra.mxu0 %v825
    %3814 = vmatpush.msra.mxu0 %v824
    %3815 = vmatmul.f32.gmra.mxu0 %v3605
    %v3816 = vpop.f32.mrf.mxu0
    %v3817 = vadd.f32 %v3797, %v3816
    %3818 = vdwg.mxu0
    %3819 = vmatpush.msra.mxu0 %v855
    %3820 = vmatpush.msra.mxu0 %v854
    %3821 = vmatpush.msra.mxu0 %v853
    %3822 = vmatpush.msra.mxu0 %v852
    %3823 = vmatpush.msra.mxu0 %v851
    %3824 = vmatpush.msra.mxu0 %v850
    %3825 = vmatpush.msra.mxu0 %v849
    %3826 = vmatpush.msra.mxu0 %v848
    %3827 = vmatpush.msra.mxu0 %v847
    %3828 = vmatpush.msra.mxu0 %v846
    %3829 = vmatpush.msra.mxu0 %v845
    %3830 = vmatpush.msra.mxu0 %v844
    %3831 = vmatpush.msra.mxu0 %v843
    %3832 = vmatpush.msra.mxu0 %v842
    %3833 = vmatpush.msra.mxu0 %v841
    %3834 = vmatpush.msra.mxu0 %v840
    %3835 = vmatmul.f32.gmra.mxu0 %v3606
    %v3836 = vpop.f32.mrf.mxu0
    %v3837 = vadd.f32 %v3817, %v3836
    %3838 = vdwg.mxu0
    %3839 = vmatpush.msra.mxu0 %v871
    %3840 = vmatpush.msra.mxu0 %v870
    %3841 = vmatpush.msra.mxu0 %v869
    %3842 = vmatpush.msra.mxu0 %v868
    %3843 = vmatpush.msra.mxu0 %v867
    %3844 = vmatpush.msra.mxu0 %v866
    %3845 = vmatpush.msra.mxu0 %v865
    %3846 = vmatpush.msra.mxu0 %v864
    %3847 = vmatpush.msra.mxu0 %v863
    %3848 = vmatpush.msra.mxu0 %v862
    %3849 = vmatpush.msra.mxu0 %v861
    %3850 = vmatpush.msra.mxu0 %v860
    %3851 = vmatpush.msra.mxu0 %v859
    %3852 = vmatpush.msra.mxu0 %v858
    %3853 = vmatpush.msra.mxu0 %v857
    %3854 = vmatpush.msra.mxu0 %v856
    %3855 = vmatmul.f32.gmra.mxu0 %v3607
    %v3856 = vpop.f32.mrf.mxu0
    %v3857 = vadd.f32 %v3837, %v3856
    %3858 = vdwg.mxu0
    %3859 = vmatpush.msra.mxu0 %v887
    %3860 = vmatpush.msra.mxu0 %v886
    %3861 = vmatpush.msra.mxu0 %v885
    %3862 = vmatpush.msra.mxu0 %v884
    %3863 = vmatpush.msra.mxu0 %v883
    %3864 = vmatpush.msra.mxu0 %v882
    %3865 = vmatpush.msra.mxu0 %v881
    %3866 = vmatpush.msra.mxu0 %v880
    %3867 = vmatpush.msra.mxu0 %v879
    %3868 = vmatpush.msra.mxu0 %v878
    %3869 = vmatpush.msra.mxu0 %v877
    %3870 = vmatpush.msra.mxu0 %v876
    %3871 = vmatpush.msra.mxu0 %v875
    %3872 = vmatpush.msra.mxu0 %v874
    %3873 = vmatpush.msra.mxu0 %v873
    %3874 = vmatpush.msra.mxu0 %v872
    %3875 = vmatmul.f32.gmra.mxu0 %v3608
    %v3876 = vpop.f32.mrf.mxu0
    %v3877 = vadd.f32 %v3857, %v3876
    %3878 = vdwg.mxu0
    %3879 = vmatpush.msra.mxu0 %v903
    %3880 = vmatpush.msra.mxu0 %v902
    %3881 = vmatpush.msra.mxu0 %v901
    %3882 = vmatpush.msra.mxu0 %v900
    %3883 = vmatpush.msra.mxu0 %v899
    %3884 = vmatpush.msra.mxu0 %v898
    %3885 = vmatpush.msra.mxu0 %v897
    %3886 = vmatpush.msra.mxu0 %v896
    %3887 = vmatpush.msra.mxu0 %v895
    %3888 = vmatpush.msra.mxu0 %v894
    %3889 = vmatpush.msra.mxu0 %v893
    %3890 = vmatpush.msra.mxu0 %v892
    %3891 = vmatpush.msra.mxu0 %v891
    %3892 = vmatpush.msra.mxu0 %v890
    %3893 = vmatpush.msra.mxu0 %v889
    %3894 = vmatpush.msra.mxu0 %v888
    %3895 = vmatmul.f32.gmra.mxu0 %v3609
    %v3896 = vpop.f32.mrf.mxu0
    %v3897 = vadd.f32 %v3877, %v3896
    %3898 = vdwg.mxu0
    %3899 = vmatpush.msra.mxu0 %v919
    %3900 = vmatpush.msra.mxu0 %v918
    %3901 = vmatpush.msra.mxu0 %v917
    %3902 = vmatpush.msra.mxu0 %v916
    %3903 = vmatpush.msra.mxu0 %v915
    %3904 = vmatpush.msra.mxu0 %v914
    %3905 = vmatpush.msra.mxu0 %v913
    %3906 = vmatpush.msra.mxu0 %v912
    %3907 = vmatpush.msra.mxu0 %v911
    %3908 = vmatpush.msra.mxu0 %v910
    %3909 = vmatpush.msra.mxu0 %v909
    %3910 = vmatpush.msra.mxu0 %v908
    %3911 = vmatpush.msra.mxu0 %v907
    %3912 = vmatpush.msra.mxu0 %v906
    %3913 = vmatpush.msra.mxu0 %v905
    %3914 = vmatpush.msra.mxu0 %v904
    %3915 = vmatmul.f32.gmra.mxu0 %v3610
    %v3916 = vpop.f32.mrf.mxu0
    %v3917 = vadd.f32 %v3897, %v3916
    %3918 = vdwg.mxu0
    %3919 = vmatpush.msra.mxu0 %v935
    %3920 = vmatpush.msra.mxu0 %v934
    %3921 = vmatpush.msra.mxu0 %v933
    %3922 = vmatpush.msra.mxu0 %v932
    %3923 = vmatpush.msra.mxu0 %v931
    %3924 = vmatpush.msra.mxu0 %v930
    %3925 = vmatpush.msra.mxu0 %v929
    %3926 = vmatpush.msra.mxu0 %v928
    %3927 = vmatpush.msra.mxu0 %v927
    %3928 = vmatpush.msra.mxu0 %v926
    %3929 = vmatpush.msra.mxu0 %v925
    %3930 = vmatpush.msra.mxu0 %v924
    %3931 = vmatpush.msra.mxu0 %v923
    %3932 = vmatpush.msra.mxu0 %v922
    %3933 = vmatpush.msra.mxu0 %v921
    %3934 = vmatpush.msra.mxu0 %v920
    %3935 = vmatmul.f32.gmra.mxu0 %v3611
    %v3936 = vpop.f32.mrf.mxu0
    %v3937 = vadd.f32 %v3917, %v3936
    %3938 = vdwg.mxu0
    %3939 = vmatpush.msra.mxu0 %v951
    %3940 = vmatpush.msra.mxu0 %v950
    %3941 = vmatpush.msra.mxu0 %v949
    %3942 = vmatpush.msra.mxu0 %v948
    %3943 = vmatpush.msra.mxu0 %v947
    %3944 = vmatpush.msra.mxu0 %v946
    %3945 = vmatpush.msra.mxu0 %v945
    %3946 = vmatpush.msra.mxu0 %v944
    %3947 = vmatpush.msra.mxu0 %v943
    %3948 = vmatpush.msra.mxu0 %v942
    %3949 = vmatpush.msra.mxu0 %v941
    %3950 = vmatpush.msra.mxu0 %v940
    %3951 = vmatpush.msra.mxu0 %v939
    %3952 = vmatpush.msra.mxu0 %v938
    %3953 = vmatpush.msra.mxu0 %v937
    %3954 = vmatpush.msra.mxu0 %v936
    %3955 = vmatmul.f32.gmra.mxu0 %v3612
    %v3956 = vpop.f32.mrf.mxu0
    %v3957 = vadd.f32 %v3937, %v3956
    %3958 = vdwg.mxu0
    %3959 = vmatpush.msra.mxu0 %v967
    %3960 = vmatpush.msra.mxu0 %v966
    %3961 = vmatpush.msra.mxu0 %v965
    %3962 = vmatpush.msra.mxu0 %v964
    %3963 = vmatpush.msra.mxu0 %v963
    %3964 = vmatpush.msra.mxu0 %v962
    %3965 = vmatpush.msra.mxu0 %v961
    %3966 = vmatpush.msra.mxu0 %v960
    %3967 = vmatpush.msra.mxu0 %v959
    %3968 = vmatpush.msra.mxu0 %v958
    %3969 = vmatpush.msra.mxu0 %v957
    %3970 = vmatpush.msra.mxu0 %v956
    %3971 = vmatpush.msra.mxu0 %v955
    %3972 = vmatpush.msra.mxu0 %v954
    %3973 = vmatpush.msra.mxu0 %v953
    %3974 = vmatpush.msra.mxu0 %v952
    %3975 = vmatmul.f32.gmra.mxu0 %v3613
    %v3976 = vpop.f32.mrf.mxu0
    %v3977 = vadd.f32 %v3957, %v3976
    %3978 = vdwg.mxu0
    %3979 = vmatpush.msra.mxu0 %v983
    %3980 = vmatpush.msra.mxu0 %v982
    %3981 = vmatpush.msra.mxu0 %v981
    %3982 = vmatpush.msra.mxu0 %v980
    %3983 = vmatpush.msra.mxu0 %v979
    %3984 = vmatpush.msra.mxu0 %v978
    %3985 = vmatpush.msra.mxu0 %v977
    %3986 = vmatpush.msra.mxu0 %v976
    %3987 = vmatpush.msra.mxu0 %v975
    %3988 = vmatpush.msra.mxu0 %v974
    %3989 = vmatpush.msra.mxu0 %v973
    %3990 = vmatpush.msra.mxu0 %v972
    %3991 = vmatpush.msra.mxu0 %v971
    %3992 = vmatpush.msra.mxu0 %v970
    %3993 = vmatpush.msra.mxu0 %v969
    %3994 = vmatpush.msra.mxu0 %v968
    %3995 = vmatmul.f32.gmra.mxu0 %v3614
    %v3996 = vpop.f32.mrf.mxu0
    %v3997 = vadd.f32 %v3977, %v3996
    %3998 = vdwg.mxu0
    %v3999 = vmax.f32 %v3997, 0.0
    %v4000 = vld [vmem:[%s10] sm:$0x1]
    %v4002 = vperm.slane %v4000, 0
    %v4005 = vsel %vm1211, %v3999, 0
    %4007 = vmatpush.msra.mxu0 0.0
    %4008 = vmatpush.msra.mxu0 0.0
    %4009 = vmatpush.msra.mxu0 0.0
    %4010 = vmatpush.msra.mxu0 0.0
    %4011 = vmatpush.msra.mxu0 0.0
    %4012 = vmatpush.msra.mxu0 0.0
    %4013 = vmatpush.msra.mxu0 0.0
    %4014 = vmatpush.msra.mxu0 0.0
    %4015 = vmatpush.msra.mxu0 %v999
    %4016 = vmatpush.msra.mxu0 %v998
    %4017 = vmatpush.msra.mxu0 %v997
    %4018 = vmatpush.msra.mxu0 %v996
    %4019 = vmatpush.msra.mxu0 %v995
    %4020 = vmatpush.msra.mxu0 %v994
    %4021 = vmatpush.msra.mxu0 %v993
    %4022 = vmatpush.msra.mxu0 %v992
    %4023 = vmatmul.f32.gmra.mxu0 %v4005
    %v4024 = vpop.f32.mrf.mxu0
    %v4025 = vadd.f32 %v4002, %v4024
    %4026 = vdwg.mxu0
    %4027 = vst [vmem:[#allocation16] sm:$0x1] %v4025
    %s4028 = scalar_lea.vmem [#allocation16], 1
    %4029 = vst [vmem:[%s4028 - $0x1] sm:$0x2] %v4025
    // Predicated region
    $region78: #{_lambda_.1} parent=1 // pred_check
      _
    $region79: #{_lambda_.1} parent=1 // pred_check_branch
      %4031 = sbr.rel (0) target = $region81
    $region80: #{_lambda_.1} parent=1 // pred_region
      %4033 = vsyncadd [#allocation4], 0
      %s4034 = sshll.u32 [#allocation16], 4
      %s4035 = int_to_ptr.vmem [resolvable:$true] %s4034
      %s4036 = sshll.u32 %s11, 4
      %s4037 = int_to_ptr.hbm [resolvable:$true] %s4036
      %4042 = dma.vmem_to_hbm [thread:$0]  %s4035, 32, %s4037, [#allocation4], 16, 16, 1
    $region81: #{_lambda_.1} parent=1 // pred_fallthru
      _
    // Predicated region
    $region82: #{_lambda_.1} parent=1 // pred_check
      _
    $region83: #{_lambda_.1} parent=1 // pred_check_branch
      %4044 = sbr.rel (0) target = $region85
    $region84: #{_lambda_.1} parent=1 // pred_region
      %4046 = dma.done [#allocation4], 32
    $region85: #{_lambda_.1} parent=1 // pred_fallthru
      _
    %4047 = vsyncpa [#allocation3], 1
    %4048 = vsyncpa [#allocation6], 1
    %4049 = vsyncpa [#allocation9], 1
    %4050 = vsyncpa [#allocation12], 1
    %4051 = vsyncpa [#allocation15], 1
    %4052 = vsyncpa [#allocation4], 1

</llo_original>
